<compile_context>
chip_gen: v7x
topology: tpu7x:2x2x1
jax: 0.10.0
libtpu: 0.0.40
codegen_flags: <defaults>
</compile_context>

<pallas_src>
import functools

import jax
import jax.numpy as jnp
from jax.experimental import pallas as pl
from jax.experimental.pallas import tpu as pltpu


# ---------------------------------------------------------------------------
# Small helpers
# ---------------------------------------------------------------------------

def _round_up(x, m):
    return ((x + m - 1) // m) * m


def _pad_ch(c):
    """Channel padding target: multiples of 128 (lane width)."""
    return max(128, _round_up(c, 128))


def _pick_tile_h(H, W, target_rows=4096):
    """Rows per output block: ~4K flattened MXU rows per call, divisor of H."""
    th = max(1, min(H, target_rows // max(W, 1)))
    while H % th:
        th -= 1
    return th


def _vmem_limit_bytes(block_bytes):
    # Double-buffered blocks + headroom for in-kernel temporaries (tap slabs,
    # f32 accumulator).  Cap below v7x's 64 MiB physical VMEM; v5e/v6e (128 MiB)
    # are always fine with this value.
    need = 2 * block_bytes + (16 << 20)
    return int(min(max(need, 24 << 20), 48 << 20))


# ---------------------------------------------------------------------------
# Pallas kernels
# ---------------------------------------------------------------------------

def _conv3x3_taps(x_ref, w_ref, h0, th, W):
    """Accumulate the 9 taps of a pad-1 3x3 conv for output rows [h0, h0+th).

    x_ref: (1, H+2, W+2, Cin_p) spatially padded image (whole image in VMEM).
    w_ref: (9, Cin_p, Cout_p), tap index = ky*3 + kx.
    Returns an f32 (th*W, Cout_p) accumulator.
    """
    cin = x_ref.shape[-1]
    coutp = w_ref.shape[-1]
    # bf16 values whose second-minor dim is not a multiple of the bf16 sublane
    # packing (16) would need an awkward relayout for the reshape below; fall
    # back to f32 taps there (only the tiny first layers, W == 8).
    tap_dtype = x_ref.dtype if (W % 16 == 0 or x_ref.dtype == jnp.float32) else jnp.float32
    acc = jnp.zeros((th * W, coutp), jnp.float32)
    for ky in range(3):
        for kx in range(3):
            a = x_ref[0, pl.ds(h0 + ky, th), pl.ds(kx, W), :]          # (th, W, Cin)
            a = a.astype(tap_dtype).reshape(th * W, cin)
            w_t = w_ref[ky * 3 + kx].astype(tap_dtype)                 # (Cin, Cout_p)
            acc = acc + jnp.dot(a, w_t, preferred_element_type=jnp.float32)
    return acc


def _conv3x3_kernel(x_ref, w_ref, b_ref, o_ref, *, th, W, relu, co):
    h0 = pl.program_id(1) * th
    acc = _conv3x3_taps(x_ref, w_ref, h0, th, W) + b_ref[...]
    if relu:
        acc = jnp.maximum(acc, 0.0)
    o_ref[0] = acc[:, :co].reshape(th, W, co).astype(o_ref.dtype)


def _conv3x3_res_relu_kernel(x_ref, w_ref, b_ref, r_ref, o_ref, *, th, W, co):
    h0 = pl.program_id(1) * th
    acc = _conv3x3_taps(x_ref, w_ref, h0, th, W) + b_ref[...]
    acc = acc + r_ref[0].astype(jnp.float32).reshape(th * W, co)       # fused residual
    acc = jnp.maximum(acc, 0.0)                                        # fused trailing ReLU
    o_ref[0] = acc.reshape(th, W, co).astype(o_ref.dtype)


def _conv1x1_kernel(x_ref, w_ref, b_ref, o_ref, *, co):
    th, W, cin = x_ref.shape[1], x_ref.shape[2], x_ref.shape[3]
    tap_dtype = x_ref.dtype if (W % 16 == 0 or x_ref.dtype == jnp.float32) else jnp.float32
    a = x_ref[0].astype(tap_dtype).reshape(th * W, cin)
    acc = jnp.dot(a, w_ref[...].astype(tap_dtype),
                  preferred_element_type=jnp.float32) + b_ref[...]
    o_ref[0] = acc[:, :co].reshape(th, W, co).astype(o_ref.dtype)


def _tanh01_kernel(x_ref, o_ref):
    o_ref[...] = (jnp.tanh(x_ref[...]) + 1.0) * 0.5


# ---------------------------------------------------------------------------
# Conv wrappers (Pallas hot path; only a 1-pixel spatial zero-pad stays in JAX)
# ---------------------------------------------------------------------------

def conv3x3(x, w, b, residual=None, relu=False, out_channels=None,
            out_dtype=jnp.bfloat16):
    """3x3 conv, stride 1, pad 1 (== nn.Conv2d(k=3, padding=1)).

    x: (B, H, W, Cin_p) NHWC (bf16/f32); w: (9, Cin_p, Cout_p) bf16; b: (1, Cout_p) f32.
    residual (optional): (B, H, W, Cout_p) -> fused relu(conv + bias + residual).
    out_channels < Cout_p stores only the true channels (lane-dense narrow out block).
    """
    B, H, W, _ = x.shape
    cin_p, coutp = w.shape[1], w.shape[2]
    co = out_channels if out_channels is not None else coutp

    x = x.astype(jnp.bfloat16)
    if x.shape[-1] < cin_p:                    # keep channels padded persistently
        x = jnp.pad(x, ((0, 0), (0, 0), (0, 0), (0, cin_p - x.shape[-1])))
    # TODO(synk): the 1-pixel spatial halo pad is still a JAX op (one small copy);
    # it could be folded away by storing activations spatially padded.
    xp = jnp.pad(x, ((0, 0), (1, 1), (1, 1), (0, 0)))

    th = _pick_tile_h(H, W)
    grid = (B, H // th)

    in_specs = [
        pl.BlockSpec((1, H + 2, W + 2, cin_p), lambda bi, j: (bi, 0, 0, 0)),
        pl.BlockSpec((9, cin_p, coutp), lambda bi, j: (0, 0, 0)),
        pl.BlockSpec((1, coutp), lambda bi, j: (0, 0)),
    ]
    args = [xp, w, b]
    if residual is not None:
        assert co == coutp
        in_specs.append(pl.BlockSpec((1, th, W, co), lambda bi, j: (bi, j, 0, 0)))
        args.append(residual.astype(jnp.bfloat16))
        kernel = functools.partial(_conv3x3_res_relu_kernel, th=th, W=W, co=co)
    else:
        kernel = functools.partial(_conv3x3_kernel, th=th, W=W, relu=relu, co=co)

    out_isize = jnp.dtype(out_dtype).itemsize
    blk_bytes = ((H + 2) * (W + 2) * cin_p * 2 + 9 * cin_p * coutp * 2 + coutp * 4
                 + th * W * co * out_isize
                 + (th * W * coutp * 2 if residual is not None else 0))

    return pl.pallas_call(
        kernel,
        out_shape=jax.ShapeDtypeStruct((B, H, W, co), out_dtype),
        grid=grid,
        in_specs=in_specs,
        out_specs=pl.BlockSpec((1, th, W, co), lambda bi, j: (bi, j, 0, 0)),
        compiler_params=pltpu.CompilerParams(
            dimension_semantics=("parallel", "parallel"),
            vmem_limit_bytes=_vmem_limit_bytes(blk_bytes),
        ),
    )(*args)


def conv1x1(x, w, b, out_channels=None, out_dtype=jnp.bfloat16):
    """1x1 conv (skip path): x (B,H,W,Cin_p), w (Cin_p, Cout_p) bf16, b (1, Cout_p) f32."""
    B, H, W, _ = x.shape
    cin_p, coutp = w.shape
    co = out_channels if out_channels is not None else coutp
    x = x.astype(jnp.bfloat16)
    if x.shape[-1] < cin_p:
        x = jnp.pad(x, ((0, 0), (0, 0), (0, 0), (0, cin_p - x.shape[-1])))
    th = _pick_tile_h(H, W)
    grid = (B, H // th)
    out_isize = jnp.dtype(out_dtype).itemsize
    blk_bytes = th * W * cin_p * 2 + cin_p * coutp * 2 + coutp * 4 + th * W * co * out_isize
    return pl.pallas_call(
        functools.partial(_conv1x1_kernel, co=co),
        out_shape=jax.ShapeDtypeStruct((B, H, W, co), out_dtype),
        grid=grid,
        in_specs=[
            pl.BlockSpec((1, th, W, cin_p), lambda bi, j: (bi, j, 0, 0)),
            pl.BlockSpec((cin_p, coutp), lambda bi, j: (0, 0)),
            pl.BlockSpec((1, coutp), lambda bi, j: (0, 0)),
        ],
        out_specs=pl.BlockSpec((1, th, W, co), lambda bi, j: (bi, j, 0, 0)),
        compiler_params=pltpu.CompilerParams(
            dimension_semantics=("parallel", "parallel"),
            vmem_limit_bytes=_vmem_limit_bytes(blk_bytes),
        ),
    )(x, w, b)


def res_layer(x, layer):
    # TODO(synk): networks.ResLayer_2d source is not provided; using the standard
    # basic residual block: relu(conv3x3(x)) -> conv3x3 + skip(1x1 conv if C changes) -> relu.
    # TODO(synk): further fusion — keep conv1's output in VMEM and run the whole
    # block in one pallas_call (needs in-kernel zero-halo handling for conv2).
    skip = x if layer["skip"] is None else conv1x1(x, *layer["skip"])
    h = conv3x3(x, *layer["conv1"], relu=True)
    return conv3x3(h, *layer["conv2"], residual=skip)


def tanh01(x):
    """(tanh(x)+1)/2 on a lane-dense (rows, 128) view (avoids lane-width-3 stores)."""
    shp = x.shape
    flat = x.reshape(-1)
    n = flat.shape[0]
    pad = (-n) % 1024
    x2 = jnp.pad(flat, (0, pad)).reshape(-1, 128)
    out = pl.pallas_call(
        _tanh01_kernel,
        out_shape=jax.ShapeDtypeStruct(x2.shape, x2.dtype),
    )(x2)
    return out.reshape(-1)[:n].reshape(shp)


# ---------------------------------------------------------------------------
# Interpolation glue (plain JAX — data-dependent gathers)
# ---------------------------------------------------------------------------

def upsample_bilinear(x, scale_h, scale_w):
    """PyTorch nn.Upsample / F.interpolate bilinear, align_corners=False.  x: NHWC."""
    B, H, W, C = x.shape
    Ho, Wo = int(round(H * scale_h)), int(round(W * scale_w))
    ys = jnp.clip((jnp.arange(Ho, dtype=jnp.float32) + 0.5) / scale_h - 0.5, 0.0, H - 1)
    xs = jnp.clip((jnp.arange(Wo, dtype=jnp.float32) + 0.5) / scale_w - 0.5, 0.0, W - 1)
    y0 = jnp.floor(ys).astype(jnp.int32)
    x0 = jnp.floor(xs).astype(jnp.int32)
    y1 = jnp.minimum(y0 + 1, H - 1)
    x1 = jnp.minimum(x0 + 1, W - 1)
    wy = (ys - y0.astype(jnp.float32))[None, :, None, None]
    wx = (xs - x0.astype(jnp.float32))[None, None, :, None]
    g = lambda yi, xi: x[:, yi][:, :, xi]
    out = (g(y0, x0) * (1 - wy) * (1 - wx) + g(y0, x1) * (1 - wy) * wx +
           g(y1, x0) * wy * (1 - wx) + g(y1, x1) * wy * wx)
    return out.astype(x.dtype)


def grid_sample_bilinear(img, grid):
    """torch.nn.functional.grid_sample, bilinear, align_corners=True, padding_mode='zeros'.
    img: (B,H,W,C) NHWC;  grid: (B,Hg,Wg,2) with grid[...,0]=x in [-1,1], grid[...,1]=y."""
    B, H, W, C = img.shape
    gx = (grid[..., 0] + 1.0) * 0.5 * (W - 1)
    gy = (grid[..., 1] + 1.0) * 0.5 * (H - 1)
    x0 = jnp.floor(gx)
    y0 = jnp.floor(gy)
    x1 = x0 + 1.0
    y1 = y0 + 1.0
    wx1 = gx - x0
    wx0 = 1.0 - wx1
    wy1 = gy - y0
    wy0 = 1.0 - wy1
    flat = img.reshape(B, H * W, C)

    def gather(yi, xi):
        valid = ((xi >= 0) & (xi <= W - 1) & (yi >= 0) & (yi <= H - 1)).astype(img.dtype)
        xi_c = jnp.clip(xi, 0, W - 1).astype(jnp.int32)
        yi_c = jnp.clip(yi, 0, H - 1).astype(jnp.int32)
        idx = (yi_c * W + xi_c).reshape(B, -1, 1)
        vals = jnp.take_along_axis(flat, idx, axis=1).reshape(B, xi.shape[1], xi.shape[2], C)
        return vals * valid[..., None]

    return (gather(y0, x0) * (wy0 * wx0)[..., None] + gather(y0, x1) * (wy0 * wx1)[..., None] +
            gather(y1, x0) * (wy1 * wx0)[..., None] + gather(y1, x1) * (wy1 * wx1)[..., None])


# ---------------------------------------------------------------------------
# Parameter init (deterministic, synthetic; channels pre-padded to 128, bf16)
# ---------------------------------------------------------------------------

def _init_conv3x3(key, cin, cout):
    cin_p, cout_p = _pad_ch(cin), _pad_ch(cout)
    kw, kb = jax.random.split(key)
    w = jax.random.normal(kw, (3, 3, cin, cout), jnp.float32) / jnp.sqrt(9.0 * cin)
    b = jax.random.normal(kb, (cout,), jnp.float32) * 0.01
    wp = jnp.zeros((3, 3, cin_p, cout_p), jnp.float32).at[:, :, :cin, :cout].set(w)
    bp = jnp.zeros((1, cout_p), jnp.float32).at[0, :cout].set(b)
    return wp.reshape(9, cin_p, cout_p).astype(jnp.bfloat16), bp


def _init_conv1x1(key, cin, cout):
    cin_p, cout_p = _pad_ch(cin), _pad_ch(cout)
    kw, kb = jax.random.split(key)
    w = jax.random.normal(kw, (cin, cout), jnp.float32) / jnp.sqrt(float(cin))
    b = jax.random.normal(kb, (cout,), jnp.float32) * 0.01
    wp = jnp.zeros((cin_p, cout_p), jnp.float32).at[:cin, :cout].set(w)
    bp = jnp.zeros((1, cout_p), jnp.float32).at[0, :cout].set(b)
    return wp.astype(jnp.bfloat16), bp


def init_texture_predictor_params(key):
    # res_color_net channel plan from __init__:
    # ResLayer(256,256) x3, ResLayer(256,128), ResLayer(128,64), ResLayer(64,32),
    # ResLayer(32,16), conv3x3(16,3)
    specs = [(256, 256), (256, 256), (256, 256), (256, 128), (128, 64), (64, 32), (32, 16)]
    res = []
    for cin, cout in specs:
        key, k1, k2, k3 = jax.random.split(key, 4)
        res.append({
            "conv1": _init_conv3x3(k1, cin, cout),
            "conv2": _init_conv3x3(k2, cout, cout),
            "skip": None if cin == cout else _init_conv1x1(k3, cin, cout),
        })
    key, kf = jax.random.split(key)
    return {"res": res, "final": _init_conv3x3(kf, 16, 3)}


# ---------------------------------------------------------------------------
# Forward pass (TexturePredictorUV.forward)
# ---------------------------------------------------------------------------

def texture_predictor_uv_forward(params, uv_sampler, pred_v, feat_nchw,
                                 symmetric=False, num_sym_faces=624):
    del pred_v  # unused by the reference forward (kept for signature parity)
    feat = jnp.transpose(feat_nchw, (0, 2, 3, 1))        # NCHW -> NHWC
    feat = upsample_bilinear(feat, 1.0, 2.0)             # F.interpolate(scale_factor=[1,2])
    x = feat.astype(jnp.bfloat16)

    r = params["res"]
    x = res_layer(x, r[0])
    x = upsample_bilinear(x, 2.0, 2.0)
    x = res_layer(x, r[1])
    x = res_layer(x, r[2])
    x = upsample_bilinear(x, 2.0, 2.0)
    x = res_layer(x, r[3])
    x = upsample_bilinear(x, 2.0, 2.0)
    x = res_layer(x, r[4])
    x = upsample_bilinear(x, 2.0, 2.0)
    x = res_layer(x, r[5])
    x = upsample_bilinear(x, 2.0, 2.0)
    x = res_layer(x, r[6])
    wf, bf_ = params["final"]
    uvimage_pred = conv3x3(x, wf, bf_, out_channels=3, out_dtype=jnp.float32)  # (B,64,256,3)

    B = uvimage_pred.shape[0]
    grid = jnp.broadcast_to(uv_sampler, (B,) + uv_sampler.shape[1:])    # .repeat(B,1,1,1)
    tex = grid_sample_bilinear(uvimage_pred, grid)        # (B, F, T*T, C)
    F_, TT = uv_sampler.shape[1], uv_sampler.shape[2]
    T = int(round(TT ** 0.5))
    # == torch: reshape(B, C, F, T, T).permute(0, 2, 3, 4, 1)
    tex = tex.reshape(B, F_, T, T, 3)
    tex = tanh01(tex)                                     # (tanh + 1) / 2
    if symmetric:
        tex_left = tex[:, -num_sym_faces:]
        tex = jnp.concatenate([tex, tex_left], axis=1)
    return tex


if __name__ == "__main__":
    key = jax.random.PRNGKey(0)
    k_feat, k_uv, k_params, k_predv, k_chk = jax.random.split(key, 5)

    # --- quick self-check of the Pallas 3x3 conv vs XLA conv (bf16 in, f32 acc) ---
    kx_, kw_, kb_ = jax.random.split(k_chk, 3)
    xc = jax.random.normal(kx_, (2, 8, 32, 128), jnp.float32).astype(jnp.bfloat16)
    wc = (jax.random.normal(kw_, (3, 3, 128, 128), jnp.float32) /
          jnp.sqrt(9.0 * 128.0)).astype(jnp.bfloat16)
    bc = jax.random.normal(kb_, (128,), jnp.float32) * 0.01
    got = conv3x3(xc, wc.reshape(9, 128, 128), bc.reshape(1, 128), out_dtype=jnp.float32)
    ref = jax.lax.conv_general_dilated(
        xc.astype(jnp.float32), wc.astype(jnp.float32), (1, 1), ((1, 1), (1, 1)),
        dimension_numbers=("NHWC", "HWIO", "NHWC")) + bc
    assert jnp.allclose(got, ref, atol=2e-2, rtol=2e-2), float(jnp.max(jnp.abs(got - ref)))

    # --- full forward: img_H=64, img_W=128, n_upconv=5 => feat spatial (2, 4), 256 ch ---
    B = 2
    feat_H, feat_W = 2, 4
    F_, T = 16, 4

    feat = jax.random.normal(k_feat, (B, 256, feat_H, feat_W), jnp.float32)        # NCHW
    uv_sampler = jax.random.uniform(k_uv, (1, F_, T * T, 2), jnp.float32, -1.0, 1.0)
    pred_v = jax.random.normal(k_predv, (B, 64, 3), jnp.float32)                   # unused
    params = init_texture_predictor_params(k_params)

    fwd = jax.jit(texture_predictor_uv_forward)
    out = fwd(params, uv_sampler, pred_v, feat)
    out = jax.block_until_ready(out)

    assert out.shape == (B, F_, T, T, 3), out.shape
    assert bool(jnp.all(jnp.isfinite(out)))
    assert bool(jnp.all((out >= 0.0) & (out <= 1.0)))
    print("KERNEL_OK")
</pallas_src>

<mosaic_0001>
module attributes {stable_mosaic.version = 11 : i64} {
  func.func @_conv3x3_kernel(%arg0: i32, %arg1: i32, %arg2: memref<1x10x34x128xbf16, #tpu.memory_space<vmem>>, %arg3: memref<9x128x128xbf16, #tpu.memory_space<vmem>>, %arg4: memref<1x128xf32, #tpu.memory_space<vmem>>, %arg5: memref<1x8x32x128xf32, #tpu.memory_space<vmem>>) attributes {dimension_semantics = [#tpu.dimension_semantics<parallel>, #tpu.dimension_semantics<parallel>], iteration_bounds = array<i64: 2, 1>, scalar_prefetch = 0 : i64, scratch_operands = 0 : i64, tpu.core_type = #tpu.core_type<tc>, window_params = [{transform_indices = @transform_0, window_bounds = array<i64: 1, 10, 34, 128>}, {pipeline_mode = #tpu.pipeline_mode<synchronous>, transform_indices = @transform_1, window_bounds = array<i64: 9, 128, 128>}, {pipeline_mode = #tpu.pipeline_mode<synchronous>, transform_indices = @transform_2, window_bounds = array<i64: 1, 128>}, {transform_indices = @transform_3, window_bounds = array<i64: 1, 8, 32, 128>}]} {
    %c8_i32 = arith.constant 8 : i32
    %0 = arith.muli %arg1, %c8_i32 : i32
    %cst = arith.constant 0.000000e+00 : f32
    %1 = vector.broadcast %cst : f32 to vector<256x128xf32>
    %c0_i32 = arith.constant 0 : i32
    %2 = arith.addi %0, %c0_i32 : i32
    %c0 = arith.constant 0 : index
    %3 = arith.index_cast %2 : i32 to index
    %c0_0 = arith.constant 0 : index
    %c0_1 = arith.constant 0 : index
    %4 = vector.load %arg2[%c0, %3, %c0_0, %c0_1] : memref<1x10x34x128xbf16, #tpu.memory_space<vmem>>, vector<1x8x32x128xbf16>
    %5 = vector.shape_cast %4 : vector<1x8x32x128xbf16> to vector<8x32x128xbf16>
    %6 = vector.shape_cast %5 : vector<8x32x128xbf16> to vector<256x128xbf16>
    %c0_2 = arith.constant 0 : index
    %c0_3 = arith.constant 0 : index
    %c0_4 = arith.constant 0 : index
    %7 = vector.load %arg3[%c0_2, %c0_3, %c0_4] : memref<9x128x128xbf16, #tpu.memory_space<vmem>>, vector<1x128x128xbf16>
    %8 = vector.shape_cast %7 : vector<1x128x128xbf16> to vector<128x128xbf16>
    %cst_5 = arith.constant dense<0.000000e+00> : vector<256x128xf32>
    %9 = tpu.matmul %6, %8, %cst_5 {dimension_numbers = #tpu.dot_dimension_numbers<[1], [0], [0], [1], [0, 0, 1, 1], [], []>} : vector<256x128xbf16>, vector<128x128xbf16>, vector<256x128xf32> -> vector<256x128xf32>
    %10 = arith.addf %1, %9 : vector<256x128xf32>
    %c0_i32_6 = arith.constant 0 : i32
    %11 = arith.addi %0, %c0_i32_6 : i32
    %c0_7 = arith.constant 0 : index
    %12 = arith.index_cast %11 : i32 to index
    %c1 = arith.constant 1 : index
    %c0_8 = arith.constant 0 : index
    %13 = vector.load %arg2[%c0_7, %12, %c1, %c0_8] : memref<1x10x34x128xbf16, #tpu.memory_space<vmem>>, vector<1x8x32x128xbf16>
    %14 = vector.shape_cast %13 : vector<1x8x32x128xbf16> to vector<8x32x128xbf16>
    %15 = vector.shape_cast %14 : vector<8x32x128xbf16> to vector<256x128xbf16>
    %c1_9 = arith.constant 1 : index
    %c0_10 = arith.constant 0 : index
    %c0_11 = arith.constant 0 : index
    %16 = vector.load %arg3[%c1_9, %c0_10, %c0_11] : memref<9x128x128xbf16, #tpu.memory_space<vmem>>, vector<1x128x128xbf16>
    %17 = vector.shape_cast %16 : vector<1x128x128xbf16> to vector<128x128xbf16>
    %cst_12 = arith.constant dense<0.000000e+00> : vector<256x128xf32>
    %18 = tpu.matmul %15, %17, %cst_12 {dimension_numbers = #tpu.dot_dimension_numbers<[1], [0], [0], [1], [0, 0, 1, 1], [], []>} : vector<256x128xbf16>, vector<128x128xbf16>, vector<256x128xf32> -> vector<256x128xf32>
    %19 = arith.addf %10, %18 : vector<256x128xf32>
    %c0_i32_13 = arith.constant 0 : i32
    %20 = arith.addi %0, %c0_i32_13 : i32
    %c0_14 = arith.constant 0 : index
    %21 = arith.index_cast %20 : i32 to index
    %c2 = arith.constant 2 : index
    %c0_15 = arith.constant 0 : index
    %22 = vector.load %arg2[%c0_14, %21, %c2, %c0_15] : memref<1x10x34x128xbf16, #tpu.memory_space<vmem>>, vector<1x8x32x128xbf16>
    %23 = vector.shape_cast %22 : vector<1x8x32x128xbf16> to vector<8x32x128xbf16>
    %24 = vector.shape_cast %23 : vector<8x32x128xbf16> to vector<256x128xbf16>
    %c2_16 = arith.constant 2 : index
    %c0_17 = arith.constant 0 : index
    %c0_18 = arith.constant 0 : index
    %25 = vector.load %arg3[%c2_16, %c0_17, %c0_18] : memref<9x128x128xbf16, #tpu.memory_space<vmem>>, vector<1x128x128xbf16>
    %26 = vector.shape_cast %25 : vector<1x128x128xbf16> to vector<128x128xbf16>
    %cst_19 = arith.constant dense<0.000000e+00> : vector<256x128xf32>
    %27 = tpu.matmul %24, %26, %cst_19 {dimension_numbers = #tpu.dot_dimension_numbers<[1], [0], [0], [1], [0, 0, 1, 1], [], []>} : vector<256x128xbf16>, vector<128x128xbf16>, vector<256x128xf32> -> vector<256x128xf32>
    %28 = arith.addf %19, %27 : vector<256x128xf32>
    %c1_i32 = arith.constant 1 : i32
    %29 = arith.addi %0, %c1_i32 : i32
    %c0_20 = arith.constant 0 : index
    %30 = arith.index_cast %29 : i32 to index
    %c0_21 = arith.constant 0 : index
    %c0_22 = arith.constant 0 : index
    %31 = vector.load %arg2[%c0_20, %30, %c0_21, %c0_22] : memref<1x10x34x128xbf16, #tpu.memory_space<vmem>>, vector<1x8x32x128xbf16>
    %32 = vector.shape_cast %31 : vector<1x8x32x128xbf16> to vector<8x32x128xbf16>
    %33 = vector.shape_cast %32 : vector<8x32x128xbf16> to vector<256x128xbf16>
    %c3 = arith.constant 3 : index
    %c0_23 = arith.constant 0 : index
    %c0_24 = arith.constant 0 : index
    %34 = vector.load %arg3[%c3, %c0_23, %c0_24] : memref<9x128x128xbf16, #tpu.memory_space<vmem>>, vector<1x128x128xbf16>
    %35 = vector.shape_cast %34 : vector<1x128x128xbf16> to vector<128x128xbf16>
    %cst_25 = arith.constant dense<0.000000e+00> : vector<256x128xf32>
    %36 = tpu.matmul %33, %35, %cst_25 {dimension_numbers = #tpu.dot_dimension_numbers<[1], [0], [0], [1], [0, 0, 1, 1], [], []>} : vector<256x128xbf16>, vector<128x128xbf16>, vector<256x128xf32> -> vector<256x128xf32>
    %37 = arith.addf %28, %36 : vector<256x128xf32>
    %c1_i32_26 = arith.constant 1 : i32
    %38 = arith.addi %0, %c1_i32_26 : i32
    %c0_27 = arith.constant 0 : index
    %39 = arith.index_cast %38 : i32 to index
    %c1_28 = arith.constant 1 : index
    %c0_29 = arith.constant 0 : index
    %40 = vector.load %arg2[%c0_27, %39, %c1_28, %c0_29] : memref<1x10x34x128xbf16, #tpu.memory_space<vmem>>, vector<1x8x32x128xbf16>
    %41 = vector.shape_cast %40 : vector<1x8x32x128xbf16> to vector<8x32x128xbf16>
    %42 = vector.shape_cast %41 : vector<8x32x128xbf16> to vector<256x128xbf16>
    %c4 = arith.constant 4 : index
    %c0_30 = arith.constant 0 : index
    %c0_31 = arith.constant 0 : index
    %43 = vector.load %arg3[%c4, %c0_30, %c0_31] : memref<9x128x128xbf16, #tpu.memory_space<vmem>>, vector<1x128x128xbf16>
    %44 = vector.shape_cast %43 : vector<1x128x128xbf16> to vector<128x128xbf16>
    %cst_32 = arith.constant dense<0.000000e+00> : vector<256x128xf32>
    %45 = tpu.matmul %42, %44, %cst_32 {dimension_numbers = #tpu.dot_dimension_numbers<[1], [0], [0], [1], [0, 0, 1, 1], [], []>} : vector<256x128xbf16>, vector<128x128xbf16>, vector<256x128xf32> -> vector<256x128xf32>
    %46 = arith.addf %37, %45 : vector<256x128xf32>
    %c1_i32_33 = arith.constant 1 : i32
    %47 = arith.addi %0, %c1_i32_33 : i32
    %c0_34 = arith.constant 0 : index
    %48 = arith.index_cast %47 : i32 to index
    %c2_35 = arith.constant 2 : index
    %c0_36 = arith.constant 0 : index
    %49 = vector.load %arg2[%c0_34, %48, %c2_35, %c0_36] : memref<1x10x34x128xbf16, #tpu.memory_space<vmem>>, vector<1x8x32x128xbf16>
    %50 = vector.shape_cast %49 : vector<1x8x32x128xbf16> to vector<8x32x128xbf16>
    %51 = vector.shape_cast %50 : vector<8x32x128xbf16> to vector<256x128xbf16>
    %c5 = arith.constant 5 : index
    %c0_37 = arith.constant 0 : index
    %c0_38 = arith.constant 0 : index
    %52 = vector.load %arg3[%c5, %c0_37, %c0_38] : memref<9x128x128xbf16, #tpu.memory_space<vmem>>, vector<1x128x128xbf16>
    %53 = vector.shape_cast %52 : vector<1x128x128xbf16> to vector<128x128xbf16>
    %cst_39 = arith.constant dense<0.000000e+00> : vector<256x128xf32>
    %54 = tpu.matmul %51, %53, %cst_39 {dimension_numbers = #tpu.dot_dimension_numbers<[1], [0], [0], [1], [0, 0, 1, 1], [], []>} : vector<256x128xbf16>, vector<128x128xbf16>, vector<256x128xf32> -> vector<256x128xf32>
    %55 = arith.addf %46, %54 : vector<256x128xf32>
    %c2_i32 = arith.constant 2 : i32
    %56 = arith.addi %0, %c2_i32 : i32
    %c0_40 = arith.constant 0 : index
    %57 = arith.index_cast %56 : i32 to index
    %c0_41 = arith.constant 0 : index
    %c0_42 = arith.constant 0 : index
    %58 = vector.load %arg2[%c0_40, %57, %c0_41, %c0_42] : memref<1x10x34x128xbf16, #tpu.memory_space<vmem>>, vector<1x8x32x128xbf16>
    %59 = vector.shape_cast %58 : vector<1x8x32x128xbf16> to vector<8x32x128xbf16>
    %60 = vector.shape_cast %59 : vector<8x32x128xbf16> to vector<256x128xbf16>
    %c6 = arith.constant 6 : index
    %c0_43 = arith.constant 0 : index
    %c0_44 = arith.constant 0 : index
    %61 = vector.load %arg3[%c6, %c0_43, %c0_44] : memref<9x128x128xbf16, #tpu.memory_space<vmem>>, vector<1x128x128xbf16>
    %62 = vector.shape_cast %61 : vector<1x128x128xbf16> to vector<128x128xbf16>
    %cst_45 = arith.constant dense<0.000000e+00> : vector<256x128xf32>
    %63 = tpu.matmul %60, %62, %cst_45 {dimension_numbers = #tpu.dot_dimension_numbers<[1], [0], [0], [1], [0, 0, 1, 1], [], []>} : vector<256x128xbf16>, vector<128x128xbf16>, vector<256x128xf32> -> vector<256x128xf32>
    %64 = arith.addf %55, %63 : vector<256x128xf32>
    %c2_i32_46 = arith.constant 2 : i32
    %65 = arith.addi %0, %c2_i32_46 : i32
    %c0_47 = arith.constant 0 : index
    %66 = arith.index_cast %65 : i32 to index
    %c1_48 = arith.constant 1 : index
    %c0_49 = arith.constant 0 : index
    %67 = vector.load %arg2[%c0_47, %66, %c1_48, %c0_49] : memref<1x10x34x128xbf16, #tpu.memory_space<vmem>>, vector<1x8x32x128xbf16>
    %68 = vector.shape_cast %67 : vector<1x8x32x128xbf16> to vector<8x32x128xbf16>
    %69 = vector.shape_cast %68 : vector<8x32x128xbf16> to vector<256x128xbf16>
    %c7 = arith.constant 7 : index
    %c0_50 = arith.constant 0 : index
    %c0_51 = arith.constant 0 : index
    %70 = vector.load %arg3[%c7, %c0_50, %c0_51] : memref<9x128x128xbf16, #tpu.memory_space<vmem>>, vector<1x128x128xbf16>
    %71 = vector.shape_cast %70 : vector<1x128x128xbf16> to vector<128x128xbf16>
    %cst_52 = arith.constant dense<0.000000e+00> : vector<256x128xf32>
    %72 = tpu.matmul %69, %71, %cst_52 {dimension_numbers = #tpu.dot_dimension_numbers<[1], [0], [0], [1], [0, 0, 1, 1], [], []>} : vector<256x128xbf16>, vector<128x128xbf16>, vector<256x128xf32> -> vector<256x128xf32>
    %73 = arith.addf %64, %72 : vector<256x128xf32>
    %c2_i32_53 = arith.constant 2 : i32
    %74 = arith.addi %0, %c2_i32_53 : i32
    %c0_54 = arith.constant 0 : index
    %75 = arith.index_cast %74 : i32 to index
    %c2_55 = arith.constant 2 : index
    %c0_56 = arith.constant 0 : index
    %76 = vector.load %arg2[%c0_54, %75, %c2_55, %c0_56] : memref<1x10x34x128xbf16, #tpu.memory_space<vmem>>, vector<1x8x32x128xbf16>
    %77 = vector.shape_cast %76 : vector<1x8x32x128xbf16> to vector<8x32x128xbf16>
    %78 = vector.shape_cast %77 : vector<8x32x128xbf16> to vector<256x128xbf16>
    %c8 = arith.constant 8 : index
    %c0_57 = arith.constant 0 : index
    %c0_58 = arith.constant 0 : index
    %79 = vector.load %arg3[%c8, %c0_57, %c0_58] : memref<9x128x128xbf16, #tpu.memory_space<vmem>>, vector<1x128x128xbf16>
    %80 = vector.shape_cast %79 : vector<1x128x128xbf16> to vector<128x128xbf16>
    %cst_59 = arith.constant dense<0.000000e+00> : vector<256x128xf32>
    %81 = tpu.matmul %78, %80, %cst_59 {dimension_numbers = #tpu.dot_dimension_numbers<[1], [0], [0], [1], [0, 0, 1, 1], [], []>} : vector<256x128xbf16>, vector<128x128xbf16>, vector<256x128xf32> -> vector<256x128xf32>
    %82 = arith.addf %73, %81 : vector<256x128xf32>
    %c0_60 = arith.constant 0 : index
    %c0_61 = arith.constant 0 : index
    %83 = vector.load %arg4[%c0_60, %c0_61] : memref<1x128xf32, #tpu.memory_space<vmem>>, vector<1x128xf32>
    %84 = vector.broadcast %83 : vector<1x128xf32> to vector<256x128xf32>
    %85 = arith.addf %82, %84 : vector<256x128xf32>
    %86 = vector.shape_cast %85 : vector<256x128xf32> to vector<8x32x128xf32>
    %c0_62 = arith.constant 0 : index
    %c0_63 = arith.constant 0 : index
    %c0_64 = arith.constant 0 : index
    %c0_65 = arith.constant 0 : index
    %87 = vector.load %arg5[%c0_62, %c0_63, %c0_64, %c0_65] : memref<1x8x32x128xf32, #tpu.memory_space<vmem>>, vector<1x8x32x128xf32>
    %88 = vector.shape_cast %87 : vector<1x8x32x128xf32> to vector<8x32x128xf32>
    %89 = vector.shape_cast %86 : vector<8x32x128xf32> to vector<1x8x32x128xf32>
    tpu.vector_store %arg5[%c0_62, %c0_63, %c0_64, %c0_65], %89 {strides = array<i32>} : memref<1x8x32x128xf32, #tpu.memory_space<vmem>>, vector<1x8x32x128xf32>,
    return
  }
  func.func @transform_0(%arg0: i32, %arg1: i32) -> (i32, i32, i32, i32) {
    %c0_i32 = arith.constant 0 : i32
    %c0_i32_0 = arith.constant 0 : i32
    %c0_i32_1 = arith.constant 0 : i32
    %c0_i32_2 = arith.constant 0 : i32
    return %arg0, %c0_i32, %c0_i32_0, %c0_i32_1 : i32, i32, i32, i32
  }
  func.func @transform_1(%arg0: i32, %arg1: i32) -> (i32, i32, i32) {
    %c0_i32 = arith.constant 0 : i32
    %c0_i32_0 = arith.constant 0 : i32
    %c0_i32_1 = arith.constant 0 : i32
    %c0_i32_2 = arith.constant 0 : i32
    return %c0_i32, %c0_i32_0, %c0_i32_1 : i32, i32, i32
  }
  func.func @transform_2(%arg0: i32, %arg1: i32) -> (i32, i32) {
    %c0_i32 = arith.constant 0 : i32
    %c0_i32_0 = arith.constant 0 : i32
    %c0_i32_1 = arith.constant 0 : i32
    return %c0_i32, %c0_i32_0 : i32, i32
  }
  func.func @transform_3(%arg0: i32, %arg1: i32) -> (i32, i32, i32, i32) {
    %c0_i32 = arith.constant 0 : i32
    %c0_i32_0 = arith.constant 0 : i32
    %c0_i32_1 = arith.constant 0 : i32
    return %arg0, %arg1, %c0_i32, %c0_i32_0 : i32, i32, i32, i32
  }
}

</mosaic_0001>

<llo_original>
// kernel: tpu_custom_call.1
$region0: #{tpu_custom_call.1}
  #allocation0 [shape = 'u32[]', space=smem, size = 0x4, offset = 0x4, fixed_abs, tag = 'smem constant byte address 0x4 - core index']
  #allocation1 [shape = 'u32[144,128]{1,0:T(1,128)}', space=vmem, size = 0x12000, scoped, tag = 'internal scratch']
  %s0 = inlined_call_operand.vmem [shape: bf16[2,10,34,128], index: 0, kind: input, shape index: {}]
  %s1 = inlined_call_operand.vmem [shape: bf16[9,128,128], index: 1, kind: input, shape index: {}]
  %s2 = inlined_call_operand.vmem [shape: f32[1,128], index: 2, kind: input, shape index: {}]
  %s3 = inlined_call_operand.hbm [shape: f32[2,8,32,128], index: 3, kind: output, shape index: {}]
  %s4 = sld [smem:[#allocation0]]
  $region45: #{tpu_custom_call.1} parent=0
    _
  %s6 = ssub.s32 1, %s4
  %s7 = scalar_select 0, %s6, %s4
  $region1: #{tpu_custom_call.1} parent=0
    #allocation2 [shape = 'u8[262144]{0}', space=vmem, size = 0x40000, scoped, tag = 'output window, operand 0']
    #allocation3 [shape = 's32[2]{0}', space=sflag, size = 0x8, scoped, tag = 'scoped memory for tpu_custom_call.1']
    %8 = vsyncpa [#allocation3], 0
    %s9 = scalar_lea.sflag [#allocation3], 1
    %10 = vsyncpa %s9, 0
    loop: start=0, step=1, limit=4
    $region2: #{tpu_custom_call.1} parent=1 // loop_pre_header
      _
    $region3: #{tpu_custom_call.1} parent=1 // loop_header
      %s12 = sphi 0, %s16
      %p13 = scmp.ge.s32.totalorder %s12, 4
      %s19 = sphi 0, %s31
      %s20 = sphi 0, %s27
      %s21 = sphi 0, %s19
      %s22 = sphi 0, %s20
      %s23 = sphi 0, %s21
      %s24 = sphi 0, %s22
      %s34 = sphi 0, %s36
      %s37 = sphi 0, %s34
      %s38 = sphi 0, %s37
      %s54 = sphi 0, %s38
      %s58 = sphi 0, %s58
      %s60 = sphi 0, %s58
      %s61 = sphi 0, %s60
      %s75 = sphi 0, %s61
      %s79 = sphi 0, %s79
      %s81 = sphi 0, %s79
      %s82 = sphi 0, %s81
      %s96 = sphi 0, %s82
      %s104 = sphi 0, %s106
      %s107 = sphi 0, %s104
      %s108 = sphi 0, %s107
      %s124 = sphi 0, %s108
    $region4: #{tpu_custom_call.1} parent=1 // loop_header_branch
      %15 = sbr.rel (%p13) target = $region8
    $region5: #{tpu_custom_call.1} parent=1 // loop_body
      %s17 = ssub.s32 %s12, 1
      %s18 = ssub.s32 %s12, 2
      %s25 = sadd.s32 1, %s20
      %p26 = scmp.ge.s32.totalorder %s25, 1
      %s27 = scalar_select %p26, 0, %s25
      %s28 = sadd.s32 1, %s19
      %s29 = scalar_select %p26, %s28, %s19
      %p30 = scmp.ge.s32.totalorder %s29, 2
      %s31 = scalar_select %p30, 0, %s29
      %s32 = ssub.s32 %s19, %s31
      %p33 = scmp.eq.s32.totalorder %s32, 0
      %s35 = sadd.s32 %s34, 1
      %s36 = scalar_select %p33, %s34, %s35
      %p39 = pneg %p33
      %p40 = scmp.eq.s32.totalorder %s12, 1
      %p41 = por %p39, %p40
      %p42 = scmp.ne.s32.totalorder %s34, %s37
      %p43 = scmp.eq.s32.totalorder %s12, 0
      %p44 = por %p42, %p43
      %p45 = scmp.ne.s32.totalorder %s34, %s37
      %p46 = scmp.eq.s32.totalorder %s17, 1
      %p47 = por %p45, %p46
      %p48 = scmp.ne.s32.totalorder %s37, %s38
      %p49 = scmp.eq.s32.totalorder %s17, 0
      %p50 = por %p48, %p49
      %p51 = scmp.ne.s32.totalorder %s37, %s38
      %p52 = scmp.eq.s32.totalorder %s18, 1
      %p53 = por %p51, %p52
      %p55 = scmp.ne.s32.totalorder %s38, %s54
      %p56 = scmp.eq.s32.totalorder %s18, 0
      %p57 = por %p55, %p56
      %s59 = sadd.s32 %s58, 1
      %p62 = scmp.eq.s32.totalorder %s12, 1
      %p63 = scmp.ne.s32.totalorder %s58, %s60
      %p64 = scmp.eq.s32.totalorder %s12, 0
      %p65 = por %p63, %p64
      %p66 = scmp.ne.s32.totalorder %s58, %s60
      %p67 = scmp.eq.s32.totalorder %s17, 1
      %p68 = por %p66, %p67
      %p69 = scmp.ne.s32.totalorder %s60, %s61
      %p70 = scmp.eq.s32.totalorder %s17, 0
      %p71 = por %p69, %p70
      %p72 = scmp.ne.s32.totalorder %s60, %s61
      %p73 = scmp.eq.s32.totalorder %s18, 1
      %p74 = por %p72, %p73
      %p76 = scmp.ne.s32.totalorder %s61, %s75
      %p77 = scmp.eq.s32.totalorder %s18, 0
      %p78 = por %p76, %p77
      %s80 = sadd.s32 %s79, 1
      %p83 = scmp.eq.s32.totalorder %s12, 1
      %p84 = scmp.ne.s32.totalorder %s79, %s81
      %p85 = scmp.eq.s32.totalorder %s12, 0
      %p86 = por %p84, %p85
      %p87 = scmp.ne.s32.totalorder %s79, %s81
      %p88 = scmp.eq.s32.totalorder %s17, 1
      %p89 = por %p87, %p88
      %p90 = scmp.ne.s32.totalorder %s81, %s82
      %p91 = scmp.eq.s32.totalorder %s17, 0
      %p92 = por %p90, %p91
      %p93 = scmp.ne.s32.totalorder %s81, %s82
      %p94 = scmp.eq.s32.totalorder %s18, 1
      %p95 = por %p93, %p94
      %p97 = scmp.ne.s32.totalorder %s82, %s96
      %p98 = scmp.eq.s32.totalorder %s18, 0
      %p99 = por %p97, %p98
      %s100 = ssub.s32 %s19, %s31
      %s101 = ssub.s32 %s20, %s27
      %s102 = sor.u32 %s100, %s101
      %p103 = scmp.eq.s32.totalorder %s102, 0
      %s105 = sadd.s32 %s104, 1
      %s106 = scalar_select %p103, %s104, %s105
      %p109 = pneg %p103
      %p110 = scmp.eq.s32.totalorder %s12, 1
      %p111 = por %p109, %p110
      %p112 = scmp.ne.s32.totalorder %s104, %s107
      %p113 = scmp.eq.s32.totalorder %s12, 0
      %p114 = por %p112, %p113
      %p115 = scmp.ne.s32.totalorder %s104, %s107
      %p116 = scmp.eq.s32.totalorder %s17, 1
      %p117 = por %p115, %p116
      %p118 = scmp.ne.s32.totalorder %s107, %s108
      %p119 = scmp.eq.s32.totalorder %s17, 0
      %p120 = por %p118, %p119
      %p121 = scmp.ne.s32.totalorder %s107, %s108
      %p122 = scmp.eq.s32.totalorder %s18, 1
      %p123 = por %p121, %p122
      %p125 = scmp.ne.s32.totalorder %s108, %s124
      %p126 = scmp.eq.s32.totalorder %s18, 0
      %p127 = por %p125, %p126
      %p128 = scmp.le.s32.totalorder 1, %s12
      %p129 = scmp.lt.s32.totalorder %s12, 3
      %p130 = pnand %p128, %p129
      %p131 = pneg %p130
      // Predicated region
      $region9: #{tpu_custom_call.1} parent=5 // pred_check
        _
      $region10: #{tpu_custom_call.1} parent=5 // pred_check_branch
        %133 = sbr.rel (%p130) target = $region12
      $region11: #{tpu_custom_call.1} parent=5 // pred_region
        %s134 = ssub.s32 %s12, 1
        // Predicated region
        $region13: #{tpu_custom_call.1} parent=11 // pred_check
          %p135 = pneg %p71
        $region14: #{tpu_custom_call.1} parent=11 // pred_check_branch
          %137 = sbr.rel (%p135) target = $region16
        $region15: #{tpu_custom_call.1} parent=11 // pred_region
          _
        $region16: #{tpu_custom_call.1} parent=11 // pred_fallthru
          _
        // Predicated region
        $region17: #{tpu_custom_call.1} parent=11 // pred_check
          %p138 = pneg %p92
        $region18: #{tpu_custom_call.1} parent=11 // pred_check_branch
          %140 = sbr.rel (%p138) target = $region20
        $region19: #{tpu_custom_call.1} parent=11 // pred_region
          _
        $region20: #{tpu_custom_call.1} parent=11 // pred_fallthru
          _
      $region12: #{tpu_custom_call.1} parent=5 // pred_fallthru
        _
      %p141 = scmp.lt.s32.totalorder %s12, 2
      // Predicated region
      $region21: #{tpu_custom_call.1} parent=5 // pred_check
        %p142 = pneg %p141
      $region22: #{tpu_custom_call.1} parent=5 // pred_check_branch
        %144 = sbr.rel (%p142) target = $region24
      $region23: #{tpu_custom_call.1} parent=5 // pred_region
        // Predicated region
        $region25: #{tpu_custom_call.1} parent=23 // pred_check
          %p145 = pneg %p44
        $region26: #{tpu_custom_call.1} parent=23 // pred_check_branch
          %147 = sbr.rel (%p145) target = $region28
        $region27: #{tpu_custom_call.1} parent=23 // pred_region
          %p148 = scmp.lt.s32.totalorder %s19, 1
          %s149 = scalar_select %p148, %s19, 1
          %s150 = smul.addr %s149, 50
          %s151 = smul.addr %s150, 4
          %s152 = scalar_lea.vmem %s0, %s151
        $region28: #{tpu_custom_call.1} parent=23 // pred_fallthru
          _
      $region24: #{tpu_custom_call.1} parent=5 // pred_fallthru
        _
      %p153 = scmp.le.s32.totalorder 1, %s12
      %p154 = scmp.lt.s32.totalorder %s12, 3
      %p155 = pnand %p153, %p154
      %p156 = pneg %p155
      // Predicated region
      $region29: #{tpu_custom_call.1} parent=5 // pred_check
        _
      $region30: #{tpu_custom_call.1} parent=5 // pred_check_branch
        %158 = sbr.rel (%p155) target = $region32
      $region31: #{tpu_custom_call.1} parent=5 // pred_region
        %s159 = ssub.s32 %s12, 1
        %p160 = scmp.lt.s32.totalorder %s21, 1
        %s161 = scalar_select %p160, %s21, 1
        %s162 = smul.addr %s161, 50
        %s163 = smul.addr %s162, 4
        %s164 = scalar_lea.vmem %s0, %s163
        %p165 = pneg %p50
        %p166 = pneg %p47
        %p167 = pneg %p71
        %p168 = pneg %p68
        %p169 = pneg %p92
        %p170 = pneg %p89
        %p171 = pneg %p120
        %p172 = pneg %p117
        %s173 = sand.u32 %s107, 1
        %s174 = scalar_lea.sflag [#allocation3], %s173
        %s175 = sand.u32 %s107, 1
        %s176 = smul.addr %s175, 256
        %s177 = scalar_lea.vmem [#allocation2], %s176
        %p178 = scmp.lt.s32.totalorder %s21, 1
        %s179 = scalar_select %p178, %s21, 1
        %s180 = smul.addr %s179, 50
        %s181 = smul.addr %s180, 4
        %s182 = scalar_lea.vmem %s0, %s181
        %s183 = smul.u32 8, %s22
        %s185 = smul.u32 %s22, 8
        %s186 = smul.u32 %s185, 5
        %s187 = smul.addr %s186, 4
        %s188 = scalar_lea.vmem %s182, %s187
        %v189 = vld [vmem:[%s188] sm:$0xf]
        %v190 = vld [vmem:[%s188 + $0x4] sm:$0xf]
        %v191 = vld [vmem:[%s188 + $0x8] sm:$0xf]
        %v192 = vld [vmem:[%s188 + $0xc] sm:$0xf]
        %v193 = vld [vmem:[%s188 + $0x14] sm:$0xf]
        %v194 = vld [vmem:[%s188 + $0x18] sm:$0xf]
        %v195 = vld [vmem:[%s188 + $0x1c] sm:$0xf]
        %v196 = vld [vmem:[%s188 + $0x20] sm:$0xf]
        %v197 = vld [vmem:[%s188 + $0x28] sm:$0xf]
        %v198 = vld [vmem:[%s188 + $0x2c] sm:$0xf]
        %v199 = vld [vmem:[%s188 + $0x30] sm:$0xf]
        %v200 = vld [vmem:[%s188 + $0x34] sm:$0xf]
        %v201 = vld [vmem:[%s188 + $0x3c] sm:$0xf]
        %v202 = vld [vmem:[%s188 + $0x40] sm:$0xf]
        %v203 = vld [vmem:[%s188 + $0x44] sm:$0xf]
        %v204 = vld [vmem:[%s188 + $0x48] sm:$0xf]
        %v205 = vld [vmem:[%s188 + $0x50] sm:$0xf]
        %v206 = vld [vmem:[%s188 + $0x54] sm:$0xf]
        %v207 = vld [vmem:[%s188 + $0x58] sm:$0xf]
        %v208 = vld [vmem:[%s188 + $0x5c] sm:$0xf]
        %v209 = vld [vmem:[%s188 + $0x64] sm:$0xf]
        %v210 = vld [vmem:[%s188 + $0x68] sm:$0xf]
        %v211 = vld [vmem:[%s188 + $0x6c] sm:$0xf]
        %v212 = vld [vmem:[%s188 + $0x70] sm:$0xf]
        %v213 = vld [vmem:[%s188 + $0x78] sm:$0xf]
        %v214 = vld [vmem:[%s188 + $0x7c] sm:$0xf]
        %v215 = vld [vmem:[%s188 + $0x80] sm:$0xf]
        %v216 = vld [vmem:[%s188 + $0x84] sm:$0xf]
        %v217 = vld [vmem:[%s188 + $0x8c] sm:$0xf]
        %v218 = vld [vmem:[%s188 + $0x90] sm:$0xf]
        %v219 = vld [vmem:[%s188 + $0x94] sm:$0xf]
        %v220 = vld [vmem:[%s188 + $0x98] sm:$0xf]
        %v221 = vld [vmem:[%s1] sm:$0xf]
        %v222 = vld [vmem:[%s1 + $0x4] sm:$0xf]
        %v223 = vld [vmem:[%s1 + $0x8] sm:$0xf]
        %v224 = vld [vmem:[%s1 + $0xc] sm:$0xf]
        %v225 = vld [vmem:[%s1 + $0x10] sm:$0xf]
        %v226 = vld [vmem:[%s1 + $0x14] sm:$0xf]
        %v227 = vld [vmem:[%s1 + $0x18] sm:$0xf]
        %v228 = vld [vmem:[%s1 + $0x1c] sm:$0xf]
        %v229 = vld [vmem:[%s1 + $0x20] sm:$0xf]
        %v230 = vld [vmem:[%s1 + $0x24] sm:$0xf]
        %v231 = vld [vmem:[%s1 + $0x28] sm:$0xf]
        %v232 = vld [vmem:[%s1 + $0x2c] sm:$0xf]
        %v233 = vld [vmem:[%s1 + $0x30] sm:$0xf]
        %v234 = vld [vmem:[%s1 + $0x34] sm:$0xf]
        %v235 = vld [vmem:[%s1 + $0x38] sm:$0xf]
        %v236 = vld [vmem:[%s1 + $0x3c] sm:$0xf]
        %v237 = vld [vmem:[%s188 + $0x10] sm:$0x1]
        %v238 = vld [vmem:[%s188 + $0x24] sm:$0x1]
        %v239 = vld [vmem:[%s188 + $0x38] sm:$0x1]
        %v240 = vld [vmem:[%s188 + $0x4c] sm:$0x1]
        %v241 = vld [vmem:[%s188 + $0x60] sm:$0x1]
        %v242 = vld [vmem:[%s188 + $0x74] sm:$0x1]
        %v243 = vld [vmem:[%s188 + $0x88] sm:$0x1]
        %v244 = vld [vmem:[%s188 + $0x9c] sm:$0x1]
        %vm245 = vsmask.f32 3328
        %vm246 = vsmask.f32 7440
        %vm247 = vmor %vm245, %vm246
        %v249 = vshrl.u32 %v189, 16
        %v251 = vrot.slane %v249, 4
        %v252 = vshll.u32 %v189, 16
        %v254 = vrot.slane %v252, 5
        %v255 = vor.u32 %v251, %v254
        %v256 = vrot.slane %v255, 4
        %v258 = vshll.u32 %v190, 16
        %v260 = vrot.slane %v258, 5
        %v261 = vsel %vm247, %v256, %v260
        %v262 = vshrl.u32 %v190, 16
        %v264 = vrot.slane %v262, 4
        %v265 = vor.u32 %v264, %v260
        %v266 = vrot.slane %v265, 4
        %v268 = vshll.u32 %v191, 16
        %v270 = vrot.slane %v268, 5
        %v271 = vsel %vm247, %v266, %v270
        %v272 = vshrl.u32 %v191, 16
        %v274 = vrot.slane %v272, 4
        %v275 = vor.u32 %v274, %v270
        %v276 = vrot.slane %v275, 4
        %v278 = vshll.u32 %v192, 16
        %v280 = vrot.slane %v278, 5
        %v281 = vsel %vm247, %v276, %v280
        %v282 = vshrl.u32 %v192, 16
        %v284 = vrot.slane %v282, 4
        %v285 = vor.u32 %v284, %v280
        %v286 = vrot.slane %v285, 4
        %v288 = vshll.u32 %v237, 16
        %v290 = vrot.slane %v288, 5
        %v291 = vsel %vm247, %v286, %v290
        %v293 = vshrl.u32 %v193, 16
        %v295 = vrot.slane %v293, 4
        %v296 = vshll.u32 %v193, 16
        %v298 = vrot.slane %v296, 5
        %v299 = vor.u32 %v295, %v298
        %v300 = vrot.slane %v299, 4
        %v302 = vshll.u32 %v194, 16
        %v304 = vrot.slane %v302, 5
        %v305 = vsel %vm247, %v300, %v304
        %v306 = vshrl.u32 %v194, 16
        %v308 = vrot.slane %v306, 4
        %v309 = vor.u32 %v308, %v304
        %v310 = vrot.slane %v309, 4
        %v312 = vshll.u32 %v195, 16
        %v314 = vrot.slane %v312, 5
        %v315 = vsel %vm247, %v310, %v314
        %v316 = vshrl.u32 %v195, 16
        %v318 = vrot.slane %v316, 4
        %v319 = vor.u32 %v318, %v314
        %v320 = vrot.slane %v319, 4
        %v322 = vshll.u32 %v196, 16
        %v324 = vrot.slane %v322, 5
        %v325 = vsel %vm247, %v320, %v324
        %v326 = vshrl.u32 %v196, 16
        %v328 = vrot.slane %v326, 4
        %v329 = vor.u32 %v328, %v324
        %v330 = vrot.slane %v329, 4
        %v332 = vshll.u32 %v238, 16
        %v334 = vrot.slane %v332, 5
        %v335 = vsel %vm247, %v330, %v334
        %v337 = vshrl.u32 %v197, 16
        %v339 = vrot.slane %v337, 4
        %v340 = vshll.u32 %v197, 16
        %v342 = vrot.slane %v340, 5
        %v343 = vor.u32 %v339, %v342
        %v344 = vrot.slane %v343, 4
        %v346 = vshll.u32 %v198, 16
        %v348 = vrot.slane %v346, 5
        %v349 = vsel %vm247, %v344, %v348
        %v350 = vshrl.u32 %v198, 16
        %v352 = vrot.slane %v350, 4
        %v353 = vor.u32 %v352, %v348
        %v354 = vrot.slane %v353, 4
        %v356 = vshll.u32 %v199, 16
        %v358 = vrot.slane %v356, 5
        %v359 = vsel %vm247, %v354, %v358
        %v360 = vshrl.u32 %v199, 16
        %v362 = vrot.slane %v360, 4
        %v363 = vor.u32 %v362, %v358
        %v364 = vrot.slane %v363, 4
        %v366 = vshll.u32 %v200, 16
        %v368 = vrot.slane %v366, 5
        %v369 = vsel %vm247, %v364, %v368
        %v370 = vshrl.u32 %v200, 16
        %v372 = vrot.slane %v370, 4
        %v373 = vor.u32 %v372, %v368
        %v374 = vrot.slane %v373, 4
        %v376 = vshll.u32 %v239, 16
        %v378 = vrot.slane %v376, 5
        %v379 = vsel %vm247, %v374, %v378
        %v381 = vshrl.u32 %v201, 16
        %v383 = vrot.slane %v381, 4
        %v384 = vshll.u32 %v201, 16
        %v386 = vrot.slane %v384, 5
        %v387 = vor.u32 %v383, %v386
        %v388 = vrot.slane %v387, 4
        %v390 = vshll.u32 %v202, 16
        %v392 = vrot.slane %v390, 5
        %v393 = vsel %vm247, %v388, %v392
        %v394 = vshrl.u32 %v202, 16
        %v396 = vrot.slane %v394, 4
        %v397 = vor.u32 %v396, %v392
        %v398 = vrot.slane %v397, 4
        %v400 = vshll.u32 %v203, 16
        %v402 = vrot.slane %v400, 5
        %v403 = vsel %vm247, %v398, %v402
        %v404 = vshrl.u32 %v203, 16
        %v406 = vrot.slane %v404, 4
        %v407 = vor.u32 %v406, %v402
        %v408 = vrot.slane %v407, 4
        %v410 = vshll.u32 %v204, 16
        %v412 = vrot.slane %v410, 5
        %v413 = vsel %vm247, %v408, %v412
        %v414 = vshrl.u32 %v204, 16
        %v416 = vrot.slane %v414, 4
        %v417 = vor.u32 %v416, %v412
        %v418 = vrot.slane %v417, 4
        %v420 = vshll.u32 %v240, 16
        %v422 = vrot.slane %v420, 5
        %v423 = vsel %vm247, %v418, %v422
        %v425 = vshrl.u32 %v205, 16
        %v427 = vrot.slane %v425, 4
        %v428 = vshll.u32 %v205, 16
        %v430 = vrot.slane %v428, 5
        %v431 = vor.u32 %v427, %v430
        %v432 = vrot.slane %v431, 4
        %v434 = vshll.u32 %v206, 16
        %v436 = vrot.slane %v434, 5
        %v437 = vsel %vm247, %v432, %v436
        %v438 = vshrl.u32 %v206, 16
        %v440 = vrot.slane %v438, 4
        %v441 = vor.u32 %v440, %v436
        %v442 = vrot.slane %v441, 4
        %v444 = vshll.u32 %v207, 16
        %v446 = vrot.slane %v444, 5
        %v447 = vsel %vm247, %v442, %v446
        %v448 = vshrl.u32 %v207, 16
        %v450 = vrot.slane %v448, 4
        %v451 = vor.u32 %v450, %v446
        %v452 = vrot.slane %v451, 4
        %v454 = vshll.u32 %v208, 16
        %v456 = vrot.slane %v454, 5
        %v457 = vsel %vm247, %v452, %v456
        %v458 = vshrl.u32 %v208, 16
        %v460 = vrot.slane %v458, 4
        %v461 = vor.u32 %v460, %v456
        %v462 = vrot.slane %v461, 4
        %v464 = vshll.u32 %v241, 16
        %v466 = vrot.slane %v464, 5
        %v467 = vsel %vm247, %v462, %v466
        %v469 = vshrl.u32 %v209, 16
        %v471 = vrot.slane %v469, 4
        %v472 = vshll.u32 %v209, 16
        %v474 = vrot.slane %v472, 5
        %v475 = vor.u32 %v471, %v474
        %v476 = vrot.slane %v475, 4
        %v478 = vshll.u32 %v210, 16
        %v480 = vrot.slane %v478, 5
        %v481 = vsel %vm247, %v476, %v480
        %v482 = vshrl.u32 %v210, 16
        %v484 = vrot.slane %v482, 4
        %v485 = vor.u32 %v484, %v480
        %v486 = vrot.slane %v485, 4
        %v488 = vshll.u32 %v211, 16
        %v490 = vrot.slane %v488, 5
        %v491 = vsel %vm247, %v486, %v490
        %v492 = vshrl.u32 %v211, 16
        %v494 = vrot.slane %v492, 4
        %v495 = vor.u32 %v494, %v490
        %v496 = vrot.slane %v495, 4
        %v498 = vshll.u32 %v212, 16
        %v500 = vrot.slane %v498, 5
        %v501 = vsel %vm247, %v496, %v500
        %v502 = vshrl.u32 %v212, 16
        %v504 = vrot.slane %v502, 4
        %v505 = vor.u32 %v504, %v500
        %v506 = vrot.slane %v505, 4
        %v508 = vshll.u32 %v242, 16
        %v510 = vrot.slane %v508, 5
        %v511 = vsel %vm247, %v506, %v510
        %v513 = vshrl.u32 %v213, 16
        %v515 = vrot.slane %v513, 4
        %v516 = vshll.u32 %v213, 16
        %v518 = vrot.slane %v516, 5
        %v519 = vor.u32 %v515, %v518
        %v520 = vrot.slane %v519, 4
        %v522 = vshll.u32 %v214, 16
        %v524 = vrot.slane %v522, 5
        %v525 = vsel %vm247, %v520, %v524
        %v526 = vshrl.u32 %v214, 16
        %v528 = vrot.slane %v526, 4
        %v529 = vor.u32 %v528, %v524
        %v530 = vrot.slane %v529, 4
        %v532 = vshll.u32 %v215, 16
        %v534 = vrot.slane %v532, 5
        %v535 = vsel %vm247, %v530, %v534
        %v536 = vshrl.u32 %v215, 16
        %v538 = vrot.slane %v536, 4
        %v539 = vor.u32 %v538, %v534
        %v540 = vrot.slane %v539, 4
        %v542 = vshll.u32 %v216, 16
        %v544 = vrot.slane %v542, 5
        %v545 = vsel %vm247, %v540, %v544
        %v546 = vshrl.u32 %v216, 16
        %v548 = vrot.slane %v546, 4
        %v549 = vor.u32 %v548, %v544
        %v550 = vrot.slane %v549, 4
        %v552 = vshll.u32 %v243, 16
        %v554 = vrot.slane %v552, 5
        %v555 = vsel %vm247, %v550, %v554
        %v557 = vshrl.u32 %v217, 16
        %v559 = vrot.slane %v557, 4
        %v560 = vshll.u32 %v217, 16
        %v562 = vrot.slane %v560, 5
        %v563 = vor.u32 %v559, %v562
        %v564 = vrot.slane %v563, 4
        %v566 = vshll.u32 %v218, 16
        %v568 = vrot.slane %v566, 5
        %v569 = vsel %vm247, %v564, %v568
        %v570 = vshrl.u32 %v218, 16
        %v572 = vrot.slane %v570, 4
        %v573 = vor.u32 %v572, %v568
        %v574 = vrot.slane %v573, 4
        %v576 = vshll.u32 %v219, 16
        %v578 = vrot.slane %v576, 5
        %v579 = vsel %vm247, %v574, %v578
        %v580 = vshrl.u32 %v219, 16
        %v582 = vrot.slane %v580, 4
        %v583 = vor.u32 %v582, %v578
        %v584 = vrot.slane %v583, 4
        %v586 = vshll.u32 %v220, 16
        %v588 = vrot.slane %v586, 5
        %v589 = vsel %vm247, %v584, %v588
        %v590 = vshrl.u32 %v220, 16
        %v592 = vrot.slane %v590, 4
        %v593 = vor.u32 %v592, %v588
        %v594 = vrot.slane %v593, 4
        %v596 = vshll.u32 %v244, 16
        %v598 = vrot.slane %v596, 5
        %v599 = vsel %vm247, %v594, %v598
        %s600 = scalar_lea.vmem %s1, 64
        %v601 = vld [vmem:[%s600] sm:$0xf]
        %v602 = vld [vmem:[%s600 + $0x4] sm:$0xf]
        %v603 = vld [vmem:[%s600 + $0x8] sm:$0xf]
        %v604 = vld [vmem:[%s600 + $0xc] sm:$0xf]
        %v605 = vld [vmem:[%s600 + $0x10] sm:$0xf]
        %v606 = vld [vmem:[%s600 + $0x14] sm:$0xf]
        %v607 = vld [vmem:[%s600 + $0x18] sm:$0xf]
        %v608 = vld [vmem:[%s600 + $0x1c] sm:$0xf]
        %v609 = vld [vmem:[%s600 + $0x20] sm:$0xf]
        %v610 = vld [vmem:[%s600 + $0x24] sm:$0xf]
        %v611 = vld [vmem:[%s600 + $0x28] sm:$0xf]
        %v612 = vld [vmem:[%s600 + $0x2c] sm:$0xf]
        %v613 = vld [vmem:[%s600 + $0x30] sm:$0xf]
        %v614 = vld [vmem:[%s600 + $0x34] sm:$0xf]
        %v615 = vld [vmem:[%s600 + $0x38] sm:$0xf]
        %v616 = vld [vmem:[%s600 + $0x3c] sm:$0xf]
        %v617 = vunpack.c.l.b16 %v261
        %v618 = vunpack.c.l.b16 %v271
        %v619 = vunpack.c.l.b16 %v281
        %v620 = vunpack.c.l.b16 %v291
        %v621 = vunpack.c.l.b16 %v305
        %v622 = vunpack.c.l.b16 %v315
        %v623 = vunpack.c.l.b16 %v325
        %v624 = vunpack.c.l.b16 %v335
        %v625 = vunpack.c.l.b16 %v349
        %v626 = vunpack.c.l.b16 %v359
        %v627 = vunpack.c.l.b16 %v369
        %v628 = vunpack.c.l.b16 %v379
        %v629 = vunpack.c.l.b16 %v393
        %v630 = vunpack.c.l.b16 %v403
        %v631 = vunpack.c.l.b16 %v413
        %v632 = vunpack.c.l.b16 %v423
        %v633 = vunpack.c.l.b16 %v437
        %v634 = vunpack.c.l.b16 %v447
        %v635 = vunpack.c.l.b16 %v457
        %v636 = vunpack.c.l.b16 %v467
        %v637 = vunpack.c.l.b16 %v481
        %v638 = vunpack.c.l.b16 %v491
        %v639 = vunpack.c.l.b16 %v501
        %v640 = vunpack.c.l.b16 %v511
        %v641 = vunpack.c.l.b16 %v525
        %v642 = vunpack.c.l.b16 %v535
        %v643 = vunpack.c.l.b16 %v545
        %v644 = vunpack.c.l.b16 %v555
        %v645 = vunpack.c.l.b16 %v569
        %v646 = vunpack.c.l.b16 %v579
        %v647 = vunpack.c.l.b16 %v589
        %v648 = vunpack.c.l.b16 %v599
        %v649 = vpack.c.b16 %v618, %v617
        %v650 = vpack.c.b16 %v620, %v619
        %v651 = vpack.c.b16 %v622, %v621
        %v652 = vpack.c.b16 %v624, %v623
        %v653 = vpack.c.b16 %v626, %v625
        %v654 = vpack.c.b16 %v628, %v627
        %v655 = vpack.c.b16 %v630, %v629
        %v656 = vpack.c.b16 %v632, %v631
        %v657 = vpack.c.b16 %v634, %v633
        %v658 = vpack.c.b16 %v636, %v635
        %v659 = vpack.c.b16 %v638, %v637
        %v660 = vpack.c.b16 %v640, %v639
        %v661 = vpack.c.b16 %v642, %v641
        %v662 = vpack.c.b16 %v644, %v643
        %v663 = vpack.c.b16 %v646, %v645
        %v664 = vpack.c.b16 %v648, %v647
        %v697 = vunpack.c.l.b16 %v601
        %v698 = vunpack.c.l.b16 %v602
        %v699 = vunpack.c.l.b16 %v603
        %v700 = vunpack.c.l.b16 %v604
        %v701 = vunpack.c.l.b16 %v605
        %v702 = vunpack.c.l.b16 %v606
        %v703 = vunpack.c.l.b16 %v607
        %v704 = vunpack.c.l.b16 %v608
        %v705 = vunpack.c.l.b16 %v609
        %v706 = vunpack.c.l.b16 %v610
        %v707 = vunpack.c.l.b16 %v611
        %v708 = vunpack.c.l.b16 %v612
        %v709 = vunpack.c.l.b16 %v613
        %v710 = vunpack.c.l.b16 %v614
        %v711 = vunpack.c.l.b16 %v615
        %v712 = vunpack.c.l.b16 %v616
        %v713 = vpack.c.b16 %v698, %v697
        %v714 = vpack.c.b16 %v700, %v699
        %v715 = vpack.c.b16 %v702, %v701
        %v716 = vpack.c.b16 %v704, %v703
        %v717 = vpack.c.b16 %v706, %v705
        %v718 = vpack.c.b16 %v708, %v707
        %v719 = vpack.c.b16 %v710, %v709
        %v720 = vpack.c.b16 %v712, %v711
        %729 = vmatprep.subr.bf16.mxu0 0
        %730 = vmatpush1.bf16.msra.mxu0 %v713
        %731 = vmatprep.subr.bf16.mxu0 0
        %732 = vmatpush1.bf16.msra.mxu0 %v714
        %733 = vmatprep.subr.bf16.mxu0 0
        %734 = vmatpush1.bf16.msra.mxu0 %v715
        %735 = vmatprep.subr.bf16.mxu0 0
        %736 = vmatpush1.bf16.msra.mxu0 %v716
        %737 = vmatprep.subr.bf16.mxu0 0
        %738 = vmatpush1.bf16.msra.mxu0 %v717
        %739 = vmatprep.subr.bf16.mxu0 0
        %740 = vmatpush1.bf16.msra.mxu0 %v718
        %741 = vmatprep.subr.bf16.mxu0 0
        %742 = vmatpush1.bf16.msra.mxu0 %v719
        %743 = vmatprep.subr.bf16.mxu0 0
        %744 = vmatpush1.bf16.msra.mxu0 %v720
        %745 = vmatprep.subr.bf16.mxu0 0
        %746 = vmatpush1.bf16.msra.mxu0 0
        %747 = vmatprep.subr.bf16.mxu0 0
        %748 = vmatpush1.bf16.msra.mxu0 0
        %749 = vmatprep.subr.bf16.mxu0 0
        %750 = vmatpush1.bf16.msra.mxu0 0
        %751 = vmatprep.subr.bf16.mxu0 0
        %752 = vmatpush1.bf16.msra.mxu0 0
        %753 = vmatprep.subr.bf16.mxu0 0
        %754 = vmatpush1.bf16.msra.mxu0 0
        %755 = vmatprep.subr.bf16.mxu0 0
        %756 = vmatpush1.bf16.msra.mxu0 0
        %757 = vmatprep.subr.bf16.mxu0 0
        %758 = vmatpush1.bf16.msra.mxu0 0
        %759 = vmatprep.subr.bf16.mxu0 0
        %760 = vmatpush1.bf16.msra.mxu0 0
        %761 = vmatprep.mubr.bf16.mxu0 0
        %762 = vmatmul.mubr.bf16.gmra.mrb[0].mxu0 %v649
        %v763 = vpop.f32.mrb[0].mxu0
        %v764 = vadd.f32 0.0, %v763
        %v765 = vpop.f32.mrb[0].mxu0
        %v766 = vpop.f32.mrb[0].mxu0
        %v767 = vadd.f32 0.0, %v766
        %v768 = vpop.f32.mrb[0].mxu0
        %769 = vmatprep.mubr.bf16.mxu0 0
        %770 = vmatmul.mubr.bf16.gmra.mrb[0].mxu0 %v650
        %v771 = vpop.f32.mrb[0].mxu0
        %v772 = vadd.f32 0.0, %v771
        %v773 = vpop.f32.mrb[0].mxu0
        %v774 = vpop.f32.mrb[0].mxu0
        %v775 = vadd.f32 0.0, %v774
        %v776 = vpop.f32.mrb[0].mxu0
        %777 = vmatprep.mubr.bf16.mxu0 0
        %778 = vmatmul.mubr.bf16.gmra.mrb[0].mxu0 %v651
        %v779 = vpop.f32.mrb[0].mxu0
        %v780 = vadd.f32 0.0, %v779
        %v781 = vpop.f32.mrb[0].mxu0
        %v782 = vpop.f32.mrb[0].mxu0
        %v783 = vadd.f32 0.0, %v782
        %v784 = vpop.f32.mrb[0].mxu0
        %785 = vmatprep.mubr.bf16.mxu0 0
        %786 = vmatmul.mubr.bf16.gmra.mrb[0].mxu0 %v652
        %v787 = vpop.f32.mrb[0].mxu0
        %v788 = vadd.f32 0.0, %v787
        %v789 = vpop.f32.mrb[0].mxu0
        %v790 = vpop.f32.mrb[0].mxu0
        %v791 = vadd.f32 0.0, %v790
        %v792 = vpop.f32.mrb[0].mxu0
        %793 = vmatprep.mubr.bf16.mxu0 0
        %794 = vmatmul.mubr.bf16.gmra.mrb[0].mxu0 %v653
        %v795 = vpop.f32.mrb[0].mxu0
        %v796 = vadd.f32 0.0, %v795
        %v797 = vpop.f32.mrb[0].mxu0
        %v798 = vpop.f32.mrb[0].mxu0
        %v799 = vadd.f32 0.0, %v798
        %v800 = vpop.f32.mrb[0].mxu0
        %801 = vmatprep.mubr.bf16.mxu0 0
        %802 = vmatmul.mubr.bf16.gmra.mrb[0].mxu0 %v654
        %v803 = vpop.f32.mrb[0].mxu0
        %v804 = vadd.f32 0.0, %v803
        %v805 = vpop.f32.mrb[0].mxu0
        %v806 = vpop.f32.mrb[0].mxu0
        %v807 = vadd.f32 0.0, %v806
        %v808 = vpop.f32.mrb[0].mxu0
        %809 = vmatprep.mubr.bf16.mxu0 0
        %810 = vmatmul.mubr.bf16.gmra.mrb[0].mxu0 %v655
        %v811 = vpop.f32.mrb[0].mxu0
        %v812 = vadd.f32 0.0, %v811
        %v813 = vpop.f32.mrb[0].mxu0
        %v814 = vpop.f32.mrb[0].mxu0
        %v815 = vadd.f32 0.0, %v814
        %v816 = vpop.f32.mrb[0].mxu0
        %817 = vmatprep.mubr.bf16.mxu0 0
        %818 = vmatmul.mubr.bf16.gmra.mrb[0].mxu0 %v656
        %v819 = vpop.f32.mrb[0].mxu0
        %v820 = vadd.f32 0.0, %v819
        %v821 = vpop.f32.mrb[0].mxu0
        %v822 = vpop.f32.mrb[0].mxu0
        %v823 = vadd.f32 0.0, %v822
        %v824 = vpop.f32.mrb[0].mxu0
        %825 = vmatprep.mubr.bf16.mxu0 0
        %826 = vmatmul.mubr.bf16.gmra.mrb[0].mxu0 %v657
        %v827 = vpop.f32.mrb[0].mxu0
        %v828 = vadd.f32 0.0, %v827
        %v829 = vpop.f32.mrb[0].mxu0
        %v830 = vpop.f32.mrb[0].mxu0
        %v831 = vadd.f32 0.0, %v830
        %v832 = vpop.f32.mrb[0].mxu0
        %833 = vmatprep.mubr.bf16.mxu0 0
        %834 = vmatmul.mubr.bf16.gmra.mrb[0].mxu0 %v658
        %v835 = vpop.f32.mrb[0].mxu0
        %v836 = vadd.f32 0.0, %v835
        %v837 = vpop.f32.mrb[0].mxu0
        %v838 = vpop.f32.mrb[0].mxu0
        %v839 = vadd.f32 0.0, %v838
        %v840 = vpop.f32.mrb[0].mxu0
        %841 = vmatprep.mubr.bf16.mxu0 0
        %842 = vmatmul.mubr.bf16.gmra.mrb[0].mxu0 %v659
        %v843 = vpop.f32.mrb[0].mxu0
        %v844 = vadd.f32 0.0, %v843
        %v845 = vpop.f32.mrb[0].mxu0
        %v846 = vpop.f32.mrb[0].mxu0
        %v847 = vadd.f32 0.0, %v846
        %v848 = vpop.f32.mrb[0].mxu0
        %849 = vmatprep.mubr.bf16.mxu0 0
        %850 = vmatmul.mubr.bf16.gmra.mrb[0].mxu0 %v660
        %v851 = vpop.f32.mrb[0].mxu0
        %v852 = vadd.f32 0.0, %v851
        %v853 = vpop.f32.mrb[0].mxu0
        %v854 = vpop.f32.mrb[0].mxu0
        %v855 = vadd.f32 0.0, %v854
        %v856 = vpop.f32.mrb[0].mxu0
        %857 = vmatprep.mubr.bf16.mxu0 0
        %858 = vmatmul.mubr.bf16.gmra.mrb[0].mxu0 %v661
        %v859 = vpop.f32.mrb[0].mxu0
        %v860 = vadd.f32 0.0, %v859
        %v861 = vpop.f32.mrb[0].mxu0
        %v862 = vpop.f32.mrb[0].mxu0
        %v863 = vadd.f32 0.0, %v862
        %v864 = vpop.f32.mrb[0].mxu0
        %865 = vmatprep.mubr.bf16.mxu0 0
        %866 = vmatmul.mubr.bf16.gmra.mrb[0].mxu0 %v662
        %v867 = vpop.f32.mrb[0].mxu0
        %v868 = vadd.f32 0.0, %v867
        %v869 = vpop.f32.mrb[0].mxu0
        %v870 = vpop.f32.mrb[0].mxu0
        %v871 = vadd.f32 0.0, %v870
        %v872 = vpop.f32.mrb[0].mxu0
        %873 = vmatprep.mubr.bf16.mxu0 0
        %874 = vmatmul.mubr.bf16.gmra.mrb[0].mxu0 %v663
        %v875 = vpop.f32.mrb[0].mxu0
        %v876 = vadd.f32 0.0, %v875
        %v877 = vpop.f32.mrb[0].mxu0
        %v878 = vpop.f32.mrb[0].mxu0
        %v879 = vadd.f32 0.0, %v878
        %v880 = vpop.f32.mrb[0].mxu0
        %881 = vmatprep.mubr.bf16.mxu0 0
        %882 = vmatmul.mubr.bf16.gmra.mrb[0].mxu0 %v664
        %v883 = vpop.f32.mrb[0].mxu0
        %v884 = vadd.f32 0.0, %v883
        %v885 = vpop.f32.mrb[0].mxu0
        %v886 = vpop.f32.mrb[0].mxu0
        %v887 = vadd.f32 0.0, %v886
        %v888 = vpop.f32.mrb[0].mxu0
        %889 = vdwg.mxu0
        %v922 = vunpack.c.l.b16 %v189
        %v923 = vunpack.c.l.b16 %v190
        %v924 = vunpack.c.l.b16 %v191
        %v925 = vunpack.c.l.b16 %v192
        %v926 = vunpack.c.l.b16 %v193
        %v927 = vunpack.c.l.b16 %v194
        %v928 = vunpack.c.l.b16 %v195
        %v929 = vunpack.c.l.b16 %v196
        %v930 = vunpack.c.l.b16 %v197
        %v931 = vunpack.c.l.b16 %v198
        %v932 = vunpack.c.l.b16 %v199
        %v933 = vunpack.c.l.b16 %v200
        %v934 = vunpack.c.l.b16 %v201
        %v935 = vunpack.c.l.b16 %v202
        %v936 = vunpack.c.l.b16 %v203
        %v937 = vunpack.c.l.b16 %v204
        %v938 = vunpack.c.l.b16 %v205
        %v939 = vunpack.c.l.b16 %v206
        %v940 = vunpack.c.l.b16 %v207
        %v941 = vunpack.c.l.b16 %v208
        %v942 = vunpack.c.l.b16 %v209
        %v943 = vunpack.c.l.b16 %v210
        %v944 = vunpack.c.l.b16 %v211
        %v945 = vunpack.c.l.b16 %v212
        %v946 = vunpack.c.l.b16 %v213
        %v947 = vunpack.c.l.b16 %v214
        %v948 = vunpack.c.l.b16 %v215
        %v949 = vunpack.c.l.b16 %v216
        %v950 = vunpack.c.l.b16 %v217
        %v951 = vunpack.c.l.b16 %v218
        %v952 = vunpack.c.l.b16 %v219
        %v953 = vunpack.c.l.b16 %v220
        %v954 = vpack.c.b16 %v923, %v922
        %v955 = vpack.c.b16 %v925, %v924
        %v956 = vpack.c.b16 %v927, %v926
        %v957 = vpack.c.b16 %v929, %v928
        %v958 = vpack.c.b16 %v931, %v930
        %v959 = vpack.c.b16 %v933, %v932
        %v960 = vpack.c.b16 %v935, %v934
        %v961 = vpack.c.b16 %v937, %v936
        %v962 = vpack.c.b16 %v939, %v938
        %v963 = vpack.c.b16 %v941, %v940
        %v964 = vpack.c.b16 %v943, %v942
        %v965 = vpack.c.b16 %v945, %v944
        %v966 = vpack.c.b16 %v947, %v946
        %v967 = vpack.c.b16 %v949, %v948
        %v968 = vpack.c.b16 %v951, %v950
        %v969 = vpack.c.b16 %v953, %v952
        %v1002 = vunpack.c.l.b16 %v221
        %v1003 = vunpack.c.l.b16 %v222
        %v1004 = vunpack.c.l.b16 %v223
        %v1005 = vunpack.c.l.b16 %v224
        %v1006 = vunpack.c.l.b16 %v225
        %v1007 = vunpack.c.l.b16 %v226
        %v1008 = vunpack.c.l.b16 %v227
        %v1009 = vunpack.c.l.b16 %v228
        %v1010 = vunpack.c.l.b16 %v229
        %v1011 = vunpack.c.l.b16 %v230
        %v1012 = vunpack.c.l.b16 %v231
        %v1013 = vunpack.c.l.b16 %v232
        %v1014 = vunpack.c.l.b16 %v233
        %v1015 = vunpack.c.l.b16 %v234
        %v1016 = vunpack.c.l.b16 %v235
        %v1017 = vunpack.c.l.b16 %v236
        %v1018 = vpack.c.b16 %v1003, %v1002
        %v1019 = vpack.c.b16 %v1005, %v1004
        %v1020 = vpack.c.b16 %v1007, %v1006
        %v1021 = vpack.c.b16 %v1009, %v1008
        %v1022 = vpack.c.b16 %v1011, %v1010
        %v1023 = vpack.c.b16 %v1013, %v1012
        %v1024 = vpack.c.b16 %v1015, %v1014
        %v1025 = vpack.c.b16 %v1017, %v1016
        %1034 = vmatprep.subr.bf16.mxu0 0
        %1035 = vmatpush1.bf16.msra.mxu0 %v1018
        %1036 = vmatprep.subr.bf16.mxu0 0
        %1037 = vmatpush1.bf16.msra.mxu0 %v1019
        %1038 = vmatprep.subr.bf16.mxu0 0
        %1039 = vmatpush1.bf16.msra.mxu0 %v1020
        %1040 = vmatprep.subr.bf16.mxu0 0
        %1041 = vmatpush1.bf16.msra.mxu0 %v1021
        %1042 = vmatprep.subr.bf16.mxu0 0
        %1043 = vmatpush1.bf16.msra.mxu0 %v1022
        %1044 = vmatprep.subr.bf16.mxu0 0
        %1045 = vmatpush1.bf16.msra.mxu0 %v1023
        %1046 = vmatprep.subr.bf16.mxu0 0
        %1047 = vmatpush1.bf16.msra.mxu0 %v1024
        %1048 = vmatprep.subr.bf16.mxu0 0
        %1049 = vmatpush1.bf16.msra.mxu0 %v1025
        %1050 = vmatprep.subr.bf16.mxu0 0
        %1051 = vmatpush1.bf16.msra.mxu0 0
        %1052 = vmatprep.subr.bf16.mxu0 0
        %1053 = vmatpush1.bf16.msra.mxu0 0
        %1054 = vmatprep.subr.bf16.mxu0 0
        %1055 = vmatpush1.bf16.msra.mxu0 0
        %1056 = vmatprep.subr.bf16.mxu0 0
        %1057 = vmatpush1.bf16.msra.mxu0 0
        %1058 = vmatprep.subr.bf16.mxu0 0
        %1059 = vmatpush1.bf16.msra.mxu0 0
        %1060 = vmatprep.subr.bf16.mxu0 0
        %1061 = vmatpush1.bf16.msra.mxu0 0
        %1062 = vmatprep.subr.bf16.mxu0 0
        %1063 = vmatpush1.bf16.msra.mxu0 0
        %1064 = vmatprep.subr.bf16.mxu0 0
        %1065 = vmatpush1.bf16.msra.mxu0 0
        %1066 = vmatprep.mubr.bf16.mxu0 0
        %1067 = vmatmul.mubr.bf16.gmra.mrb[0].mxu0 %v954
        %v1068 = vpop.f32.mrb[0].mxu0
        %v1069 = vadd.f32 %v764, %v1068
        %v1070 = vpop.f32.mrb[0].mxu0
        %v1071 = vpop.f32.mrb[0].mxu0
        %v1072 = vadd.f32 %v767, %v1071
        %v1073 = vpop.f32.mrb[0].mxu0
        %1074 = vmatprep.mubr.bf16.mxu0 0
        %1075 = vmatmul.mubr.bf16.gmra.mrb[0].mxu0 %v955
        %v1076 = vpop.f32.mrb[0].mxu0
        %v1077 = vadd.f32 %v772, %v1076
        %v1078 = vpop.f32.mrb[0].mxu0
        %v1079 = vpop.f32.mrb[0].mxu0
        %v1080 = vadd.f32 %v775, %v1079
        %v1081 = vpop.f32.mrb[0].mxu0
        %1082 = vmatprep.mubr.bf16.mxu0 0
        %1083 = vmatmul.mubr.bf16.gmra.mrb[0].mxu0 %v956
        %v1084 = vpop.f32.mrb[0].mxu0
        %v1085 = vadd.f32 %v780, %v1084
        %v1086 = vpop.f32.mrb[0].mxu0
        %v1087 = vpop.f32.mrb[0].mxu0
        %v1088 = vadd.f32 %v783, %v1087
        %v1089 = vpop.f32.mrb[0].mxu0
        %1090 = vmatprep.mubr.bf16.mxu0 0
        %1091 = vmatmul.mubr.bf16.gmra.mrb[0].mxu0 %v957
        %v1092 = vpop.f32.mrb[0].mxu0
        %v1093 = vadd.f32 %v788, %v1092
        %v1094 = vpop.f32.mrb[0].mxu0
        %v1095 = vpop.f32.mrb[0].mxu0
        %v1096 = vadd.f32 %v791, %v1095
        %v1097 = vpop.f32.mrb[0].mxu0
        %1098 = vmatprep.mubr.bf16.mxu0 0
        %1099 = vmatmul.mubr.bf16.gmra.mrb[0].mxu0 %v958
        %v1100 = vpop.f32.mrb[0].mxu0
        %v1101 = vadd.f32 %v796, %v1100
        %v1102 = vpop.f32.mrb[0].mxu0
        %v1103 = vpop.f32.mrb[0].mxu0
        %v1104 = vadd.f32 %v799, %v1103
        %v1105 = vpop.f32.mrb[0].mxu0
        %1106 = vmatprep.mubr.bf16.mxu0 0
        %1107 = vmatmul.mubr.bf16.gmra.mrb[0].mxu0 %v959
        %v1108 = vpop.f32.mrb[0].mxu0
        %v1109 = vadd.f32 %v804, %v1108
        %v1110 = vpop.f32.mrb[0].mxu0
        %v1111 = vpop.f32.mrb[0].mxu0
        %v1112 = vadd.f32 %v807, %v1111
        %v1113 = vpop.f32.mrb[0].mxu0
        %1114 = vmatprep.mubr.bf16.mxu0 0
        %1115 = vmatmul.mubr.bf16.gmra.mrb[0].mxu0 %v960
        %v1116 = vpop.f32.mrb[0].mxu0
        %v1117 = vadd.f32 %v812, %v1116
        %v1118 = vpop.f32.mrb[0].mxu0
        %v1119 = vpop.f32.mrb[0].mxu0
        %v1120 = vadd.f32 %v815, %v1119
        %v1121 = vpop.f32.mrb[0].mxu0
        %1122 = vmatprep.mubr.bf16.mxu0 0
        %1123 = vmatmul.mubr.bf16.gmra.mrb[0].mxu0 %v961
        %v1124 = vpop.f32.mrb[0].mxu0
        %v1125 = vadd.f32 %v820, %v1124
        %v1126 = vpop.f32.mrb[0].mxu0
        %v1127 = vpop.f32.mrb[0].mxu0
        %v1128 = vadd.f32 %v823, %v1127
        %v1129 = vpop.f32.mrb[0].mxu0
        %1130 = vmatprep.mubr.bf16.mxu0 0
        %1131 = vmatmul.mubr.bf16.gmra.mrb[0].mxu0 %v962
        %v1132 = vpop.f32.mrb[0].mxu0
        %v1133 = vadd.f32 %v828, %v1132
        %v1134 = vpop.f32.mrb[0].mxu0
        %v1135 = vpop.f32.mrb[0].mxu0
        %v1136 = vadd.f32 %v831, %v1135
        %v1137 = vpop.f32.mrb[0].mxu0
        %1138 = vmatprep.mubr.bf16.mxu0 0
        %1139 = vmatmul.mubr.bf16.gmra.mrb[0].mxu0 %v963
        %v1140 = vpop.f32.mrb[0].mxu0
        %v1141 = vadd.f32 %v836, %v1140
        %v1142 = vpop.f32.mrb[0].mxu0
        %v1143 = vpop.f32.mrb[0].mxu0
        %v1144 = vadd.f32 %v839, %v1143
        %v1145 = vpop.f32.mrb[0].mxu0
        %1146 = vmatprep.mubr.bf16.mxu0 0
        %1147 = vmatmul.mubr.bf16.gmra.mrb[0].mxu0 %v964
        %v1148 = vpop.f32.mrb[0].mxu0
        %v1149 = vadd.f32 %v844, %v1148
        %v1150 = vpop.f32.mrb[0].mxu0
        %v1151 = vpop.f32.mrb[0].mxu0
        %v1152 = vadd.f32 %v847, %v1151
        %v1153 = vpop.f32.mrb[0].mxu0
        %1154 = vmatprep.mubr.bf16.mxu0 0
        %1155 = vmatmul.mubr.bf16.gmra.mrb[0].mxu0 %v965
        %v1156 = vpop.f32.mrb[0].mxu0
        %v1157 = vadd.f32 %v852, %v1156
        %v1158 = vpop.f32.mrb[0].mxu0
        %v1159 = vpop.f32.mrb[0].mxu0
        %v1160 = vadd.f32 %v855, %v1159
        %v1161 = vpop.f32.mrb[0].mxu0
        %1162 = vmatprep.mubr.bf16.mxu0 0
        %1163 = vmatmul.mubr.bf16.gmra.mrb[0].mxu0 %v966
        %v1164 = vpop.f32.mrb[0].mxu0
        %v1165 = vadd.f32 %v860, %v1164
        %v1166 = vpop.f32.mrb[0].mxu0
        %v1167 = vpop.f32.mrb[0].mxu0
        %v1168 = vadd.f32 %v863, %v1167
        %v1169 = vpop.f32.mrb[0].mxu0
        %1170 = vmatprep.mubr.bf16.mxu0 0
        %1171 = vmatmul.mubr.bf16.gmra.mrb[0].mxu0 %v967
        %v1172 = vpop.f32.mrb[0].mxu0
        %v1173 = vadd.f32 %v868, %v1172
        %v1174 = vpop.f32.mrb[0].mxu0
        %v1175 = vpop.f32.mrb[0].mxu0
        %v1176 = vadd.f32 %v871, %v1175
        %v1177 = vpop.f32.mrb[0].mxu0
        %1178 = vmatprep.mubr.bf16.mxu0 0
        %1179 = vmatmul.mubr.bf16.gmra.mrb[0].mxu0 %v968
        %v1180 = vpop.f32.mrb[0].mxu0
        %v1181 = vadd.f32 %v876, %v1180
        %v1182 = vpop.f32.mrb[0].mxu0
        %v1183 = vpop.f32.mrb[0].mxu0
        %v1184 = vadd.f32 %v879, %v1183
        %v1185 = vpop.f32.mrb[0].mxu0
        %1186 = vmatprep.mubr.bf16.mxu0 0
        %1187 = vmatmul.mubr.bf16.gmra.mrb[0].mxu0 %v969
        %v1188 = vpop.f32.mrb[0].mxu0
        %v1189 = vadd.f32 %v884, %v1188
        %v1190 = vpop.f32.mrb[0].mxu0
        %v1191 = vpop.f32.mrb[0].mxu0
        %v1192 = vadd.f32 %v887, %v1191
        %v1193 = vpop.f32.mrb[0].mxu0
        %1194 = vdwg.mxu0
        %v1195 = vld [vmem:[%s188] sm:$0xe]
        %v1196 = vld [vmem:[%s188 + $0x14] sm:$0xe]
        %v1197 = vld [vmem:[%s188 + $0x28] sm:$0xe]
        %v1198 = vld [vmem:[%s188 + $0x3c] sm:$0xe]
        %v1199 = vld [vmem:[%s188 + $0x50] sm:$0xe]
        %v1200 = vld [vmem:[%s188 + $0x64] sm:$0xe]
        %v1201 = vld [vmem:[%s188 + $0x78] sm:$0xe]
        %v1202 = vld [vmem:[%s188 + $0x8c] sm:$0xe]
        %vm1219 = vcmask 1042432
        %vm1220 = vcmask 1046532
        %vm1221 = vmor %vm1219, %vm1220
        %v1222 = vrot.slane %v1195, 5
        %v1223 = vrot.slane %v1222, 4
        %v1224 = vrot.slane %v190, 5
        %v1225 = vsel %vm1221, %v1223, %v1224
        %v1226 = vrot.slane %v1224, 4
        %v1227 = vrot.slane %v191, 5
        %v1228 = vsel %vm1221, %v1226, %v1227
        %v1229 = vrot.slane %v1227, 4
        %v1230 = vrot.slane %v192, 5
        %v1231 = vsel %vm1221, %v1229, %v1230
        %v1232 = vrot.slane %v1230, 4
        %v1233 = vrot.slane %v237, 5
        %v1234 = vsel %vm1221, %v1232, %v1233
        %v1235 = vrot.slane %v1196, 5
        %v1236 = vrot.slane %v1235, 4
        %v1237 = vrot.slane %v194, 5
        %v1238 = vsel %vm1221, %v1236, %v1237
        %v1239 = vrot.slane %v1237, 4
        %v1240 = vrot.slane %v195, 5
        %v1241 = vsel %vm1221, %v1239, %v1240
        %v1242 = vrot.slane %v1240, 4
        %v1243 = vrot.slane %v196, 5
        %v1244 = vsel %vm1221, %v1242, %v1243
        %v1245 = vrot.slane %v1243, 4
        %v1246 = vrot.slane %v238, 5
        %v1247 = vsel %vm1221, %v1245, %v1246
        %v1248 = vrot.slane %v1197, 5
        %v1249 = vrot.slane %v1248, 4
        %v1250 = vrot.slane %v198, 5
        %v1251 = vsel %vm1221, %v1249, %v1250
        %v1252 = vrot.slane %v1250, 4
        %v1253 = vrot.slane %v199, 5
        %v1254 = vsel %vm1221, %v1252, %v1253
        %v1255 = vrot.slane %v1253, 4
        %v1256 = vrot.slane %v200, 5
        %v1257 = vsel %vm1221, %v1255, %v1256
        %v1258 = vrot.slane %v1256, 4
        %v1259 = vrot.slane %v239, 5
        %v1260 = vsel %vm1221, %v1258, %v1259
        %v1261 = vrot.slane %v1198, 5
        %v1262 = vrot.slane %v1261, 4
        %v1263 = vrot.slane %v202, 5
        %v1264 = vsel %vm1221, %v1262, %v1263
        %v1265 = vrot.slane %v1263, 4
        %v1266 = vrot.slane %v203, 5
        %v1267 = vsel %vm1221, %v1265, %v1266
        %v1268 = vrot.slane %v1266, 4
        %v1269 = vrot.slane %v204, 5
        %v1270 = vsel %vm1221, %v1268, %v1269
        %v1271 = vrot.slane %v1269, 4
        %v1272 = vrot.slane %v240, 5
        %v1273 = vsel %vm1221, %v1271, %v1272
        %v1274 = vrot.slane %v1199, 5
        %v1275 = vrot.slane %v1274, 4
        %v1276 = vrot.slane %v206, 5
        %v1277 = vsel %vm1221, %v1275, %v1276
        %v1278 = vrot.slane %v1276, 4
        %v1279 = vrot.slane %v207, 5
        %v1280 = vsel %vm1221, %v1278, %v1279
        %v1281 = vrot.slane %v1279, 4
        %v1282 = vrot.slane %v208, 5
        %v1283 = vsel %vm1221, %v1281, %v1282
        %v1284 = vrot.slane %v1282, 4
        %v1285 = vrot.slane %v241, 5
        %v1286 = vsel %vm1221, %v1284, %v1285
        %v1287 = vrot.slane %v1200, 5
        %v1288 = vrot.slane %v1287, 4
        %v1289 = vrot.slane %v210, 5
        %v1290 = vsel %vm1221, %v1288, %v1289
        %v1291 = vrot.slane %v1289, 4
        %v1292 = vrot.slane %v211, 5
        %v1293 = vsel %vm1221, %v1291, %v1292
        %v1294 = vrot.slane %v1292, 4
        %v1295 = vrot.slane %v212, 5
        %v1296 = vsel %vm1221, %v1294, %v1295
        %v1297 = vrot.slane %v1295, 4
        %v1298 = vrot.slane %v242, 5
        %v1299 = vsel %vm1221, %v1297, %v1298
        %v1300 = vrot.slane %v1201, 5
        %v1301 = vrot.slane %v1300, 4
        %v1302 = vrot.slane %v214, 5
        %v1303 = vsel %vm1221, %v1301, %v1302
        %v1304 = vrot.slane %v1302, 4
        %v1305 = vrot.slane %v215, 5
        %v1306 = vsel %vm1221, %v1304, %v1305
        %v1307 = vrot.slane %v1305, 4
        %v1308 = vrot.slane %v216, 5
        %v1309 = vsel %vm1221, %v1307, %v1308
        %v1310 = vrot.slane %v1308, 4
        %v1311 = vrot.slane %v243, 5
        %v1312 = vsel %vm1221, %v1310, %v1311
        %v1313 = vrot.slane %v1202, 5
        %v1314 = vrot.slane %v1313, 4
        %v1315 = vrot.slane %v218, 5
        %v1316 = vsel %vm1221, %v1314, %v1315
        %v1317 = vrot.slane %v1315, 4
        %v1318 = vrot.slane %v219, 5
        %v1319 = vsel %vm1221, %v1317, %v1318
        %v1320 = vrot.slane %v1318, 4
        %v1321 = vrot.slane %v220, 5
        %v1322 = vsel %vm1221, %v1320, %v1321
        %v1323 = vrot.slane %v1321, 4
        %v1324 = vrot.slane %v244, 5
        %v1325 = vsel %vm1221, %v1323, %v1324
        %s1326 = scalar_lea.vmem %s1, 128
        %v1327 = vld [vmem:[%s1326] sm:$0xf]
        %v1328 = vld [vmem:[%s1326 + $0x4] sm:$0xf]
        %v1329 = vld [vmem:[%s1326 + $0x8] sm:$0xf]
        %v1330 = vld [vmem:[%s1326 + $0xc] sm:$0xf]
        %v1331 = vld [vmem:[%s1326 + $0x10] sm:$0xf]
        %v1332 = vld [vmem:[%s1326 + $0x14] sm:$0xf]
        %v1333 = vld [vmem:[%s1326 + $0x18] sm:$0xf]
        %v1334 = vld [vmem:[%s1326 + $0x1c] sm:$0xf]
        %v1335 = vld [vmem:[%s1326 + $0x20] sm:$0xf]
        %v1336 = vld [vmem:[%s1326 + $0x24] sm:$0xf]
        %v1337 = vld [vmem:[%s1326 + $0x28] sm:$0xf]
        %v1338 = vld [vmem:[%s1326 + $0x2c] sm:$0xf]
        %v1339 = vld [vmem:[%s1326 + $0x30] sm:$0xf]
        %v1340 = vld [vmem:[%s1326 + $0x34] sm:$0xf]
        %v1341 = vld [vmem:[%s1326 + $0x38] sm:$0xf]
        %v1342 = vld [vmem:[%s1326 + $0x3c] sm:$0xf]
        %v1343 = vunpack.c.l.b16 %v1225
        %v1344 = vunpack.c.l.b16 %v1228
        %v1345 = vunpack.c.l.b16 %v1231
        %v1346 = vunpack.c.l.b16 %v1234
        %v1347 = vunpack.c.l.b16 %v1238
        %v1348 = vunpack.c.l.b16 %v1241
        %v1349 = vunpack.c.l.b16 %v1244
        %v1350 = vunpack.c.l.b16 %v1247
        %v1351 = vunpack.c.l.b16 %v1251
        %v1352 = vunpack.c.l.b16 %v1254
        %v1353 = vunpack.c.l.b16 %v1257
        %v1354 = vunpack.c.l.b16 %v1260
        %v1355 = vunpack.c.l.b16 %v1264
        %v1356 = vunpack.c.l.b16 %v1267
        %v1357 = vunpack.c.l.b16 %v1270
        %v1358 = vunpack.c.l.b16 %v1273
        %v1359 = vunpack.c.l.b16 %v1277
        %v1360 = vunpack.c.l.b16 %v1280
        %v1361 = vunpack.c.l.b16 %v1283
        %v1362 = vunpack.c.l.b16 %v1286
        %v1363 = vunpack.c.l.b16 %v1290
        %v1364 = vunpack.c.l.b16 %v1293
        %v1365 = vunpack.c.l.b16 %v1296
        %v1366 = vunpack.c.l.b16 %v1299
        %v1367 = vunpack.c.l.b16 %v1303
        %v1368 = vunpack.c.l.b16 %v1306
        %v1369 = vunpack.c.l.b16 %v1309
        %v1370 = vunpack.c.l.b16 %v1312
        %v1371 = vunpack.c.l.b16 %v1316
        %v1372 = vunpack.c.l.b16 %v1319
        %v1373 = vunpack.c.l.b16 %v1322
        %v1374 = vunpack.c.l.b16 %v1325
        %v1375 = vpack.c.b16 %v1344, %v1343
        %v1376 = vpack.c.b16 %v1346, %v1345
        %v1377 = vpack.c.b16 %v1348, %v1347
        %v1378 = vpack.c.b16 %v1350, %v1349
        %v1379 = vpack.c.b16 %v1352, %v1351
        %v1380 = vpack.c.b16 %v1354, %v1353
        %v1381 = vpack.c.b16 %v1356, %v1355
        %v1382 = vpack.c.b16 %v1358, %v1357
        %v1383 = vpack.c.b16 %v1360, %v1359
        %v1384 = vpack.c.b16 %v1362, %v1361
        %v1385 = vpack.c.b16 %v1364, %v1363
        %v1386 = vpack.c.b16 %v1366, %v1365
        %v1387 = vpack.c.b16 %v1368, %v1367
        %v1388 = vpack.c.b16 %v1370, %v1369
        %v1389 = vpack.c.b16 %v1372, %v1371
        %v1390 = vpack.c.b16 %v1374, %v1373
        %v1423 = vunpack.c.l.b16 %v1327
        %v1424 = vunpack.c.l.b16 %v1328
        %v1425 = vunpack.c.l.b16 %v1329
        %v1426 = vunpack.c.l.b16 %v1330
        %v1427 = vunpack.c.l.b16 %v1331
        %v1428 = vunpack.c.l.b16 %v1332
        %v1429 = vunpack.c.l.b16 %v1333
        %v1430 = vunpack.c.l.b16 %v1334
        %v1431 = vunpack.c.l.b16 %v1335
        %v1432 = vunpack.c.l.b16 %v1336
        %v1433 = vunpack.c.l.b16 %v1337
        %v1434 = vunpack.c.l.b16 %v1338
        %v1435 = vunpack.c.l.b16 %v1339
        %v1436 = vunpack.c.l.b16 %v1340
        %v1437 = vunpack.c.l.b16 %v1341
        %v1438 = vunpack.c.l.b16 %v1342
        %v1439 = vpack.c.b16 %v1424, %v1423
        %v1440 = vpack.c.b16 %v1426, %v1425
        %v1441 = vpack.c.b16 %v1428, %v1427
        %v1442 = vpack.c.b16 %v1430, %v1429
        %v1443 = vpack.c.b16 %v1432, %v1431
        %v1444 = vpack.c.b16 %v1434, %v1433
        %v1445 = vpack.c.b16 %v1436, %v1435
        %v1446 = vpack.c.b16 %v1438, %v1437
        %1455 = vmatprep.subr.bf16.mxu0 0
        %1456 = vmatpush1.bf16.msra.mxu0 %v1439
        %1457 = vmatprep.subr.bf16.mxu0 0
        %1458 = vmatpush1.bf16.msra.mxu0 %v1440
        %1459 = vmatprep.subr.bf16.mxu0 0
        %1460 = vmatpush1.bf16.msra.mxu0 %v1441
        %1461 = vmatprep.subr.bf16.mxu0 0
        %1462 = vmatpush1.bf16.msra.mxu0 %v1442
        %1463 = vmatprep.subr.bf16.mxu0 0
        %1464 = vmatpush1.bf16.msra.mxu0 %v1443
        %1465 = vmatprep.subr.bf16.mxu0 0
        %1466 = vmatpush1.bf16.msra.mxu0 %v1444
        %1467 = vmatprep.subr.bf16.mxu0 0
        %1468 = vmatpush1.bf16.msra.mxu0 %v1445
        %1469 = vmatprep.subr.bf16.mxu0 0
        %1470 = vmatpush1.bf16.msra.mxu0 %v1446
        %1471 = vmatprep.subr.bf16.mxu0 0
        %1472 = vmatpush1.bf16.msra.mxu0 0
        %1473 = vmatprep.subr.bf16.mxu0 0
        %1474 = vmatpush1.bf16.msra.mxu0 0
        %1475 = vmatprep.subr.bf16.mxu0 0
        %1476 = vmatpush1.bf16.msra.mxu0 0
        %1477 = vmatprep.subr.bf16.mxu0 0
        %1478 = vmatpush1.bf16.msra.mxu0 0
        %1479 = vmatprep.subr.bf16.mxu0 0
        %1480 = vmatpush1.bf16.msra.mxu0 0
        %1481 = vmatprep.subr.bf16.mxu0 0
        %1482 = vmatpush1.bf16.msra.mxu0 0
        %1483 = vmatprep.subr.bf16.mxu0 0
        %1484 = vmatpush1.bf16.msra.mxu0 0
        %1485 = vmatprep.subr.bf16.mxu0 0
        %1486 = vmatpush1.bf16.msra.mxu0 0
        %1487 = vmatprep.mubr.bf16.mxu0 0
        %1488 = vmatmul.mubr.bf16.gmra.mrb[0].mxu0 %v1375
        %v1489 = vpop.f32.mrb[0].mxu0
        %v1490 = vadd.f32 0.0, %v1489
        %v1491 = vpop.f32.mrb[0].mxu0
        %v1492 = vpop.f32.mrb[0].mxu0
        %v1493 = vadd.f32 0.0, %v1492
        %v1494 = vpop.f32.mrb[0].mxu0
        %1495 = vmatprep.mubr.bf16.mxu0 0
        %1496 = vmatmul.mubr.bf16.gmra.mrb[0].mxu0 %v1376
        %v1497 = vpop.f32.mrb[0].mxu0
        %v1498 = vadd.f32 0.0, %v1497
        %v1499 = vpop.f32.mrb[0].mxu0
        %v1500 = vpop.f32.mrb[0].mxu0
        %v1501 = vadd.f32 0.0, %v1500
        %v1502 = vpop.f32.mrb[0].mxu0
        %1503 = vmatprep.mubr.bf16.mxu0 0
        %1504 = vmatmul.mubr.bf16.gmra.mrb[0].mxu0 %v1377
        %v1505 = vpop.f32.mrb[0].mxu0
        %v1506 = vadd.f32 0.0, %v1505
        %v1507 = vpop.f32.mrb[0].mxu0
        %v1508 = vpop.f32.mrb[0].mxu0
        %v1509 = vadd.f32 0.0, %v1508
        %v1510 = vpop.f32.mrb[0].mxu0
        %1511 = vmatprep.mubr.bf16.mxu0 0
        %1512 = vmatmul.mubr.bf16.gmra.mrb[0].mxu0 %v1378
        %v1513 = vpop.f32.mrb[0].mxu0
        %v1514 = vadd.f32 0.0, %v1513
        %v1515 = vpop.f32.mrb[0].mxu0
        %v1516 = vpop.f32.mrb[0].mxu0
        %v1517 = vadd.f32 0.0, %v1516
        %v1518 = vpop.f32.mrb[0].mxu0
        %1519 = vmatprep.mubr.bf16.mxu0 0
        %1520 = vmatmul.mubr.bf16.gmra.mrb[0].mxu0 %v1379
        %v1521 = vpop.f32.mrb[0].mxu0
        %v1522 = vadd.f32 0.0, %v1521
        %v1523 = vpop.f32.mrb[0].mxu0
        %v1524 = vpop.f32.mrb[0].mxu0
        %v1525 = vadd.f32 0.0, %v1524
        %v1526 = vpop.f32.mrb[0].mxu0
        %1527 = vmatprep.mubr.bf16.mxu0 0
        %1528 = vmatmul.mubr.bf16.gmra.mrb[0].mxu0 %v1380
        %v1529 = vpop.f32.mrb[0].mxu0
        %v1530 = vadd.f32 0.0, %v1529
        %v1531 = vpop.f32.mrb[0].mxu0
        %v1532 = vpop.f32.mrb[0].mxu0
        %v1533 = vadd.f32 0.0, %v1532
        %v1534 = vpop.f32.mrb[0].mxu0
        %1535 = vmatprep.mubr.bf16.mxu0 0
        %1536 = vmatmul.mubr.bf16.gmra.mrb[0].mxu0 %v1381
        %v1537 = vpop.f32.mrb[0].mxu0
        %v1538 = vadd.f32 0.0, %v1537
        %v1539 = vpop.f32.mrb[0].mxu0
        %v1540 = vpop.f32.mrb[0].mxu0
        %v1541 = vadd.f32 0.0, %v1540
        %v1542 = vpop.f32.mrb[0].mxu0
        %1543 = vmatprep.mubr.bf16.mxu0 0
        %1544 = vmatmul.mubr.bf16.gmra.mrb[0].mxu0 %v1382
        %v1545 = vpop.f32.mrb[0].mxu0
        %v1546 = vadd.f32 0.0, %v1545
        %v1547 = vpop.f32.mrb[0].mxu0
        %v1548 = vpop.f32.mrb[0].mxu0
        %v1549 = vadd.f32 0.0, %v1548
        %v1550 = vpop.f32.mrb[0].mxu0
        %1551 = vmatprep.mubr.bf16.mxu0 0
        %1552 = vmatmul.mubr.bf16.gmra.mrb[0].mxu0 %v1383
        %v1553 = vpop.f32.mrb[0].mxu0
        %v1554 = vadd.f32 0.0, %v1553
        %v1555 = vpop.f32.mrb[0].mxu0
        %v1556 = vpop.f32.mrb[0].mxu0
        %v1557 = vadd.f32 0.0, %v1556
        %v1558 = vpop.f32.mrb[0].mxu0
        %1559 = vmatprep.mubr.bf16.mxu0 0
        %1560 = vmatmul.mubr.bf16.gmra.mrb[0].mxu0 %v1384
        %v1561 = vpop.f32.mrb[0].mxu0
        %v1562 = vadd.f32 0.0, %v1561
        %v1563 = vpop.f32.mrb[0].mxu0
        %v1564 = vpop.f32.mrb[0].mxu0
        %v1565 = vadd.f32 0.0, %v1564
        %v1566 = vpop.f32.mrb[0].mxu0
        %1567 = vmatprep.mubr.bf16.mxu0 0
        %1568 = vmatmul.mubr.bf16.gmra.mrb[0].mxu0 %v1385
        %v1569 = vpop.f32.mrb[0].mxu0
        %v1570 = vadd.f32 0.0, %v1569
        %v1571 = vpop.f32.mrb[0].mxu0
        %v1572 = vpop.f32.mrb[0].mxu0
        %v1573 = vadd.f32 0.0, %v1572
        %v1574 = vpop.f32.mrb[0].mxu0
        %1575 = vmatprep.mubr.bf16.mxu0 0
        %1576 = vmatmul.mubr.bf16.gmra.mrb[0].mxu0 %v1386
        %v1577 = vpop.f32.mrb[0].mxu0
        %v1578 = vadd.f32 0.0, %v1577
        %v1579 = vpop.f32.mrb[0].mxu0
        %v1580 = vpop.f32.mrb[0].mxu0
        %v1581 = vadd.f32 0.0, %v1580
        %v1582 = vpop.f32.mrb[0].mxu0
        %1583 = vmatprep.mubr.bf16.mxu0 0
        %1584 = vmatmul.mubr.bf16.gmra.mrb[0].mxu0 %v1387
        %v1585 = vpop.f32.mrb[0].mxu0
        %v1586 = vadd.f32 0.0, %v1585
        %v1587 = vpop.f32.mrb[0].mxu0
        %v1588 = vpop.f32.mrb[0].mxu0
        %v1589 = vadd.f32 0.0, %v1588
        %v1590 = vpop.f32.mrb[0].mxu0
        %1591 = vmatprep.mubr.bf16.mxu0 0
        %1592 = vmatmul.mubr.bf16.gmra.mrb[0].mxu0 %v1388
        %v1593 = vpop.f32.mrb[0].mxu0
        %v1594 = vadd.f32 0.0, %v1593
        %v1595 = vpop.f32.mrb[0].mxu0
        %v1596 = vpop.f32.mrb[0].mxu0
        %v1597 = vadd.f32 0.0, %v1596
        %v1598 = vpop.f32.mrb[0].mxu0
        %1599 = vmatprep.mubr.bf16.mxu0 0
        %1600 = vmatmul.mubr.bf16.gmra.mrb[0].mxu0 %v1389
        %v1601 = vpop.f32.mrb[0].mxu0
        %v1602 = vadd.f32 0.0, %v1601
        %v1603 = vpop.f32.mrb[0].mxu0
        %v1604 = vpop.f32.mrb[0].mxu0
        %v1605 = vadd.f32 0.0, %v1604
        %v1606 = vpop.f32.mrb[0].mxu0
        %1607 = vmatprep.mubr.bf16.mxu0 0
        %1608 = vmatmul.mubr.bf16.gmra.mrb[0].mxu0 %v1390
        %v1609 = vpop.f32.mrb[0].mxu0
        %v1610 = vadd.f32 0.0, %v1609
        %v1611 = vpop.f32.mrb[0].mxu0
        %v1612 = vpop.f32.mrb[0].mxu0
        %v1613 = vadd.f32 0.0, %v1612
        %v1614 = vpop.f32.mrb[0].mxu0
        %1615 = vdwg.mxu0
        %v1616 = vadd.f32 %v1069, %v1490
        %v1617 = vadd.f32 %v1072, %v1493
        %v1618 = vadd.f32 %v1077, %v1498
        %v1619 = vadd.f32 %v1080, %v1501
        %v1620 = vadd.f32 %v1085, %v1506
        %v1621 = vadd.f32 %v1088, %v1509
        %v1622 = vadd.f32 %v1093, %v1514
        %v1623 = vadd.f32 %v1096, %v1517
        %v1624 = vadd.f32 %v1101, %v1522
        %v1625 = vadd.f32 %v1104, %v1525
        %v1626 = vadd.f32 %v1109, %v1530
        %v1627 = vadd.f32 %v1112, %v1533
        %v1628 = vadd.f32 %v1117, %v1538
        %v1629 = vadd.f32 %v1120, %v1541
        %v1630 = vadd.f32 %v1125, %v1546
        %v1631 = vadd.f32 %v1128, %v1549
        %v1632 = vadd.f32 %v1133, %v1554
        %v1633 = vadd.f32 %v1136, %v1557
        %v1634 = vadd.f32 %v1141, %v1562
        %v1635 = vadd.f32 %v1144, %v1565
        %v1636 = vadd.f32 %v1149, %v1570
        %v1637 = vadd.f32 %v1152, %v1573
        %v1638 = vadd.f32 %v1157, %v1578
        %v1639 = vadd.f32 %v1160, %v1581
        %v1640 = vadd.f32 %v1165, %v1586
        %v1641 = vadd.f32 %v1168, %v1589
        %v1642 = vadd.f32 %v1173, %v1594
        %v1643 = vadd.f32 %v1176, %v1597
        %v1644 = vadd.f32 %v1181, %v1602
        %v1645 = vadd.f32 %v1184, %v1605
        %v1646 = vadd.f32 %v1189, %v1610
        %v1647 = vadd.f32 %v1192, %v1613
        %s1648 = sadd.s32 %s185, 1
        %s1649 = smul.u32 %s1648, 5
        %s1650 = smul.addr %s1649, 4
        %s1651 = scalar_lea.vmem %s182, %s1650
        %v1652 = vld [vmem:[%s1651] sm:$0xf]
        %v1653 = vld [vmem:[%s1651 + $0x4] sm:$0xf]
        %v1654 = vld [vmem:[%s1651 + $0x8] sm:$0xf]
        %v1655 = vld [vmem:[%s1651 + $0xc] sm:$0xf]
        %v1656 = vld [vmem:[%s1651 + $0x14] sm:$0xf]
        %v1657 = vld [vmem:[%s1651 + $0x18] sm:$0xf]
        %v1658 = vld [vmem:[%s1651 + $0x1c] sm:$0xf]
        %v1659 = vld [vmem:[%s1651 + $0x20] sm:$0xf]
        %v1660 = vld [vmem:[%s1651 + $0x28] sm:$0xf]
        %v1661 = vld [vmem:[%s1651 + $0x2c] sm:$0xf]
        %v1662 = vld [vmem:[%s1651 + $0x30] sm:$0xf]
        %v1663 = vld [vmem:[%s1651 + $0x34] sm:$0xf]
        %v1664 = vld [vmem:[%s1651 + $0x3c] sm:$0xf]
        %v1665 = vld [vmem:[%s1651 + $0x40] sm:$0xf]
        %v1666 = vld [vmem:[%s1651 + $0x44] sm:$0xf]
        %v1667 = vld [vmem:[%s1651 + $0x48] sm:$0xf]
        %v1668 = vld [vmem:[%s1651 + $0x50] sm:$0xf]
        %v1669 = vld [vmem:[%s1651 + $0x54] sm:$0xf]
        %v1670 = vld [vmem:[%s1651 + $0x58] sm:$0xf]
        %v1671 = vld [vmem:[%s1651 + $0x5c] sm:$0xf]
        %v1672 = vld [vmem:[%s1651 + $0x64] sm:$0xf]
        %v1673 = vld [vmem:[%s1651 + $0x68] sm:$0xf]
        %v1674 = vld [vmem:[%s1651 + $0x6c] sm:$0xf]
        %v1675 = vld [vmem:[%s1651 + $0x70] sm:$0xf]
        %v1676 = vld [vmem:[%s1651 + $0x78] sm:$0xf]
        %v1677 = vld [vmem:[%s1651 + $0x7c] sm:$0xf]
        %v1678 = vld [vmem:[%s1651 + $0x80] sm:$0xf]
        %v1679 = vld [vmem:[%s1651 + $0x84] sm:$0xf]
        %v1680 = vld [vmem:[%s1651 + $0x8c] sm:$0xf]
        %v1681 = vld [vmem:[%s1651 + $0x90] sm:$0xf]
        %v1682 = vld [vmem:[%s1651 + $0x94] sm:$0xf]
        %v1683 = vld [vmem:[%s1651 + $0x98] sm:$0xf]
        %s1684 = scalar_lea.vmem %s1, 192
        %v1685 = vld [vmem:[%s1684] sm:$0xf]
        %v1686 = vld [vmem:[%s1684 + $0x4] sm:$0xf]
        %v1687 = vld [vmem:[%s1684 + $0x8] sm:$0xf]
        %v1688 = vld [vmem:[%s1684 + $0xc] sm:$0xf]
        %v1689 = vld [vmem:[%s1684 + $0x10] sm:$0xf]
        %v1690 = vld [vmem:[%s1684 + $0x14] sm:$0xf]
        %v1691 = vld [vmem:[%s1684 + $0x18] sm:$0xf]
        %v1692 = vld [vmem:[%s1684 + $0x1c] sm:$0xf]
        %v1693 = vld [vmem:[%s1684 + $0x20] sm:$0xf]
        %v1694 = vld [vmem:[%s1684 + $0x24] sm:$0xf]
        %v1695 = vld [vmem:[%s1684 + $0x28] sm:$0xf]
        %v1696 = vld [vmem:[%s1684 + $0x2c] sm:$0xf]
        %v1697 = vld [vmem:[%s1684 + $0x30] sm:$0xf]
        %v1698 = vld [vmem:[%s1684 + $0x34] sm:$0xf]
        %v1699 = vld [vmem:[%s1684 + $0x38] sm:$0xf]
        %v1700 = vld [vmem:[%s1684 + $0x3c] sm:$0xf]
        %v1733 = vunpack.c.l.b16 %v1652
        %v1734 = vunpack.c.l.b16 %v1653
        %v1735 = vunpack.c.l.b16 %v1654
        %v1736 = vunpack.c.l.b16 %v1655
        %v1737 = vunpack.c.l.b16 %v1656
        %v1738 = vunpack.c.l.b16 %v1657
        %v1739 = vunpack.c.l.b16 %v1658
        %v1740 = vunpack.c.l.b16 %v1659
        %v1741 = vunpack.c.l.b16 %v1660
        %v1742 = vunpack.c.l.b16 %v1661
        %v1743 = vunpack.c.l.b16 %v1662
        %v1744 = vunpack.c.l.b16 %v1663
        %v1745 = vunpack.c.l.b16 %v1664
        %v1746 = vunpack.c.l.b16 %v1665
        %v1747 = vunpack.c.l.b16 %v1666
        %v1748 = vunpack.c.l.b16 %v1667
        %v1749 = vunpack.c.l.b16 %v1668
        %v1750 = vunpack.c.l.b16 %v1669
        %v1751 = vunpack.c.l.b16 %v1670
        %v1752 = vunpack.c.l.b16 %v1671
        %v1753 = vunpack.c.l.b16 %v1672
        %v1754 = vunpack.c.l.b16 %v1673
        %v1755 = vunpack.c.l.b16 %v1674
        %v1756 = vunpack.c.l.b16 %v1675
        %v1757 = vunpack.c.l.b16 %v1676
        %v1758 = vunpack.c.l.b16 %v1677
        %v1759 = vunpack.c.l.b16 %v1678
        %v1760 = vunpack.c.l.b16 %v1679
        %v1761 = vunpack.c.l.b16 %v1680
        %v1762 = vunpack.c.l.b16 %v1681
        %v1763 = vunpack.c.l.b16 %v1682
        %v1764 = vunpack.c.l.b16 %v1683
        %v1765 = vpack.c.b16 %v1734, %v1733
        %v1766 = vpack.c.b16 %v1736, %v1735
        %v1767 = vpack.c.b16 %v1738, %v1737
        %v1768 = vpack.c.b16 %v1740, %v1739
        %v1769 = vpack.c.b16 %v1742, %v1741
        %v1770 = vpack.c.b16 %v1744, %v1743
        %v1771 = vpack.c.b16 %v1746, %v1745
        %v1772 = vpack.c.b16 %v1748, %v1747
        %v1773 = vpack.c.b16 %v1750, %v1749
        %v1774 = vpack.c.b16 %v1752, %v1751
        %v1775 = vpack.c.b16 %v1754, %v1753
        %v1776 = vpack.c.b16 %v1756, %v1755
        %v1777 = vpack.c.b16 %v1758, %v1757
        %v1778 = vpack.c.b16 %v1760, %v1759
        %v1779 = vpack.c.b16 %v1762, %v1761
        %v1780 = vpack.c.b16 %v1764, %v1763
        %v1813 = vunpack.c.l.b16 %v1685
        %v1814 = vunpack.c.l.b16 %v1686
        %v1815 = vunpack.c.l.b16 %v1687
        %v1816 = vunpack.c.l.b16 %v1688
        %v1817 = vunpack.c.l.b16 %v1689
        %v1818 = vunpack.c.l.b16 %v1690
        %v1819 = vunpack.c.l.b16 %v1691
        %v1820 = vunpack.c.l.b16 %v1692
        %v1821 = vunpack.c.l.b16 %v1693
        %v1822 = vunpack.c.l.b16 %v1694
        %v1823 = vunpack.c.l.b16 %v1695
        %v1824 = vunpack.c.l.b16 %v1696
        %v1825 = vunpack.c.l.b16 %v1697
        %v1826 = vunpack.c.l.b16 %v1698
        %v1827 = vunpack.c.l.b16 %v1699
        %v1828 = vunpack.c.l.b16 %v1700
        %v1829 = vpack.c.b16 %v1814, %v1813
        %v1830 = vpack.c.b16 %v1816, %v1815
        %v1831 = vpack.c.b16 %v1818, %v1817
        %v1832 = vpack.c.b16 %v1820, %v1819
        %v1833 = vpack.c.b16 %v1822, %v1821
        %v1834 = vpack.c.b16 %v1824, %v1823
        %v1835 = vpack.c.b16 %v1826, %v1825
        %v1836 = vpack.c.b16 %v1828, %v1827
        %1845 = vmatprep.subr.bf16.mxu0 0
        %1846 = vmatpush1.bf16.msra.mxu0 %v1829
        %1847 = vmatprep.subr.bf16.mxu0 0
        %1848 = vmatpush1.bf16.msra.mxu0 %v1830
        %1849 = vmatprep.subr.bf16.mxu0 0
        %1850 = vmatpush1.bf16.msra.mxu0 %v1831
        %1851 = vmatprep.subr.bf16.mxu0 0
        %1852 = vmatpush1.bf16.msra.mxu0 %v1832
        %1853 = vmatprep.subr.bf16.mxu0 0
        %1854 = vmatpush1.bf16.msra.mxu0 %v1833
        %1855 = vmatprep.subr.bf16.mxu0 0
        %1856 = vmatpush1.bf16.msra.mxu0 %v1834
        %1857 = vmatprep.subr.bf16.mxu0 0
        %1858 = vmatpush1.bf16.msra.mxu0 %v1835
        %1859 = vmatprep.subr.bf16.mxu0 0
        %1860 = vmatpush1.bf16.msra.mxu0 %v1836
        %1861 = vmatprep.subr.bf16.mxu0 0
        %1862 = vmatpush1.bf16.msra.mxu0 0
        %1863 = vmatprep.subr.bf16.mxu0 0
        %1864 = vmatpush1.bf16.msra.mxu0 0
        %1865 = vmatprep.subr.bf16.mxu0 0
        %1866 = vmatpush1.bf16.msra.mxu0 0
        %1867 = vmatprep.subr.bf16.mxu0 0
        %1868 = vmatpush1.bf16.msra.mxu0 0
        %1869 = vmatprep.subr.bf16.mxu0 0
        %1870 = vmatpush1.bf16.msra.mxu0 0
        %1871 = vmatprep.subr.bf16.mxu0 0
        %1872 = vmatpush1.bf16.msra.mxu0 0
        %1873 = vmatprep.subr.bf16.mxu0 0
        %1874 = vmatpush1.bf16.msra.mxu0 0
        %1875 = vmatprep.subr.bf16.mxu0 0
        %1876 = vmatpush1.bf16.msra.mxu0 0
        %1877 = vmatprep.mubr.bf16.mxu0 0
        %1878 = vmatmul.mubr.bf16.gmra.mrb[0].mxu0 %v1765
        %v1879 = vpop.f32.mrb[0].mxu0
        %v1880 = vadd.f32 0.0, %v1879
        %v1881 = vpop.f32.mrb[0].mxu0
        %v1882 = vpop.f32.mrb[0].mxu0
        %v1883 = vadd.f32 0.0, %v1882
        %v1884 = vpop.f32.mrb[0].mxu0
        %1885 = vmatprep.mubr.bf16.mxu0 0
        %1886 = vmatmul.mubr.bf16.gmra.mrb[0].mxu0 %v1766
        %v1887 = vpop.f32.mrb[0].mxu0
        %v1888 = vadd.f32 0.0, %v1887
        %v1889 = vpop.f32.mrb[0].mxu0
        %v1890 = vpop.f32.mrb[0].mxu0
        %v1891 = vadd.f32 0.0, %v1890
        %v1892 = vpop.f32.mrb[0].mxu0
        %1893 = vmatprep.mubr.bf16.mxu0 0
        %1894 = vmatmul.mubr.bf16.gmra.mrb[0].mxu0 %v1767
        %v1895 = vpop.f32.mrb[0].mxu0
        %v1896 = vadd.f32 0.0, %v1895
        %v1897 = vpop.f32.mrb[0].mxu0
        %v1898 = vpop.f32.mrb[0].mxu0
        %v1899 = vadd.f32 0.0, %v1898
        %v1900 = vpop.f32.mrb[0].mxu0
        %1901 = vmatprep.mubr.bf16.mxu0 0
        %1902 = vmatmul.mubr.bf16.gmra.mrb[0].mxu0 %v1768
        %v1903 = vpop.f32.mrb[0].mxu0
        %v1904 = vadd.f32 0.0, %v1903
        %v1905 = vpop.f32.mrb[0].mxu0
        %v1906 = vpop.f32.mrb[0].mxu0
        %v1907 = vadd.f32 0.0, %v1906
        %v1908 = vpop.f32.mrb[0].mxu0
        %1909 = vmatprep.mubr.bf16.mxu0 0
        %1910 = vmatmul.mubr.bf16.gmra.mrb[0].mxu0 %v1769
        %v1911 = vpop.f32.mrb[0].mxu0
        %v1912 = vadd.f32 0.0, %v1911
        %v1913 = vpop.f32.mrb[0].mxu0
        %v1914 = vpop.f32.mrb[0].mxu0
        %v1915 = vadd.f32 0.0, %v1914
        %v1916 = vpop.f32.mrb[0].mxu0
        %1917 = vmatprep.mubr.bf16.mxu0 0
        %1918 = vmatmul.mubr.bf16.gmra.mrb[0].mxu0 %v1770
        %v1919 = vpop.f32.mrb[0].mxu0
        %v1920 = vadd.f32 0.0, %v1919
        %v1921 = vpop.f32.mrb[0].mxu0
        %v1922 = vpop.f32.mrb[0].mxu0
        %v1923 = vadd.f32 0.0, %v1922
        %v1924 = vpop.f32.mrb[0].mxu0
        %1925 = vmatprep.mubr.bf16.mxu0 0
        %1926 = vmatmul.mubr.bf16.gmra.mrb[0].mxu0 %v1771
        %v1927 = vpop.f32.mrb[0].mxu0
        %v1928 = vadd.f32 0.0, %v1927
        %v1929 = vpop.f32.mrb[0].mxu0
        %v1930 = vpop.f32.mrb[0].mxu0
        %v1931 = vadd.f32 0.0, %v1930
        %v1932 = vpop.f32.mrb[0].mxu0
        %1933 = vmatprep.mubr.bf16.mxu0 0
        %1934 = vmatmul.mubr.bf16.gmra.mrb[0].mxu0 %v1772
        %v1935 = vpop.f32.mrb[0].mxu0
        %v1936 = vadd.f32 0.0, %v1935
        %v1937 = vpop.f32.mrb[0].mxu0
        %v1938 = vpop.f32.mrb[0].mxu0
        %v1939 = vadd.f32 0.0, %v1938
        %v1940 = vpop.f32.mrb[0].mxu0
        %1941 = vmatprep.mubr.bf16.mxu0 0
        %1942 = vmatmul.mubr.bf16.gmra.mrb[0].mxu0 %v1773
        %v1943 = vpop.f32.mrb[0].mxu0
        %v1944 = vadd.f32 0.0, %v1943
        %v1945 = vpop.f32.mrb[0].mxu0
        %v1946 = vpop.f32.mrb[0].mxu0
        %v1947 = vadd.f32 0.0, %v1946
        %v1948 = vpop.f32.mrb[0].mxu0
        %1949 = vmatprep.mubr.bf16.mxu0 0
        %1950 = vmatmul.mubr.bf16.gmra.mrb[0].mxu0 %v1774
        %v1951 = vpop.f32.mrb[0].mxu0
        %v1952 = vadd.f32 0.0, %v1951
        %v1953 = vpop.f32.mrb[0].mxu0
        %v1954 = vpop.f32.mrb[0].mxu0
        %v1955 = vadd.f32 0.0, %v1954
        %v1956 = vpop.f32.mrb[0].mxu0
        %1957 = vmatprep.mubr.bf16.mxu0 0
        %1958 = vmatmul.mubr.bf16.gmra.mrb[0].mxu0 %v1775
        %v1959 = vpop.f32.mrb[0].mxu0
        %v1960 = vadd.f32 0.0, %v1959
        %v1961 = vpop.f32.mrb[0].mxu0
        %v1962 = vpop.f32.mrb[0].mxu0
        %v1963 = vadd.f32 0.0, %v1962
        %v1964 = vpop.f32.mrb[0].mxu0
        %1965 = vmatprep.mubr.bf16.mxu0 0
        %1966 = vmatmul.mubr.bf16.gmra.mrb[0].mxu0 %v1776
        %v1967 = vpop.f32.mrb[0].mxu0
        %v1968 = vadd.f32 0.0, %v1967
        %v1969 = vpop.f32.mrb[0].mxu0
        %v1970 = vpop.f32.mrb[0].mxu0
        %v1971 = vadd.f32 0.0, %v1970
        %v1972 = vpop.f32.mrb[0].mxu0
        %1973 = vmatprep.mubr.bf16.mxu0 0
        %1974 = vmatmul.mubr.bf16.gmra.mrb[0].mxu0 %v1777
        %v1975 = vpop.f32.mrb[0].mxu0
        %v1976 = vadd.f32 0.0, %v1975
        %v1977 = vpop.f32.mrb[0].mxu0
        %v1978 = vpop.f32.mrb[0].mxu0
        %v1979 = vadd.f32 0.0, %v1978
        %v1980 = vpop.f32.mrb[0].mxu0
        %1981 = vmatprep.mubr.bf16.mxu0 0
        %1982 = vmatmul.mubr.bf16.gmra.mrb[0].mxu0 %v1778
        %v1983 = vpop.f32.mrb[0].mxu0
        %v1984 = vadd.f32 0.0, %v1983
        %v1985 = vpop.f32.mrb[0].mxu0
        %v1986 = vpop.f32.mrb[0].mxu0
        %v1987 = vadd.f32 0.0, %v1986
        %v1988 = vpop.f32.mrb[0].mxu0
        %1989 = vmatprep.mubr.bf16.mxu0 0
        %1990 = vmatmul.mubr.bf16.gmra.mrb[0].mxu0 %v1779
        %v1991 = vpop.f32.mrb[0].mxu0
        %v1992 = vadd.f32 0.0, %v1991
        %v1993 = vpop.f32.mrb[0].mxu0
        %v1994 = vpop.f32.mrb[0].mxu0
        %v1995 = vadd.f32 0.0, %v1994
        %v1996 = vpop.f32.mrb[0].mxu0
        %1997 = vmatprep.mubr.bf16.mxu0 0
        %1998 = vmatmul.mubr.bf16.gmra.mrb[0].mxu0 %v1780
        %v1999 = vpop.f32.mrb[0].mxu0
        %v2000 = vadd.f32 0.0, %v1999
        %v2001 = vpop.f32.mrb[0].mxu0
        %v2002 = vpop.f32.mrb[0].mxu0
        %v2003 = vadd.f32 0.0, %v2002
        %v2004 = vpop.f32.mrb[0].mxu0
        %2005 = vdwg.mxu0
        %v2006 = vadd.f32 %v1616, %v1880
        %v2007 = vadd.f32 %v1617, %v1883
        %v2008 = vadd.f32 %v1618, %v1888
        %v2009 = vadd.f32 %v1619, %v1891
        %v2010 = vadd.f32 %v1620, %v1896
        %v2011 = vadd.f32 %v1621, %v1899
        %v2012 = vadd.f32 %v1622, %v1904
        %v2013 = vadd.f32 %v1623, %v1907
        %v2014 = vadd.f32 %v1624, %v1912
        %v2015 = vadd.f32 %v1625, %v1915
        %v2016 = vadd.f32 %v1626, %v1920
        %v2017 = vadd.f32 %v1627, %v1923
        %v2018 = vadd.f32 %v1628, %v1928
        %v2019 = vadd.f32 %v1629, %v1931
        %v2020 = vadd.f32 %v1630, %v1936
        %v2021 = vadd.f32 %v1631, %v1939
        %v2022 = vadd.f32 %v1632, %v1944
        %v2023 = vadd.f32 %v1633, %v1947
        %v2024 = vadd.f32 %v1634, %v1952
        %v2025 = vadd.f32 %v1635, %v1955
        %v2026 = vadd.f32 %v1636, %v1960
        %v2027 = vadd.f32 %v1637, %v1963
        %v2028 = vadd.f32 %v1638, %v1968
        %v2029 = vadd.f32 %v1639, %v1971
        %v2030 = vadd.f32 %v1640, %v1976
        %v2031 = vadd.f32 %v1641, %v1979
        %v2032 = vadd.f32 %v1642, %v1984
        %v2033 = vadd.f32 %v1643, %v1987
        %v2034 = vadd.f32 %v1644, %v1992
        %v2035 = vadd.f32 %v1645, %v1995
        %v2036 = vadd.f32 %v1646, %v2000
        %v2037 = vadd.f32 %v1647, %v2003
        %v2038 = vld [vmem:[%s1651] sm:$0xf]
        %v2039 = vld [vmem:[%s1651 + $0x4] sm:$0xf]
        %v2040 = vld [vmem:[%s1651 + $0x8] sm:$0xf]
        %v2041 = vld [vmem:[%s1651 + $0xc] sm:$0xf]
        %v2042 = vld [vmem:[%s1651 + $0x10] sm:$0x1]
        %v2043 = vld [vmem:[%s1651 + $0x14] sm:$0xf]
        %v2044 = vld [vmem:[%s1651 + $0x18] sm:$0xf]
        %v2045 = vld [vmem:[%s1651 + $0x1c] sm:$0xf]
        %v2046 = vld [vmem:[%s1651 + $0x20] sm:$0xf]
        %v2047 = vld [vmem:[%s1651 + $0x24] sm:$0x1]
        %v2048 = vld [vmem:[%s1651 + $0x28] sm:$0xf]
        %v2049 = vld [vmem:[%s1651 + $0x2c] sm:$0xf]
        %v2050 = vld [vmem:[%s1651 + $0x30] sm:$0xf]
        %v2051 = vld [vmem:[%s1651 + $0x34] sm:$0xf]
        %v2052 = vld [vmem:[%s1651 + $0x38] sm:$0x1]
        %v2053 = vld [vmem:[%s1651 + $0x3c] sm:$0xf]
        %v2054 = vld [vmem:[%s1651 + $0x40] sm:$0xf]
        %v2055 = vld [vmem:[%s1651 + $0x44] sm:$0xf]
        %v2056 = vld [vmem:[%s1651 + $0x48] sm:$0xf]
        %v2057 = vld [vmem:[%s1651 + $0x4c] sm:$0x1]
        %v2058 = vld [vmem:[%s1651 + $0x50] sm:$0xf]
        %v2059 = vld [vmem:[%s1651 + $0x54] sm:$0xf]
        %v2060 = vld [vmem:[%s1651 + $0x58] sm:$0xf]
        %v2061 = vld [vmem:[%s1651 + $0x5c] sm:$0xf]
        %v2062 = vld [vmem:[%s1651 + $0x60] sm:$0x1]
        %v2063 = vld [vmem:[%s1651 + $0x64] sm:$0xf]
        %v2064 = vld [vmem:[%s1651 + $0x68] sm:$0xf]
        %v2065 = vld [vmem:[%s1651 + $0x6c] sm:$0xf]
        %v2066 = vld [vmem:[%s1651 + $0x70] sm:$0xf]
        %v2067 = vld [vmem:[%s1651 + $0x74] sm:$0x1]
        %v2068 = vld [vmem:[%s1651 + $0x78] sm:$0xf]
        %v2069 = vld [vmem:[%s1651 + $0x7c] sm:$0xf]
        %v2070 = vld [vmem:[%s1651 + $0x80] sm:$0xf]
        %v2071 = vld [vmem:[%s1651 + $0x84] sm:$0xf]
        %v2072 = vld [vmem:[%s1651 + $0x88] sm:$0x1]
        %v2073 = vld [vmem:[%s1651 + $0x8c] sm:$0xf]
        %v2074 = vld [vmem:[%s1651 + $0x90] sm:$0xf]
        %v2075 = vld [vmem:[%s1651 + $0x94] sm:$0xf]
        %v2076 = vld [vmem:[%s1651 + $0x98] sm:$0xf]
        %v2077 = vld [vmem:[%s1651 + $0x9c] sm:$0x1]
        %v2079 = vshrl.u32 %v2038, 16
        %v2081 = vrot.slane %v2079, 4
        %v2082 = vshll.u32 %v2038, 16
        %v2084 = vrot.slane %v2082, 5
        %v2085 = vor.u32 %v2081, %v2084
        %v2086 = vrot.slane %v2085, 4
        %v2088 = vshll.u32 %v2039, 16
        %v2090 = vrot.slane %v2088, 5
        %v2091 = vsel %vm247, %v2086, %v2090
        %v2092 = vshrl.u32 %v2039, 16
        %v2094 = vrot.slane %v2092, 4
        %v2095 = vor.u32 %v2094, %v2090
        %v2096 = vrot.slane %v2095, 4
        %v2098 = vshll.u32 %v2040, 16
        %v2100 = vrot.slane %v2098, 5
        %v2101 = vsel %vm247, %v2096, %v2100
        %v2102 = vshrl.u32 %v2040, 16
        %v2104 = vrot.slane %v2102, 4
        %v2105 = vor.u32 %v2104, %v2100
        %v2106 = vrot.slane %v2105, 4
        %v2108 = vshll.u32 %v2041, 16
        %v2110 = vrot.slane %v2108, 5
        %v2111 = vsel %vm247, %v2106, %v2110
        %v2112 = vshrl.u32 %v2041, 16
        %v2114 = vrot.slane %v2112, 4
        %v2115 = vor.u32 %v2114, %v2110
        %v2116 = vrot.slane %v2115, 4
        %v2118 = vshll.u32 %v2042, 16
        %v2120 = vrot.slane %v2118, 5
        %v2121 = vsel %vm247, %v2116, %v2120
        %v2123 = vshrl.u32 %v2043, 16
        %v2125 = vrot.slane %v2123, 4
        %v2126 = vshll.u32 %v2043, 16
        %v2128 = vrot.slane %v2126, 5
        %v2129 = vor.u32 %v2125, %v2128
        %v2130 = vrot.slane %v2129, 4
        %v2132 = vshll.u32 %v2044, 16
        %v2134 = vrot.slane %v2132, 5
        %v2135 = vsel %vm247, %v2130, %v2134
        %v2136 = vshrl.u32 %v2044, 16
        %v2138 = vrot.slane %v2136, 4
        %v2139 = vor.u32 %v2138, %v2134
        %v2140 = vrot.slane %v2139, 4
        %v2142 = vshll.u32 %v2045, 16
        %v2144 = vrot.slane %v2142, 5
        %v2145 = vsel %vm247, %v2140, %v2144
        %v2146 = vshrl.u32 %v2045, 16
        %v2148 = vrot.slane %v2146, 4
        %v2149 = vor.u32 %v2148, %v2144
        %v2150 = vrot.slane %v2149, 4
        %v2152 = vshll.u32 %v2046, 16
        %v2154 = vrot.slane %v2152, 5
        %v2155 = vsel %vm247, %v2150, %v2154
        %v2156 = vshrl.u32 %v2046, 16
        %v2158 = vrot.slane %v2156, 4
        %v2159 = vor.u32 %v2158, %v2154
        %v2160 = vrot.slane %v2159, 4
        %v2162 = vshll.u32 %v2047, 16
        %v2164 = vrot.slane %v2162, 5
        %v2165 = vsel %vm247, %v2160, %v2164
        %v2167 = vshrl.u32 %v2048, 16
        %v2169 = vrot.slane %v2167, 4
        %v2170 = vshll.u32 %v2048, 16
        %v2172 = vrot.slane %v2170, 5
        %v2173 = vor.u32 %v2169, %v2172
        %v2174 = vrot.slane %v2173, 4
        %v2176 = vshll.u32 %v2049, 16
        %v2178 = vrot.slane %v2176, 5
        %v2179 = vsel %vm247, %v2174, %v2178
        %v2180 = vshrl.u32 %v2049, 16
        %v2182 = vrot.slane %v2180, 4
        %v2183 = vor.u32 %v2182, %v2178
        %v2184 = vrot.slane %v2183, 4
        %v2186 = vshll.u32 %v2050, 16
        %v2188 = vrot.slane %v2186, 5
        %v2189 = vsel %vm247, %v2184, %v2188
        %v2190 = vshrl.u32 %v2050, 16
        %v2192 = vrot.slane %v2190, 4
        %v2193 = vor.u32 %v2192, %v2188
        %v2194 = vrot.slane %v2193, 4
        %v2196 = vshll.u32 %v2051, 16
        %v2198 = vrot.slane %v2196, 5
        %v2199 = vsel %vm247, %v2194, %v2198
        %v2200 = vshrl.u32 %v2051, 16
        %v2202 = vrot.slane %v2200, 4
        %v2203 = vor.u32 %v2202, %v2198
        %v2204 = vrot.slane %v2203, 4
        %v2206 = vshll.u32 %v2052, 16
        %v2208 = vrot.slane %v2206, 5
        %v2209 = vsel %vm247, %v2204, %v2208
        %v2211 = vshrl.u32 %v2053, 16
        %v2213 = vrot.slane %v2211, 4
        %v2214 = vshll.u32 %v2053, 16
        %v2216 = vrot.slane %v2214, 5
        %v2217 = vor.u32 %v2213, %v2216
        %v2218 = vrot.slane %v2217, 4
        %v2220 = vshll.u32 %v2054, 16
        %v2222 = vrot.slane %v2220, 5
        %v2223 = vsel %vm247, %v2218, %v2222
        %v2224 = vshrl.u32 %v2054, 16
        %v2226 = vrot.slane %v2224, 4
        %v2227 = vor.u32 %v2226, %v2222
        %v2228 = vrot.slane %v2227, 4
        %v2230 = vshll.u32 %v2055, 16
        %v2232 = vrot.slane %v2230, 5
        %v2233 = vsel %vm247, %v2228, %v2232
        %v2234 = vshrl.u32 %v2055, 16
        %v2236 = vrot.slane %v2234, 4
        %v2237 = vor.u32 %v2236, %v2232
        %v2238 = vrot.slane %v2237, 4
        %v2240 = vshll.u32 %v2056, 16
        %v2242 = vrot.slane %v2240, 5
        %v2243 = vsel %vm247, %v2238, %v2242
        %v2244 = vshrl.u32 %v2056, 16
        %v2246 = vrot.slane %v2244, 4
        %v2247 = vor.u32 %v2246, %v2242
        %v2248 = vrot.slane %v2247, 4
        %v2250 = vshll.u32 %v2057, 16
        %v2252 = vrot.slane %v2250, 5
        %v2253 = vsel %vm247, %v2248, %v2252
        %v2255 = vshrl.u32 %v2058, 16
        %v2257 = vrot.slane %v2255, 4
        %v2258 = vshll.u32 %v2058, 16
        %v2260 = vrot.slane %v2258, 5
        %v2261 = vor.u32 %v2257, %v2260
        %v2262 = vrot.slane %v2261, 4
        %v2264 = vshll.u32 %v2059, 16
        %v2266 = vrot.slane %v2264, 5
        %v2267 = vsel %vm247, %v2262, %v2266
        %v2268 = vshrl.u32 %v2059, 16
        %v2270 = vrot.slane %v2268, 4
        %v2271 = vor.u32 %v2270, %v2266
        %v2272 = vrot.slane %v2271, 4
        %v2274 = vshll.u32 %v2060, 16
        %v2276 = vrot.slane %v2274, 5
        %v2277 = vsel %vm247, %v2272, %v2276
        %v2278 = vshrl.u32 %v2060, 16
        %v2280 = vrot.slane %v2278, 4
        %v2281 = vor.u32 %v2280, %v2276
        %v2282 = vrot.slane %v2281, 4
        %v2284 = vshll.u32 %v2061, 16
        %v2286 = vrot.slane %v2284, 5
        %v2287 = vsel %vm247, %v2282, %v2286
        %v2288 = vshrl.u32 %v2061, 16
        %v2290 = vrot.slane %v2288, 4
        %v2291 = vor.u32 %v2290, %v2286
        %v2292 = vrot.slane %v2291, 4
        %v2294 = vshll.u32 %v2062, 16
        %v2296 = vrot.slane %v2294, 5
        %v2297 = vsel %vm247, %v2292, %v2296
        %v2299 = vshrl.u32 %v2063, 16
        %v2301 = vrot.slane %v2299, 4
        %v2302 = vshll.u32 %v2063, 16
        %v2304 = vrot.slane %v2302, 5
        %v2305 = vor.u32 %v2301, %v2304
        %v2306 = vrot.slane %v2305, 4
        %v2308 = vshll.u32 %v2064, 16
        %v2310 = vrot.slane %v2308, 5
        %v2311 = vsel %vm247, %v2306, %v2310
        %v2312 = vshrl.u32 %v2064, 16
        %v2314 = vrot.slane %v2312, 4
        %v2315 = vor.u32 %v2314, %v2310
        %v2316 = vrot.slane %v2315, 4
        %v2318 = vshll.u32 %v2065, 16
        %v2320 = vrot.slane %v2318, 5
        %v2321 = vsel %vm247, %v2316, %v2320
        %v2322 = vshrl.u32 %v2065, 16
        %v2324 = vrot.slane %v2322, 4
        %v2325 = vor.u32 %v2324, %v2320
        %v2326 = vrot.slane %v2325, 4
        %v2328 = vshll.u32 %v2066, 16
        %v2330 = vrot.slane %v2328, 5
        %v2331 = vsel %vm247, %v2326, %v2330
        %v2332 = vshrl.u32 %v2066, 16
        %v2334 = vrot.slane %v2332, 4
        %v2335 = vor.u32 %v2334, %v2330
        %v2336 = vrot.slane %v2335, 4
        %v2338 = vshll.u32 %v2067, 16
        %v2340 = vrot.slane %v2338, 5
        %v2341 = vsel %vm247, %v2336, %v2340
        %v2343 = vshrl.u32 %v2068, 16
        %v2345 = vrot.slane %v2343, 4
        %v2346 = vshll.u32 %v2068, 16
        %v2348 = vrot.slane %v2346, 5
        %v2349 = vor.u32 %v2345, %v2348
        %v2350 = vrot.slane %v2349, 4
        %v2352 = vshll.u32 %v2069, 16
        %v2354 = vrot.slane %v2352, 5
        %v2355 = vsel %vm247, %v2350, %v2354
        %v2356 = vshrl.u32 %v2069, 16
        %v2358 = vrot.slane %v2356, 4
        %v2359 = vor.u32 %v2358, %v2354
        %v2360 = vrot.slane %v2359, 4
        %v2362 = vshll.u32 %v2070, 16
        %v2364 = vrot.slane %v2362, 5
        %v2365 = vsel %vm247, %v2360, %v2364
        %v2366 = vshrl.u32 %v2070, 16
        %v2368 = vrot.slane %v2366, 4
        %v2369 = vor.u32 %v2368, %v2364
        %v2370 = vrot.slane %v2369, 4
        %v2372 = vshll.u32 %v2071, 16
        %v2374 = vrot.slane %v2372, 5
        %v2375 = vsel %vm247, %v2370, %v2374
        %v2376 = vshrl.u32 %v2071, 16
        %v2378 = vrot.slane %v2376, 4
        %v2379 = vor.u32 %v2378, %v2374
        %v2380 = vrot.slane %v2379, 4
        %v2382 = vshll.u32 %v2072, 16
        %v2384 = vrot.slane %v2382, 5
        %v2385 = vsel %vm247, %v2380, %v2384
        %v2387 = vshrl.u32 %v2073, 16
        %v2389 = vrot.slane %v2387, 4
        %v2390 = vshll.u32 %v2073, 16
        %v2392 = vrot.slane %v2390, 5
        %v2393 = vor.u32 %v2389, %v2392
        %v2394 = vrot.slane %v2393, 4
        %v2396 = vshll.u32 %v2074, 16
        %v2398 = vrot.slane %v2396, 5
        %v2399 = vsel %vm247, %v2394, %v2398
        %v2400 = vshrl.u32 %v2074, 16
        %v2402 = vrot.slane %v2400, 4
        %v2403 = vor.u32 %v2402, %v2398
        %v2404 = vrot.slane %v2403, 4
        %v2406 = vshll.u32 %v2075, 16
        %v2408 = vrot.slane %v2406, 5
        %v2409 = vsel %vm247, %v2404, %v2408
        %v2410 = vshrl.u32 %v2075, 16
        %v2412 = vrot.slane %v2410, 4
        %v2413 = vor.u32 %v2412, %v2408
        %v2414 = vrot.slane %v2413, 4
        %v2416 = vshll.u32 %v2076, 16
        %v2418 = vrot.slane %v2416, 5
        %v2419 = vsel %vm247, %v2414, %v2418
        %v2420 = vshrl.u32 %v2076, 16
        %v2422 = vrot.slane %v2420, 4
        %v2423 = vor.u32 %v2422, %v2418
        %v2424 = vrot.slane %v2423, 4
        %v2426 = vshll.u32 %v2077, 16
        %v2428 = vrot.slane %v2426, 5
        %v2429 = vsel %vm247, %v2424, %v2428
        %s2430 = scalar_lea.vmem %s1, 256
        %v2431 = vld [vmem:[%s2430] sm:$0xf]
        %v2432 = vld [vmem:[%s2430 + $0x4] sm:$0xf]
        %v2433 = vld [vmem:[%s2430 + $0x8] sm:$0xf]
        %v2434 = vld [vmem:[%s2430 + $0xc] sm:$0xf]
        %v2435 = vld [vmem:[%s2430 + $0x10] sm:$0xf]
        %v2436 = vld [vmem:[%s2430 + $0x14] sm:$0xf]
        %v2437 = vld [vmem:[%s2430 + $0x18] sm:$0xf]
        %v2438 = vld [vmem:[%s2430 + $0x1c] sm:$0xf]
        %v2439 = vld [vmem:[%s2430 + $0x20] sm:$0xf]
        %v2440 = vld [vmem:[%s2430 + $0x24] sm:$0xf]
        %v2441 = vld [vmem:[%s2430 + $0x28] sm:$0xf]
        %v2442 = vld [vmem:[%s2430 + $0x2c] sm:$0xf]
        %v2443 = vld [vmem:[%s2430 + $0x30] sm:$0xf]
        %v2444 = vld [vmem:[%s2430 + $0x34] sm:$0xf]
        %v2445 = vld [vmem:[%s2430 + $0x38] sm:$0xf]
        %v2446 = vld [vmem:[%s2430 + $0x3c] sm:$0xf]
        %v2447 = vunpack.c.l.b16 %v2091
        %v2448 = vunpack.c.l.b16 %v2101
        %v2449 = vunpack.c.l.b16 %v2111
        %v2450 = vunpack.c.l.b16 %v2121
        %v2451 = vunpack.c.l.b16 %v2135
        %v2452 = vunpack.c.l.b16 %v2145
        %v2453 = vunpack.c.l.b16 %v2155
        %v2454 = vunpack.c.l.b16 %v2165
        %v2455 = vunpack.c.l.b16 %v2179
        %v2456 = vunpack.c.l.b16 %v2189
        %v2457 = vunpack.c.l.b16 %v2199
        %v2458 = vunpack.c.l.b16 %v2209
        %v2459 = vunpack.c.l.b16 %v2223
        %v2460 = vunpack.c.l.b16 %v2233
        %v2461 = vunpack.c.l.b16 %v2243
        %v2462 = vunpack.c.l.b16 %v2253
        %v2463 = vunpack.c.l.b16 %v2267
        %v2464 = vunpack.c.l.b16 %v2277
        %v2465 = vunpack.c.l.b16 %v2287
        %v2466 = vunpack.c.l.b16 %v2297
        %v2467 = vunpack.c.l.b16 %v2311
        %v2468 = vunpack.c.l.b16 %v2321
        %v2469 = vunpack.c.l.b16 %v2331
        %v2470 = vunpack.c.l.b16 %v2341
        %v2471 = vunpack.c.l.b16 %v2355
        %v2472 = vunpack.c.l.b16 %v2365
        %v2473 = vunpack.c.l.b16 %v2375
        %v2474 = vunpack.c.l.b16 %v2385
        %v2475 = vunpack.c.l.b16 %v2399
        %v2476 = vunpack.c.l.b16 %v2409
        %v2477 = vunpack.c.l.b16 %v2419
        %v2478 = vunpack.c.l.b16 %v2429
        %v2479 = vpack.c.b16 %v2448, %v2447
        %v2480 = vpack.c.b16 %v2450, %v2449
        %v2481 = vpack.c.b16 %v2452, %v2451
        %v2482 = vpack.c.b16 %v2454, %v2453
        %v2483 = vpack.c.b16 %v2456, %v2455
        %v2484 = vpack.c.b16 %v2458, %v2457
        %v2485 = vpack.c.b16 %v2460, %v2459
        %v2486 = vpack.c.b16 %v2462, %v2461
        %v2487 = vpack.c.b16 %v2464, %v2463
        %v2488 = vpack.c.b16 %v2466, %v2465
        %v2489 = vpack.c.b16 %v2468, %v2467
        %v2490 = vpack.c.b16 %v2470, %v2469
        %v2491 = vpack.c.b16 %v2472, %v2471
        %v2492 = vpack.c.b16 %v2474, %v2473
        %v2493 = vpack.c.b16 %v2476, %v2475
        %v2494 = vpack.c.b16 %v2478, %v2477
        %v2527 = vunpack.c.l.b16 %v2431
        %v2528 = vunpack.c.l.b16 %v2432
        %v2529 = vunpack.c.l.b16 %v2433
        %v2530 = vunpack.c.l.b16 %v2434
        %v2531 = vunpack.c.l.b16 %v2435
        %v2532 = vunpack.c.l.b16 %v2436
        %v2533 = vunpack.c.l.b16 %v2437
        %v2534 = vunpack.c.l.b16 %v2438
        %v2535 = vunpack.c.l.b16 %v2439
        %v2536 = vunpack.c.l.b16 %v2440
        %v2537 = vunpack.c.l.b16 %v2441
        %v2538 = vunpack.c.l.b16 %v2442
        %v2539 = vunpack.c.l.b16 %v2443
        %v2540 = vunpack.c.l.b16 %v2444
        %v2541 = vunpack.c.l.b16 %v2445
        %v2542 = vunpack.c.l.b16 %v2446
        %v2543 = vpack.c.b16 %v2528, %v2527
        %v2544 = vpack.c.b16 %v2530, %v2529
        %v2545 = vpack.c.b16 %v2532, %v2531
        %v2546 = vpack.c.b16 %v2534, %v2533
        %v2547 = vpack.c.b16 %v2536, %v2535
        %v2548 = vpack.c.b16 %v2538, %v2537
        %v2549 = vpack.c.b16 %v2540, %v2539
        %v2550 = vpack.c.b16 %v2542, %v2541
        %2559 = vmatprep.subr.bf16.mxu0 0
        %2560 = vmatpush1.bf16.msra.mxu0 %v2543
        %2561 = vmatprep.subr.bf16.mxu0 0
        %2562 = vmatpush1.bf16.msra.mxu0 %v2544
        %2563 = vmatprep.subr.bf16.mxu0 0
        %2564 = vmatpush1.bf16.msra.mxu0 %v2545
        %2565 = vmatprep.subr.bf16.mxu0 0
        %2566 = vmatpush1.bf16.msra.mxu0 %v2546
        %2567 = vmatprep.subr.bf16.mxu0 0
        %2568 = vmatpush1.bf16.msra.mxu0 %v2547
        %2569 = vmatprep.subr.bf16.mxu0 0
        %2570 = vmatpush1.bf16.msra.mxu0 %v2548
        %2571 = vmatprep.subr.bf16.mxu0 0
        %2572 = vmatpush1.bf16.msra.mxu0 %v2549
        %2573 = vmatprep.subr.bf16.mxu0 0
        %2574 = vmatpush1.bf16.msra.mxu0 %v2550
        %2575 = vmatprep.subr.bf16.mxu0 0
        %2576 = vmatpush1.bf16.msra.mxu0 0
        %2577 = vmatprep.subr.bf16.mxu0 0
        %2578 = vmatpush1.bf16.msra.mxu0 0
        %2579 = vmatprep.subr.bf16.mxu0 0
        %2580 = vmatpush1.bf16.msra.mxu0 0
        %2581 = vmatprep.subr.bf16.mxu0 0
        %2582 = vmatpush1.bf16.msra.mxu0 0
        %2583 = vmatprep.subr.bf16.mxu0 0
        %2584 = vmatpush1.bf16.msra.mxu0 0
        %2585 = vmatprep.subr.bf16.mxu0 0
        %2586 = vmatpush1.bf16.msra.mxu0 0
        %2587 = vmatprep.subr.bf16.mxu0 0
        %2588 = vmatpush1.bf16.msra.mxu0 0
        %2589 = vmatprep.subr.bf16.mxu0 0
        %2590 = vmatpush1.bf16.msra.mxu0 0
        %2591 = vmatprep.mubr.bf16.mxu0 0
        %2592 = vmatmul.mubr.bf16.gmra.mrb[0].mxu0 %v2479
        %v2593 = vpop.f32.mrb[0].mxu0
        %v2594 = vadd.f32 0.0, %v2593
        %v2595 = vpop.f32.mrb[0].mxu0
        %v2596 = vpop.f32.mrb[0].mxu0
        %v2597 = vadd.f32 0.0, %v2596
        %v2598 = vpop.f32.mrb[0].mxu0
        %2599 = vmatprep.mubr.bf16.mxu0 0
        %2600 = vmatmul.mubr.bf16.gmra.mrb[0].mxu0 %v2480
        %v2601 = vpop.f32.mrb[0].mxu0
        %v2602 = vadd.f32 0.0, %v2601
        %v2603 = vpop.f32.mrb[0].mxu0
        %v2604 = vpop.f32.mrb[0].mxu0
        %v2605 = vadd.f32 0.0, %v2604
        %v2606 = vpop.f32.mrb[0].mxu0
        %2607 = vmatprep.mubr.bf16.mxu0 0
        %2608 = vmatmul.mubr.bf16.gmra.mrb[0].mxu0 %v2481
        %v2609 = vpop.f32.mrb[0].mxu0
        %v2610 = vadd.f32 0.0, %v2609
        %v2611 = vpop.f32.mrb[0].mxu0
        %v2612 = vpop.f32.mrb[0].mxu0
        %v2613 = vadd.f32 0.0, %v2612
        %v2614 = vpop.f32.mrb[0].mxu0
        %2615 = vmatprep.mubr.bf16.mxu0 0
        %2616 = vmatmul.mubr.bf16.gmra.mrb[0].mxu0 %v2482
        %v2617 = vpop.f32.mrb[0].mxu0
        %v2618 = vadd.f32 0.0, %v2617
        %v2619 = vpop.f32.mrb[0].mxu0
        %v2620 = vpop.f32.mrb[0].mxu0
        %v2621 = vadd.f32 0.0, %v2620
        %v2622 = vpop.f32.mrb[0].mxu0
        %2623 = vmatprep.mubr.bf16.mxu0 0
        %2624 = vmatmul.mubr.bf16.gmra.mrb[0].mxu0 %v2483
        %v2625 = vpop.f32.mrb[0].mxu0
        %v2626 = vadd.f32 0.0, %v2625
        %v2627 = vpop.f32.mrb[0].mxu0
        %v2628 = vpop.f32.mrb[0].mxu0
        %v2629 = vadd.f32 0.0, %v2628
        %v2630 = vpop.f32.mrb[0].mxu0
        %2631 = vmatprep.mubr.bf16.mxu0 0
        %2632 = vmatmul.mubr.bf16.gmra.mrb[0].mxu0 %v2484
        %v2633 = vpop.f32.mrb[0].mxu0
        %v2634 = vadd.f32 0.0, %v2633
        %v2635 = vpop.f32.mrb[0].mxu0
        %v2636 = vpop.f32.mrb[0].mxu0
        %v2637 = vadd.f32 0.0, %v2636
        %v2638 = vpop.f32.mrb[0].mxu0
        %2639 = vmatprep.mubr.bf16.mxu0 0
        %2640 = vmatmul.mubr.bf16.gmra.mrb[0].mxu0 %v2485
        %v2641 = vpop.f32.mrb[0].mxu0
        %v2642 = vadd.f32 0.0, %v2641
        %v2643 = vpop.f32.mrb[0].mxu0
        %v2644 = vpop.f32.mrb[0].mxu0
        %v2645 = vadd.f32 0.0, %v2644
        %v2646 = vpop.f32.mrb[0].mxu0
        %2647 = vmatprep.mubr.bf16.mxu0 0
        %2648 = vmatmul.mubr.bf16.gmra.mrb[0].mxu0 %v2486
        %v2649 = vpop.f32.mrb[0].mxu0
        %v2650 = vadd.f32 0.0, %v2649
        %v2651 = vpop.f32.mrb[0].mxu0
        %v2652 = vpop.f32.mrb[0].mxu0
        %v2653 = vadd.f32 0.0, %v2652
        %v2654 = vpop.f32.mrb[0].mxu0
        %2655 = vmatprep.mubr.bf16.mxu0 0
        %2656 = vmatmul.mubr.bf16.gmra.mrb[0].mxu0 %v2487
        %v2657 = vpop.f32.mrb[0].mxu0
        %v2658 = vadd.f32 0.0, %v2657
        %v2659 = vpop.f32.mrb[0].mxu0
        %v2660 = vpop.f32.mrb[0].mxu0
        %v2661 = vadd.f32 0.0, %v2660
        %v2662 = vpop.f32.mrb[0].mxu0
        %2663 = vmatprep.mubr.bf16.mxu0 0
        %2664 = vmatmul.mubr.bf16.gmra.mrb[0].mxu0 %v2488
        %v2665 = vpop.f32.mrb[0].mxu0
        %v2666 = vadd.f32 0.0, %v2665
        %v2667 = vpop.f32.mrb[0].mxu0
        %v2668 = vpop.f32.mrb[0].mxu0
        %v2669 = vadd.f32 0.0, %v2668
        %v2670 = vpop.f32.mrb[0].mxu0
        %2671 = vmatprep.mubr.bf16.mxu0 0
        %2672 = vmatmul.mubr.bf16.gmra.mrb[0].mxu0 %v2489
        %v2673 = vpop.f32.mrb[0].mxu0
        %v2674 = vadd.f32 0.0, %v2673
        %v2675 = vpop.f32.mrb[0].mxu0
        %v2676 = vpop.f32.mrb[0].mxu0
        %v2677 = vadd.f32 0.0, %v2676
        %v2678 = vpop.f32.mrb[0].mxu0
        %2679 = vmatprep.mubr.bf16.mxu0 0
        %2680 = vmatmul.mubr.bf16.gmra.mrb[0].mxu0 %v2490
        %v2681 = vpop.f32.mrb[0].mxu0
        %v2682 = vadd.f32 0.0, %v2681
        %v2683 = vpop.f32.mrb[0].mxu0
        %v2684 = vpop.f32.mrb[0].mxu0
        %v2685 = vadd.f32 0.0, %v2684
        %v2686 = vpop.f32.mrb[0].mxu0
        %2687 = vmatprep.mubr.bf16.mxu0 0
        %2688 = vmatmul.mubr.bf16.gmra.mrb[0].mxu0 %v2491
        %v2689 = vpop.f32.mrb[0].mxu0
        %v2690 = vadd.f32 0.0, %v2689
        %v2691 = vpop.f32.mrb[0].mxu0
        %v2692 = vpop.f32.mrb[0].mxu0
        %v2693 = vadd.f32 0.0, %v2692
        %v2694 = vpop.f32.mrb[0].mxu0
        %2695 = vmatprep.mubr.bf16.mxu0 0
        %2696 = vmatmul.mubr.bf16.gmra.mrb[0].mxu0 %v2492
        %v2697 = vpop.f32.mrb[0].mxu0
        %v2698 = vadd.f32 0.0, %v2697
        %v2699 = vpop.f32.mrb[0].mxu0
        %v2700 = vpop.f32.mrb[0].mxu0
        %v2701 = vadd.f32 0.0, %v2700
        %v2702 = vpop.f32.mrb[0].mxu0
        %2703 = vmatprep.mubr.bf16.mxu0 0
        %2704 = vmatmul.mubr.bf16.gmra.mrb[0].mxu0 %v2493
        %v2705 = vpop.f32.mrb[0].mxu0
        %v2706 = vadd.f32 0.0, %v2705
        %v2707 = vpop.f32.mrb[0].mxu0
        %v2708 = vpop.f32.mrb[0].mxu0
        %v2709 = vadd.f32 0.0, %v2708
        %v2710 = vpop.f32.mrb[0].mxu0
        %2711 = vmatprep.mubr.bf16.mxu0 0
        %2712 = vmatmul.mubr.bf16.gmra.mrb[0].mxu0 %v2494
        %v2713 = vpop.f32.mrb[0].mxu0
        %v2714 = vadd.f32 0.0, %v2713
        %v2715 = vpop.f32.mrb[0].mxu0
        %v2716 = vpop.f32.mrb[0].mxu0
        %v2717 = vadd.f32 0.0, %v2716
        %v2718 = vpop.f32.mrb[0].mxu0
        %2719 = vdwg.mxu0
        %v2720 = vadd.f32 %v2006, %v2594
        %v2721 = vadd.f32 %v2007, %v2597
        %v2722 = vadd.f32 %v2008, %v2602
        %v2723 = vadd.f32 %v2009, %v2605
        %v2724 = vadd.f32 %v2010, %v2610
        %v2725 = vadd.f32 %v2011, %v2613
        %v2726 = vadd.f32 %v2012, %v2618
        %v2727 = vadd.f32 %v2013, %v2621
        %v2728 = vadd.f32 %v2014, %v2626
        %v2729 = vadd.f32 %v2015, %v2629
        %v2730 = vadd.f32 %v2016, %v2634
        %v2731 = vadd.f32 %v2017, %v2637
        %v2732 = vadd.f32 %v2018, %v2642
        %v2733 = vadd.f32 %v2019, %v2645
        %v2734 = vadd.f32 %v2020, %v2650
        %v2735 = vadd.f32 %v2021, %v2653
        %v2736 = vadd.f32 %v2022, %v2658
        %v2737 = vadd.f32 %v2023, %v2661
        %v2738 = vadd.f32 %v2024, %v2666
        %v2739 = vadd.f32 %v2025, %v2669
        %v2740 = vadd.f32 %v2026, %v2674
        %v2741 = vadd.f32 %v2027, %v2677
        %v2742 = vadd.f32 %v2028, %v2682
        %v2743 = vadd.f32 %v2029, %v2685
        %v2744 = vadd.f32 %v2030, %v2690
        %v2745 = vadd.f32 %v2031, %v2693
        %v2746 = vadd.f32 %v2032, %v2698
        %v2747 = vadd.f32 %v2033, %v2701
        %v2748 = vadd.f32 %v2034, %v2706
        %v2749 = vadd.f32 %v2035, %v2709
        %v2750 = vadd.f32 %v2036, %v2714
        %v2751 = vadd.f32 %v2037, %v2717
        %v2752 = vld [vmem:[%s1651] sm:$0xe]
        %v2753 = vld [vmem:[%s1651 + $0x14] sm:$0xe]
        %v2754 = vld [vmem:[%s1651 + $0x28] sm:$0xe]
        %v2755 = vld [vmem:[%s1651 + $0x3c] sm:$0xe]
        %v2756 = vld [vmem:[%s1651 + $0x50] sm:$0xe]
        %v2757 = vld [vmem:[%s1651 + $0x64] sm:$0xe]
        %v2758 = vld [vmem:[%s1651 + $0x78] sm:$0xe]
        %v2759 = vld [vmem:[%s1651 + $0x8c] sm:$0xe]
        %v2800 = vrot.slane %v2752, 5
        %v2801 = vrot.slane %v2800, 4
        %v2802 = vrot.slane %v2039, 5
        %v2803 = vsel %vm1221, %v2801, %v2802
        %v2804 = vrot.slane %v2802, 4
        %v2805 = vrot.slane %v2040, 5
        %v2806 = vsel %vm1221, %v2804, %v2805
        %v2807 = vrot.slane %v2805, 4
        %v2808 = vrot.slane %v2041, 5
        %v2809 = vsel %vm1221, %v2807, %v2808
        %v2810 = vrot.slane %v2808, 4
        %v2811 = vrot.slane %v2042, 5
        %v2812 = vsel %vm1221, %v2810, %v2811
        %v2813 = vrot.slane %v2753, 5
        %v2814 = vrot.slane %v2813, 4
        %v2815 = vrot.slane %v2044, 5
        %v2816 = vsel %vm1221, %v2814, %v2815
        %v2817 = vrot.slane %v2815, 4
        %v2818 = vrot.slane %v2045, 5
        %v2819 = vsel %vm1221, %v2817, %v2818
        %v2820 = vrot.slane %v2818, 4
        %v2821 = vrot.slane %v2046, 5
        %v2822 = vsel %vm1221, %v2820, %v2821
        %v2823 = vrot.slane %v2821, 4
        %v2824 = vrot.slane %v2047, 5
        %v2825 = vsel %vm1221, %v2823, %v2824
        %v2826 = vrot.slane %v2754, 5
        %v2827 = vrot.slane %v2826, 4
        %v2828 = vrot.slane %v2049, 5
        %v2829 = vsel %vm1221, %v2827, %v2828
        %v2830 = vrot.slane %v2828, 4
        %v2831 = vrot.slane %v2050, 5
        %v2832 = vsel %vm1221, %v2830, %v2831
        %v2833 = vrot.slane %v2831, 4
        %v2834 = vrot.slane %v2051, 5
        %v2835 = vsel %vm1221, %v2833, %v2834
        %v2836 = vrot.slane %v2834, 4
        %v2837 = vrot.slane %v2052, 5
        %v2838 = vsel %vm1221, %v2836, %v2837
        %v2839 = vrot.slane %v2755, 5
        %v2840 = vrot.slane %v2839, 4
        %v2841 = vrot.slane %v2054, 5
        %v2842 = vsel %vm1221, %v2840, %v2841
        %v2843 = vrot.slane %v2841, 4
        %v2844 = vrot.slane %v2055, 5
        %v2845 = vsel %vm1221, %v2843, %v2844
        %v2846 = vrot.slane %v2844, 4
        %v2847 = vrot.slane %v2056, 5
        %v2848 = vsel %vm1221, %v2846, %v2847
        %v2849 = vrot.slane %v2847, 4
        %v2850 = vrot.slane %v2057, 5
        %v2851 = vsel %vm1221, %v2849, %v2850
        %v2852 = vrot.slane %v2756, 5
        %v2853 = vrot.slane %v2852, 4
        %v2854 = vrot.slane %v2059, 5
        %v2855 = vsel %vm1221, %v2853, %v2854
        %v2856 = vrot.slane %v2854, 4
        %v2857 = vrot.slane %v2060, 5
        %v2858 = vsel %vm1221, %v2856, %v2857
        %v2859 = vrot.slane %v2857, 4
        %v2860 = vrot.slane %v2061, 5
        %v2861 = vsel %vm1221, %v2859, %v2860
        %v2862 = vrot.slane %v2860, 4
        %v2863 = vrot.slane %v2062, 5
        %v2864 = vsel %vm1221, %v2862, %v2863
        %v2865 = vrot.slane %v2757, 5
        %v2866 = vrot.slane %v2865, 4
        %v2867 = vrot.slane %v2064, 5
        %v2868 = vsel %vm1221, %v2866, %v2867
        %v2869 = vrot.slane %v2867, 4
        %v2870 = vrot.slane %v2065, 5
        %v2871 = vsel %vm1221, %v2869, %v2870
        %v2872 = vrot.slane %v2870, 4
        %v2873 = vrot.slane %v2066, 5
        %v2874 = vsel %vm1221, %v2872, %v2873
        %v2875 = vrot.slane %v2873, 4
        %v2876 = vrot.slane %v2067, 5
        %v2877 = vsel %vm1221, %v2875, %v2876
        %v2878 = vrot.slane %v2758, 5
        %v2879 = vrot.slane %v2878, 4
        %v2880 = vrot.slane %v2069, 5
        %v2881 = vsel %vm1221, %v2879, %v2880
        %v2882 = vrot.slane %v2880, 4
        %v2883 = vrot.slane %v2070, 5
        %v2884 = vsel %vm1221, %v2882, %v2883
        %v2885 = vrot.slane %v2883, 4
        %v2886 = vrot.slane %v2071, 5
        %v2887 = vsel %vm1221, %v2885, %v2886
        %v2888 = vrot.slane %v2886, 4
        %v2889 = vrot.slane %v2072, 5
        %v2890 = vsel %vm1221, %v2888, %v2889
        %v2891 = vrot.slane %v2759, 5
        %v2892 = vrot.slane %v2891, 4
        %v2893 = vrot.slane %v2074, 5
        %v2894 = vsel %vm1221, %v2892, %v2893
        %v2895 = vrot.slane %v2893, 4
        %v2896 = vrot.slane %v2075, 5
        %v2897 = vsel %vm1221, %v2895, %v2896
        %v2898 = vrot.slane %v2896, 4
        %v2899 = vrot.slane %v2076, 5
        %v2900 = vsel %vm1221, %v2898, %v2899
        %v2901 = vrot.slane %v2899, 4
        %v2902 = vrot.slane %v2077, 5
        %v2903 = vsel %vm1221, %v2901, %v2902
        %s2904 = scalar_lea.vmem %s1, 320
        %v2905 = vld [vmem:[%s2904] sm:$0xf]
        %v2906 = vld [vmem:[%s2904 + $0x4] sm:$0xf]
        %v2907 = vld [vmem:[%s2904 + $0x8] sm:$0xf]
        %v2908 = vld [vmem:[%s2904 + $0xc] sm:$0xf]
        %v2909 = vld [vmem:[%s2904 + $0x10] sm:$0xf]
        %v2910 = vld [vmem:[%s2904 + $0x14] sm:$0xf]
        %v2911 = vld [vmem:[%s2904 + $0x18] sm:$0xf]
        %v2912 = vld [vmem:[%s2904 + $0x1c] sm:$0xf]
        %v2913 = vld [vmem:[%s2904 + $0x20] sm:$0xf]
        %v2914 = vld [vmem:[%s2904 + $0x24] sm:$0xf]
        %v2915 = vld [vmem:[%s2904 + $0x28] sm:$0xf]
        %v2916 = vld [vmem:[%s2904 + $0x2c] sm:$0xf]
        %v2917 = vld [vmem:[%s2904 + $0x30] sm:$0xf]
        %v2918 = vld [vmem:[%s2904 + $0x34] sm:$0xf]
        %v2919 = vld [vmem:[%s2904 + $0x38] sm:$0xf]
        %v2920 = vld [vmem:[%s2904 + $0x3c] sm:$0xf]
        %v2921 = vunpack.c.l.b16 %v2803
        %v2922 = vunpack.c.l.b16 %v2806
        %v2923 = vunpack.c.l.b16 %v2809
        %v2924 = vunpack.c.l.b16 %v2812
        %v2925 = vunpack.c.l.b16 %v2816
        %v2926 = vunpack.c.l.b16 %v2819
        %v2927 = vunpack.c.l.b16 %v2822
        %v2928 = vunpack.c.l.b16 %v2825
        %v2929 = vunpack.c.l.b16 %v2829
        %v2930 = vunpack.c.l.b16 %v2832
        %v2931 = vunpack.c.l.b16 %v2835
        %v2932 = vunpack.c.l.b16 %v2838
        %v2933 = vunpack.c.l.b16 %v2842
        %v2934 = vunpack.c.l.b16 %v2845
        %v2935 = vunpack.c.l.b16 %v2848
        %v2936 = vunpack.c.l.b16 %v2851
        %v2937 = vunpack.c.l.b16 %v2855
        %v2938 = vunpack.c.l.b16 %v2858
        %v2939 = vunpack.c.l.b16 %v2861
        %v2940 = vunpack.c.l.b16 %v2864
        %v2941 = vunpack.c.l.b16 %v2868
        %v2942 = vunpack.c.l.b16 %v2871
        %v2943 = vunpack.c.l.b16 %v2874
        %v2944 = vunpack.c.l.b16 %v2877
        %v2945 = vunpack.c.l.b16 %v2881
        %v2946 = vunpack.c.l.b16 %v2884
        %v2947 = vunpack.c.l.b16 %v2887
        %v2948 = vunpack.c.l.b16 %v2890
        %v2949 = vunpack.c.l.b16 %v2894
        %v2950 = vunpack.c.l.b16 %v2897
        %v2951 = vunpack.c.l.b16 %v2900
        %v2952 = vunpack.c.l.b16 %v2903
        %v2953 = vpack.c.b16 %v2922, %v2921
        %v2954 = vpack.c.b16 %v2924, %v2923
        %v2955 = vpack.c.b16 %v2926, %v2925
        %v2956 = vpack.c.b16 %v2928, %v2927
        %v2957 = vpack.c.b16 %v2930, %v2929
        %v2958 = vpack.c.b16 %v2932, %v2931
        %v2959 = vpack.c.b16 %v2934, %v2933
        %v2960 = vpack.c.b16 %v2936, %v2935
        %v2961 = vpack.c.b16 %v2938, %v2937
        %v2962 = vpack.c.b16 %v2940, %v2939
        %v2963 = vpack.c.b16 %v2942, %v2941
        %v2964 = vpack.c.b16 %v2944, %v2943
        %v2965 = vpack.c.b16 %v2946, %v2945
        %v2966 = vpack.c.b16 %v2948, %v2947
        %v2967 = vpack.c.b16 %v2950, %v2949
        %v2968 = vpack.c.b16 %v2952, %v2951
        %v3001 = vunpack.c.l.b16 %v2905
        %v3002 = vunpack.c.l.b16 %v2906
        %v3003 = vunpack.c.l.b16 %v2907
        %v3004 = vunpack.c.l.b16 %v2908
        %v3005 = vunpack.c.l.b16 %v2909
        %v3006 = vunpack.c.l.b16 %v2910
        %v3007 = vunpack.c.l.b16 %v2911
        %v3008 = vunpack.c.l.b16 %v2912
        %v3009 = vunpack.c.l.b16 %v2913
        %v3010 = vunpack.c.l.b16 %v2914
        %v3011 = vunpack.c.l.b16 %v2915
        %v3012 = vunpack.c.l.b16 %v2916
        %v3013 = vunpack.c.l.b16 %v2917
        %v3014 = vunpack.c.l.b16 %v2918
        %v3015 = vunpack.c.l.b16 %v2919
        %v3016 = vunpack.c.l.b16 %v2920
        %v3017 = vpack.c.b16 %v3002, %v3001
        %v3018 = vpack.c.b16 %v3004, %v3003
        %v3019 = vpack.c.b16 %v3006, %v3005
        %v3020 = vpack.c.b16 %v3008, %v3007
        %v3021 = vpack.c.b16 %v3010, %v3009
        %v3022 = vpack.c.b16 %v3012, %v3011
        %v3023 = vpack.c.b16 %v3014, %v3013
        %v3024 = vpack.c.b16 %v3016, %v3015
        %3033 = vmatprep.subr.bf16.mxu0 0
        %3034 = vmatpush1.bf16.msra.mxu0 %v3017
        %3035 = vmatprep.subr.bf16.mxu0 0
        %3036 = vmatpush1.bf16.msra.mxu0 %v3018
        %3037 = vmatprep.subr.bf16.mxu0 0
        %3038 = vmatpush1.bf16.msra.mxu0 %v3019
        %3039 = vmatprep.subr.bf16.mxu0 0
        %3040 = vmatpush1.bf16.msra.mxu0 %v3020
        %3041 = vmatprep.subr.bf16.mxu0 0
        %3042 = vmatpush1.bf16.msra.mxu0 %v3021
        %3043 = vmatprep.subr.bf16.mxu0 0
        %3044 = vmatpush1.bf16.msra.mxu0 %v3022
        %3045 = vmatprep.subr.bf16.mxu0 0
        %3046 = vmatpush1.bf16.msra.mxu0 %v3023
        %3047 = vmatprep.subr.bf16.mxu0 0
        %3048 = vmatpush1.bf16.msra.mxu0 %v3024
        %3049 = vmatprep.subr.bf16.mxu0 0
        %3050 = vmatpush1.bf16.msra.mxu0 0
        %3051 = vmatprep.subr.bf16.mxu0 0
        %3052 = vmatpush1.bf16.msra.mxu0 0
        %3053 = vmatprep.subr.bf16.mxu0 0
        %3054 = vmatpush1.bf16.msra.mxu0 0
        %3055 = vmatprep.subr.bf16.mxu0 0
        %3056 = vmatpush1.bf16.msra.mxu0 0
        %3057 = vmatprep.subr.bf16.mxu0 0
        %3058 = vmatpush1.bf16.msra.mxu0 0
        %3059 = vmatprep.subr.bf16.mxu0 0
        %3060 = vmatpush1.bf16.msra.mxu0 0
        %3061 = vmatprep.subr.bf16.mxu0 0
        %3062 = vmatpush1.bf16.msra.mxu0 0
        %3063 = vmatprep.subr.bf16.mxu0 0
        %3064 = vmatpush1.bf16.msra.mxu0 0
        %3065 = vmatprep.mubr.bf16.mxu0 0
        %3066 = vmatmul.mubr.bf16.gmra.mrb[0].mxu0 %v2953
        %v3067 = vpop.f32.mrb[0].mxu0
        %v3068 = vadd.f32 0.0, %v3067
        %v3069 = vpop.f32.mrb[0].mxu0
        %v3070 = vpop.f32.mrb[0].mxu0
        %v3071 = vadd.f32 0.0, %v3070
        %v3072 = vpop.f32.mrb[0].mxu0
        %3073 = vmatprep.mubr.bf16.mxu0 0
        %3074 = vmatmul.mubr.bf16.gmra.mrb[0].mxu0 %v2954
        %v3075 = vpop.f32.mrb[0].mxu0
        %v3076 = vadd.f32 0.0, %v3075
        %v3077 = vpop.f32.mrb[0].mxu0
        %v3078 = vpop.f32.mrb[0].mxu0
        %v3079 = vadd.f32 0.0, %v3078
        %v3080 = vpop.f32.mrb[0].mxu0
        %3081 = vmatprep.mubr.bf16.mxu0 0
        %3082 = vmatmul.mubr.bf16.gmra.mrb[0].mxu0 %v2955
        %v3083 = vpop.f32.mrb[0].mxu0
        %v3084 = vadd.f32 0.0, %v3083
        %v3085 = vpop.f32.mrb[0].mxu0
        %v3086 = vpop.f32.mrb[0].mxu0
        %v3087 = vadd.f32 0.0, %v3086
        %v3088 = vpop.f32.mrb[0].mxu0
        %3089 = vmatprep.mubr.bf16.mxu0 0
        %3090 = vmatmul.mubr.bf16.gmra.mrb[0].mxu0 %v2956
        %v3091 = vpop.f32.mrb[0].mxu0
        %v3092 = vadd.f32 0.0, %v3091
        %v3093 = vpop.f32.mrb[0].mxu0
        %v3094 = vpop.f32.mrb[0].mxu0
        %v3095 = vadd.f32 0.0, %v3094
        %v3096 = vpop.f32.mrb[0].mxu0
        %3097 = vmatprep.mubr.bf16.mxu0 0
        %3098 = vmatmul.mubr.bf16.gmra.mrb[0].mxu0 %v2957
        %v3099 = vpop.f32.mrb[0].mxu0
        %v3100 = vadd.f32 0.0, %v3099
        %v3101 = vpop.f32.mrb[0].mxu0
        %v3102 = vpop.f32.mrb[0].mxu0
        %v3103 = vadd.f32 0.0, %v3102
        %v3104 = vpop.f32.mrb[0].mxu0
        %3105 = vmatprep.mubr.bf16.mxu0 0
        %3106 = vmatmul.mubr.bf16.gmra.mrb[0].mxu0 %v2958
        %v3107 = vpop.f32.mrb[0].mxu0
        %v3108 = vadd.f32 0.0, %v3107
        %v3109 = vpop.f32.mrb[0].mxu0
        %v3110 = vpop.f32.mrb[0].mxu0
        %v3111 = vadd.f32 0.0, %v3110
        %v3112 = vpop.f32.mrb[0].mxu0
        %3113 = vmatprep.mubr.bf16.mxu0 0
        %3114 = vmatmul.mubr.bf16.gmra.mrb[0].mxu0 %v2959
        %v3115 = vpop.f32.mrb[0].mxu0
        %v3116 = vadd.f32 0.0, %v3115
        %v3117 = vpop.f32.mrb[0].mxu0
        %v3118 = vpop.f32.mrb[0].mxu0
        %v3119 = vadd.f32 0.0, %v3118
        %v3120 = vpop.f32.mrb[0].mxu0
        %3121 = vmatprep.mubr.bf16.mxu0 0
        %3122 = vmatmul.mubr.bf16.gmra.mrb[0].mxu0 %v2960
        %v3123 = vpop.f32.mrb[0].mxu0
        %v3124 = vadd.f32 0.0, %v3123
        %v3125 = vpop.f32.mrb[0].mxu0
        %v3126 = vpop.f32.mrb[0].mxu0
        %v3127 = vadd.f32 0.0, %v3126
        %v3128 = vpop.f32.mrb[0].mxu0
        %3129 = vmatprep.mubr.bf16.mxu0 0
        %3130 = vmatmul.mubr.bf16.gmra.mrb[0].mxu0 %v2961
        %v3131 = vpop.f32.mrb[0].mxu0
        %v3132 = vadd.f32 0.0, %v3131
        %v3133 = vpop.f32.mrb[0].mxu0
        %v3134 = vpop.f32.mrb[0].mxu0
        %v3135 = vadd.f32 0.0, %v3134
        %v3136 = vpop.f32.mrb[0].mxu0
        %3137 = vmatprep.mubr.bf16.mxu0 0
        %3138 = vmatmul.mubr.bf16.gmra.mrb[0].mxu0 %v2962
        %v3139 = vpop.f32.mrb[0].mxu0
        %v3140 = vadd.f32 0.0, %v3139
        %v3141 = vpop.f32.mrb[0].mxu0
        %v3142 = vpop.f32.mrb[0].mxu0
        %v3143 = vadd.f32 0.0, %v3142
        %v3144 = vpop.f32.mrb[0].mxu0
        %3145 = vmatprep.mubr.bf16.mxu0 0
        %3146 = vmatmul.mubr.bf16.gmra.mrb[0].mxu0 %v2963
        %v3147 = vpop.f32.mrb[0].mxu0
        %v3148 = vadd.f32 0.0, %v3147
        %v3149 = vpop.f32.mrb[0].mxu0
        %v3150 = vpop.f32.mrb[0].mxu0
        %v3151 = vadd.f32 0.0, %v3150
        %v3152 = vpop.f32.mrb[0].mxu0
        %3153 = vmatprep.mubr.bf16.mxu0 0
        %3154 = vmatmul.mubr.bf16.gmra.mrb[0].mxu0 %v2964
        %v3155 = vpop.f32.mrb[0].mxu0
        %v3156 = vadd.f32 0.0, %v3155
        %v3157 = vpop.f32.mrb[0].mxu0
        %v3158 = vpop.f32.mrb[0].mxu0
        %v3159 = vadd.f32 0.0, %v3158
        %v3160 = vpop.f32.mrb[0].mxu0
        %3161 = vmatprep.mubr.bf16.mxu0 0
        %3162 = vmatmul.mubr.bf16.gmra.mrb[0].mxu0 %v2965
        %v3163 = vpop.f32.mrb[0].mxu0
        %v3164 = vadd.f32 0.0, %v3163
        %v3165 = vpop.f32.mrb[0].mxu0
        %v3166 = vpop.f32.mrb[0].mxu0
        %v3167 = vadd.f32 0.0, %v3166
        %v3168 = vpop.f32.mrb[0].mxu0
        %3169 = vmatprep.mubr.bf16.mxu0 0
        %3170 = vmatmul.mubr.bf16.gmra.mrb[0].mxu0 %v2966
        %v3171 = vpop.f32.mrb[0].mxu0
        %v3172 = vadd.f32 0.0, %v3171
        %v3173 = vpop.f32.mrb[0].mxu0
        %v3174 = vpop.f32.mrb[0].mxu0
        %v3175 = vadd.f32 0.0, %v3174
        %v3176 = vpop.f32.mrb[0].mxu0
        %3177 = vmatprep.mubr.bf16.mxu0 0
        %3178 = vmatmul.mubr.bf16.gmra.mrb[0].mxu0 %v2967
        %v3179 = vpop.f32.mrb[0].mxu0
        %v3180 = vadd.f32 0.0, %v3179
        %v3181 = vpop.f32.mrb[0].mxu0
        %v3182 = vpop.f32.mrb[0].mxu0
        %v3183 = vadd.f32 0.0, %v3182
        %v3184 = vpop.f32.mrb[0].mxu0
        %3185 = vmatprep.mubr.bf16.mxu0 0
        %3186 = vmatmul.mubr.bf16.gmra.mrb[0].mxu0 %v2968
        %v3187 = vpop.f32.mrb[0].mxu0
        %v3188 = vadd.f32 0.0, %v3187
        %v3189 = vpop.f32.mrb[0].mxu0
        %v3190 = vpop.f32.mrb[0].mxu0
        %v3191 = vadd.f32 0.0, %v3190
        %v3192 = vpop.f32.mrb[0].mxu0
        %3193 = vdwg.mxu0
        %v3194 = vadd.f32 %v2720, %v3068
        %v3195 = vadd.f32 %v2721, %v3071
        %v3196 = vadd.f32 %v2722, %v3076
        %v3197 = vadd.f32 %v2723, %v3079
        %v3198 = vadd.f32 %v2724, %v3084
        %v3199 = vadd.f32 %v2725, %v3087
        %v3200 = vadd.f32 %v2726, %v3092
        %v3201 = vadd.f32 %v2727, %v3095
        %v3202 = vadd.f32 %v2728, %v3100
        %v3203 = vadd.f32 %v2729, %v3103
        %v3204 = vadd.f32 %v2730, %v3108
        %v3205 = vadd.f32 %v2731, %v3111
        %v3206 = vadd.f32 %v2732, %v3116
        %v3207 = vadd.f32 %v2733, %v3119
        %v3208 = vadd.f32 %v2734, %v3124
        %v3209 = vadd.f32 %v2735, %v3127
        %v3210 = vadd.f32 %v2736, %v3132
        %v3211 = vadd.f32 %v2737, %v3135
        %v3212 = vadd.f32 %v2738, %v3140
        %v3213 = vadd.f32 %v2739, %v3143
        %v3214 = vadd.f32 %v2740, %v3148
        %v3215 = vadd.f32 %v2741, %v3151
        %v3216 = vadd.f32 %v2742, %v3156
        %v3217 = vadd.f32 %v2743, %v3159
        %v3218 = vadd.f32 %v2744, %v3164
        %v3219 = vadd.f32 %v2745, %v3167
        %v3220 = vadd.f32 %v2746, %v3172
        %v3221 = vadd.f32 %v2747, %v3175
        %v3222 = vadd.f32 %v2748, %v3180
        %v3223 = vadd.f32 %v2749, %v3183
        %v3224 = vadd.f32 %v2750, %v3188
        %v3225 = vadd.f32 %v2751, %v3191
        %s3226 = sadd.s32 %s185, 2
        %s3227 = smul.u32 %s3226, 5
        %s3228 = smul.addr %s3227, 4
        %s3229 = scalar_lea.vmem %s182, %s3228
        %v3230 = vld [vmem:[%s3229] sm:$0xf]
        %v3231 = vld [vmem:[%s3229 + $0x4] sm:$0xf]
        %v3232 = vld [vmem:[%s3229 + $0x8] sm:$0xf]
        %v3233 = vld [vmem:[%s3229 + $0xc] sm:$0xf]
        %v3234 = vld [vmem:[%s3229 + $0x14] sm:$0xf]
        %v3235 = vld [vmem:[%s3229 + $0x18] sm:$0xf]
        %v3236 = vld [vmem:[%s3229 + $0x1c] sm:$0xf]
        %v3237 = vld [vmem:[%s3229 + $0x20] sm:$0xf]
        %v3238 = vld [vmem:[%s3229 + $0x28] sm:$0xf]
        %v3239 = vld [vmem:[%s3229 + $0x2c] sm:$0xf]
        %v3240 = vld [vmem:[%s3229 + $0x30] sm:$0xf]
        %v3241 = vld [vmem:[%s3229 + $0x34] sm:$0xf]
        %v3242 = vld [vmem:[%s3229 + $0x3c] sm:$0xf]
        %v3243 = vld [vmem:[%s3229 + $0x40] sm:$0xf]
        %v3244 = vld [vmem:[%s3229 + $0x44] sm:$0xf]
        %v3245 = vld [vmem:[%s3229 + $0x48] sm:$0xf]
        %v3246 = vld [vmem:[%s3229 + $0x50] sm:$0xf]
        %v3247 = vld [vmem:[%s3229 + $0x54] sm:$0xf]
        %v3248 = vld [vmem:[%s3229 + $0x58] sm:$0xf]
        %v3249 = vld [vmem:[%s3229 + $0x5c] sm:$0xf]
        %v3250 = vld [vmem:[%s3229 + $0x64] sm:$0xf]
        %v3251 = vld [vmem:[%s3229 + $0x68] sm:$0xf]
        %v3252 = vld [vmem:[%s3229 + $0x6c] sm:$0xf]
        %v3253 = vld [vmem:[%s3229 + $0x70] sm:$0xf]
        %v3254 = vld [vmem:[%s3229 + $0x78] sm:$0xf]
        %v3255 = vld [vmem:[%s3229 + $0x7c] sm:$0xf]
        %v3256 = vld [vmem:[%s3229 + $0x80] sm:$0xf]
        %v3257 = vld [vmem:[%s3229 + $0x84] sm:$0xf]
        %v3258 = vld [vmem:[%s3229 + $0x8c] sm:$0xf]
        %v3259 = vld [vmem:[%s3229 + $0x90] sm:$0xf]
        %v3260 = vld [vmem:[%s3229 + $0x94] sm:$0xf]
        %v3261 = vld [vmem:[%s3229 + $0x98] sm:$0xf]
        %s3262 = scalar_lea.vmem %s1, 384
        %v3263 = vld [vmem:[%s3262] sm:$0xf]
        %v3264 = vld [vmem:[%s3262 + $0x4] sm:$0xf]
        %v3265 = vld [vmem:[%s3262 + $0x8] sm:$0xf]
        %v3266 = vld [vmem:[%s3262 + $0xc] sm:$0xf]
        %v3267 = vld [vmem:[%s3262 + $0x10] sm:$0xf]
        %v3268 = vld [vmem:[%s3262 + $0x14] sm:$0xf]
        %v3269 = vld [vmem:[%s3262 + $0x18] sm:$0xf]
        %v3270 = vld [vmem:[%s3262 + $0x1c] sm:$0xf]
        %v3271 = vld [vmem:[%s3262 + $0x20] sm:$0xf]
        %v3272 = vld [vmem:[%s3262 + $0x24] sm:$0xf]
        %v3273 = vld [vmem:[%s3262 + $0x28] sm:$0xf]
        %v3274 = vld [vmem:[%s3262 + $0x2c] sm:$0xf]
        %v3275 = vld [vmem:[%s3262 + $0x30] sm:$0xf]
        %v3276 = vld [vmem:[%s3262 + $0x34] sm:$0xf]
        %v3277 = vld [vmem:[%s3262 + $0x38] sm:$0xf]
        %v3278 = vld [vmem:[%s3262 + $0x3c] sm:$0xf]
        %v3311 = vunpack.c.l.b16 %v3230
        %v3312 = vunpack.c.l.b16 %v3231
        %v3313 = vunpack.c.l.b16 %v3232
        %v3314 = vunpack.c.l.b16 %v3233
        %v3315 = vunpack.c.l.b16 %v3234
        %v3316 = vunpack.c.l.b16 %v3235
        %v3317 = vunpack.c.l.b16 %v3236
        %v3318 = vunpack.c.l.b16 %v3237
        %v3319 = vunpack.c.l.b16 %v3238
        %v3320 = vunpack.c.l.b16 %v3239
        %v3321 = vunpack.c.l.b16 %v3240
        %v3322 = vunpack.c.l.b16 %v3241
        %v3323 = vunpack.c.l.b16 %v3242
        %v3324 = vunpack.c.l.b16 %v3243
        %v3325 = vunpack.c.l.b16 %v3244
        %v3326 = vunpack.c.l.b16 %v3245
        %v3327 = vunpack.c.l.b16 %v3246
        %v3328 = vunpack.c.l.b16 %v3247
        %v3329 = vunpack.c.l.b16 %v3248
        %v3330 = vunpack.c.l.b16 %v3249
        %v3331 = vunpack.c.l.b16 %v3250
        %v3332 = vunpack.c.l.b16 %v3251
        %v3333 = vunpack.c.l.b16 %v3252
        %v3334 = vunpack.c.l.b16 %v3253
        %v3335 = vunpack.c.l.b16 %v3254
        %v3336 = vunpack.c.l.b16 %v3255
        %v3337 = vunpack.c.l.b16 %v3256
        %v3338 = vunpack.c.l.b16 %v3257
        %v3339 = vunpack.c.l.b16 %v3258
        %v3340 = vunpack.c.l.b16 %v3259
        %v3341 = vunpack.c.l.b16 %v3260
        %v3342 = vunpack.c.l.b16 %v3261
        %v3343 = vpack.c.b16 %v3312, %v3311
        %v3344 = vpack.c.b16 %v3314, %v3313
        %v3345 = vpack.c.b16 %v3316, %v3315
        %v3346 = vpack.c.b16 %v3318, %v3317
        %v3347 = vpack.c.b16 %v3320, %v3319
        %v3348 = vpack.c.b16 %v3322, %v3321
        %v3349 = vpack.c.b16 %v3324, %v3323
        %v3350 = vpack.c.b16 %v3326, %v3325
        %v3351 = vpack.c.b16 %v3328, %v3327
        %v3352 = vpack.c.b16 %v3330, %v3329
        %v3353 = vpack.c.b16 %v3332, %v3331
        %v3354 = vpack.c.b16 %v3334, %v3333
        %v3355 = vpack.c.b16 %v3336, %v3335
        %v3356 = vpack.c.b16 %v3338, %v3337
        %v3357 = vpack.c.b16 %v3340, %v3339
        %v3358 = vpack.c.b16 %v3342, %v3341
        %v3391 = vunpack.c.l.b16 %v3263
        %v3392 = vunpack.c.l.b16 %v3264
        %v3393 = vunpack.c.l.b16 %v3265
        %v3394 = vunpack.c.l.b16 %v3266
        %v3395 = vunpack.c.l.b16 %v3267
        %v3396 = vunpack.c.l.b16 %v3268
        %v3397 = vunpack.c.l.b16 %v3269
        %v3398 = vunpack.c.l.b16 %v3270
        %v3399 = vunpack.c.l.b16 %v3271
        %v3400 = vunpack.c.l.b16 %v3272
        %v3401 = vunpack.c.l.b16 %v3273
        %v3402 = vunpack.c.l.b16 %v3274
        %v3403 = vunpack.c.l.b16 %v3275
        %v3404 = vunpack.c.l.b16 %v3276
        %v3405 = vunpack.c.l.b16 %v3277
        %v3406 = vunpack.c.l.b16 %v3278
        %v3407 = vpack.c.b16 %v3392, %v3391
        %v3408 = vpack.c.b16 %v3394, %v3393
        %v3409 = vpack.c.b16 %v3396, %v3395
        %v3410 = vpack.c.b16 %v3398, %v3397
        %v3411 = vpack.c.b16 %v3400, %v3399
        %v3412 = vpack.c.b16 %v3402, %v3401
        %v3413 = vpack.c.b16 %v3404, %v3403
        %v3414 = vpack.c.b16 %v3406, %v3405
        %3423 = vmatprep.subr.bf16.mxu0 0
        %3424 = vmatpush1.bf16.msra.mxu0 %v3407
        %3425 = vmatprep.subr.bf16.mxu0 0
        %3426 = vmatpush1.bf16.msra.mxu0 %v3408
        %3427 = vmatprep.subr.bf16.mxu0 0
        %3428 = vmatpush1.bf16.msra.mxu0 %v3409
        %3429 = vmatprep.subr.bf16.mxu0 0
        %3430 = vmatpush1.bf16.msra.mxu0 %v3410
        %3431 = vmatprep.subr.bf16.mxu0 0
        %3432 = vmatpush1.bf16.msra.mxu0 %v3411
        %3433 = vmatprep.subr.bf16.mxu0 0
        %3434 = vmatpush1.bf16.msra.mxu0 %v3412
        %3435 = vmatprep.subr.bf16.mxu0 0
        %3436 = vmatpush1.bf16.msra.mxu0 %v3413
        %3437 = vmatprep.subr.bf16.mxu0 0
        %3438 = vmatpush1.bf16.msra.mxu0 %v3414
        %3439 = vmatprep.subr.bf16.mxu0 0
        %3440 = vmatpush1.bf16.msra.mxu0 0
        %3441 = vmatprep.subr.bf16.mxu0 0
        %3442 = vmatpush1.bf16.msra.mxu0 0
        %3443 = vmatprep.subr.bf16.mxu0 0
        %3444 = vmatpush1.bf16.msra.mxu0 0
        %3445 = vmatprep.subr.bf16.mxu0 0
        %3446 = vmatpush1.bf16.msra.mxu0 0
        %3447 = vmatprep.subr.bf16.mxu0 0
        %3448 = vmatpush1.bf16.msra.mxu0 0
        %3449 = vmatprep.subr.bf16.mxu0 0
        %3450 = vmatpush1.bf16.msra.mxu0 0
        %3451 = vmatprep.subr.bf16.mxu0 0
        %3452 = vmatpush1.bf16.msra.mxu0 0
        %3453 = vmatprep.subr.bf16.mxu0 0
        %3454 = vmatpush1.bf16.msra.mxu0 0
        %3455 = vmatprep.mubr.bf16.mxu0 0
        %3456 = vmatmul.mubr.bf16.gmra.mrb[0].mxu0 %v3343
        %v3457 = vpop.f32.mrb[0].mxu0
        %v3458 = vadd.f32 0.0, %v3457
        %v3459 = vpop.f32.mrb[0].mxu0
        %v3460 = vpop.f32.mrb[0].mxu0
        %v3461 = vadd.f32 0.0, %v3460
        %v3462 = vpop.f32.mrb[0].mxu0
        %3463 = vmatprep.mubr.bf16.mxu0 0
        %3464 = vmatmul.mubr.bf16.gmra.mrb[0].mxu0 %v3344
        %v3465 = vpop.f32.mrb[0].mxu0
        %v3466 = vadd.f32 0.0, %v3465
        %v3467 = vpop.f32.mrb[0].mxu0
        %v3468 = vpop.f32.mrb[0].mxu0
        %v3469 = vadd.f32 0.0, %v3468
        %v3470 = vpop.f32.mrb[0].mxu0
        %3471 = vmatprep.mubr.bf16.mxu0 0
        %3472 = vmatmul.mubr.bf16.gmra.mrb[0].mxu0 %v3345
        %v3473 = vpop.f32.mrb[0].mxu0
        %v3474 = vadd.f32 0.0, %v3473
        %v3475 = vpop.f32.mrb[0].mxu0
        %v3476 = vpop.f32.mrb[0].mxu0
        %v3477 = vadd.f32 0.0, %v3476
        %v3478 = vpop.f32.mrb[0].mxu0
        %3479 = vmatprep.mubr.bf16.mxu0 0
        %3480 = vmatmul.mubr.bf16.gmra.mrb[0].mxu0 %v3346
        %v3481 = vpop.f32.mrb[0].mxu0
        %v3482 = vadd.f32 0.0, %v3481
        %v3483 = vpop.f32.mrb[0].mxu0
        %v3484 = vpop.f32.mrb[0].mxu0
        %v3485 = vadd.f32 0.0, %v3484
        %v3486 = vpop.f32.mrb[0].mxu0
        %3487 = vmatprep.mubr.bf16.mxu0 0
        %3488 = vmatmul.mubr.bf16.gmra.mrb[0].mxu0 %v3347
        %v3489 = vpop.f32.mrb[0].mxu0
        %v3490 = vadd.f32 0.0, %v3489
        %v3491 = vpop.f32.mrb[0].mxu0
        %v3492 = vpop.f32.mrb[0].mxu0
        %v3493 = vadd.f32 0.0, %v3492
        %v3494 = vpop.f32.mrb[0].mxu0
        %3495 = vmatprep.mubr.bf16.mxu0 0
        %3496 = vmatmul.mubr.bf16.gmra.mrb[0].mxu0 %v3348
        %v3497 = vpop.f32.mrb[0].mxu0
        %v3498 = vadd.f32 0.0, %v3497
        %v3499 = vpop.f32.mrb[0].mxu0
        %v3500 = vpop.f32.mrb[0].mxu0
        %v3501 = vadd.f32 0.0, %v3500
        %v3502 = vpop.f32.mrb[0].mxu0
        %3503 = vmatprep.mubr.bf16.mxu0 0
        %3504 = vmatmul.mubr.bf16.gmra.mrb[0].mxu0 %v3349
        %v3505 = vpop.f32.mrb[0].mxu0
        %v3506 = vadd.f32 0.0, %v3505
        %v3507 = vpop.f32.mrb[0].mxu0
        %v3508 = vpop.f32.mrb[0].mxu0
        %v3509 = vadd.f32 0.0, %v3508
        %v3510 = vpop.f32.mrb[0].mxu0
        %3511 = vmatprep.mubr.bf16.mxu0 0
        %3512 = vmatmul.mubr.bf16.gmra.mrb[0].mxu0 %v3350
        %v3513 = vpop.f32.mrb[0].mxu0
        %v3514 = vadd.f32 0.0, %v3513
        %v3515 = vpop.f32.mrb[0].mxu0
        %v3516 = vpop.f32.mrb[0].mxu0
        %v3517 = vadd.f32 0.0, %v3516
        %v3518 = vpop.f32.mrb[0].mxu0
        %3519 = vmatprep.mubr.bf16.mxu0 0
        %3520 = vmatmul.mubr.bf16.gmra.mrb[0].mxu0 %v3351
        %v3521 = vpop.f32.mrb[0].mxu0
        %v3522 = vadd.f32 0.0, %v3521
        %v3523 = vpop.f32.mrb[0].mxu0
        %v3524 = vpop.f32.mrb[0].mxu0
        %v3525 = vadd.f32 0.0, %v3524
        %v3526 = vpop.f32.mrb[0].mxu0
        %3527 = vmatprep.mubr.bf16.mxu0 0
        %3528 = vmatmul.mubr.bf16.gmra.mrb[0].mxu0 %v3352
        %v3529 = vpop.f32.mrb[0].mxu0
        %v3530 = vadd.f32 0.0, %v3529
        %v3531 = vpop.f32.mrb[0].mxu0
        %v3532 = vpop.f32.mrb[0].mxu0
        %v3533 = vadd.f32 0.0, %v3532
        %v3534 = vpop.f32.mrb[0].mxu0
        %3535 = vmatprep.mubr.bf16.mxu0 0
        %3536 = vmatmul.mubr.bf16.gmra.mrb[0].mxu0 %v3353
        %v3537 = vpop.f32.mrb[0].mxu0
        %v3538 = vadd.f32 0.0, %v3537
        %v3539 = vpop.f32.mrb[0].mxu0
        %v3540 = vpop.f32.mrb[0].mxu0
        %v3541 = vadd.f32 0.0, %v3540
        %v3542 = vpop.f32.mrb[0].mxu0
        %3543 = vmatprep.mubr.bf16.mxu0 0
        %3544 = vmatmul.mubr.bf16.gmra.mrb[0].mxu0 %v3354
        %v3545 = vpop.f32.mrb[0].mxu0
        %v3546 = vadd.f32 0.0, %v3545
        %v3547 = vpop.f32.mrb[0].mxu0
        %v3548 = vpop.f32.mrb[0].mxu0
        %v3549 = vadd.f32 0.0, %v3548
        %v3550 = vpop.f32.mrb[0].mxu0
        %3551 = vmatprep.mubr.bf16.mxu0 0
        %3552 = vmatmul.mubr.bf16.gmra.mrb[0].mxu0 %v3355
        %v3553 = vpop.f32.mrb[0].mxu0
        %v3554 = vadd.f32 0.0, %v3553
        %v3555 = vpop.f32.mrb[0].mxu0
        %v3556 = vpop.f32.mrb[0].mxu0
        %v3557 = vadd.f32 0.0, %v3556
        %v3558 = vpop.f32.mrb[0].mxu0
        %3559 = vmatprep.mubr.bf16.mxu0 0
        %3560 = vmatmul.mubr.bf16.gmra.mrb[0].mxu0 %v3356
        %v3561 = vpop.f32.mrb[0].mxu0
        %v3562 = vadd.f32 0.0, %v3561
        %v3563 = vpop.f32.mrb[0].mxu0
        %v3564 = vpop.f32.mrb[0].mxu0
        %v3565 = vadd.f32 0.0, %v3564
        %v3566 = vpop.f32.mrb[0].mxu0
        %3567 = vmatprep.mubr.bf16.mxu0 0
        %3568 = vmatmul.mubr.bf16.gmra.mrb[0].mxu0 %v3357
        %v3569 = vpop.f32.mrb[0].mxu0
        %v3570 = vadd.f32 0.0, %v3569
        %v3571 = vpop.f32.mrb[0].mxu0
        %v3572 = vpop.f32.mrb[0].mxu0
        %v3573 = vadd.f32 0.0, %v3572
        %v3574 = vpop.f32.mrb[0].mxu0
        %3575 = vmatprep.mubr.bf16.mxu0 0
        %3576 = vmatmul.mubr.bf16.gmra.mrb[0].mxu0 %v3358
        %v3577 = vpop.f32.mrb[0].mxu0
        %v3578 = vadd.f32 0.0, %v3577
        %v3579 = vpop.f32.mrb[0].mxu0
        %v3580 = vpop.f32.mrb[0].mxu0
        %v3581 = vadd.f32 0.0, %v3580
        %v3582 = vpop.f32.mrb[0].mxu0
        %3583 = vdwg.mxu0
        %v3584 = vadd.f32 %v3194, %v3458
        %v3585 = vadd.f32 %v3195, %v3461
        %v3586 = vadd.f32 %v3196, %v3466
        %v3587 = vadd.f32 %v3197, %v3469
        %v3588 = vadd.f32 %v3198, %v3474
        %v3589 = vadd.f32 %v3199, %v3477
        %v3590 = vadd.f32 %v3200, %v3482
        %v3591 = vadd.f32 %v3201, %v3485
        %v3592 = vadd.f32 %v3202, %v3490
        %v3593 = vadd.f32 %v3203, %v3493
        %v3594 = vadd.f32 %v3204, %v3498
        %v3595 = vadd.f32 %v3205, %v3501
        %v3596 = vadd.f32 %v3206, %v3506
        %v3597 = vadd.f32 %v3207, %v3509
        %v3598 = vadd.f32 %v3208, %v3514
        %v3599 = vadd.f32 %v3209, %v3517
        %v3600 = vadd.f32 %v3210, %v3522
        %v3601 = vadd.f32 %v3211, %v3525
        %v3602 = vadd.f32 %v3212, %v3530
        %v3603 = vadd.f32 %v3213, %v3533
        %v3604 = vadd.f32 %v3214, %v3538
        %v3605 = vadd.f32 %v3215, %v3541
        %v3606 = vadd.f32 %v3216, %v3546
        %v3607 = vadd.f32 %v3217, %v3549
        %v3608 = vadd.f32 %v3218, %v3554
        %v3609 = vadd.f32 %v3219, %v3557
        %v3610 = vadd.f32 %v3220, %v3562
        %v3611 = vadd.f32 %v3221, %v3565
        %v3612 = vadd.f32 %v3222, %v3570
        %v3613 = vadd.f32 %v3223, %v3573
        %v3614 = vadd.f32 %v3224, %v3578
        %v3615 = vadd.f32 %v3225, %v3581
        %v3616 = vld [vmem:[%s3229] sm:$0xf]
        %v3617 = vld [vmem:[%s3229 + $0x4] sm:$0xf]
        %v3618 = vld [vmem:[%s3229 + $0x8] sm:$0xf]
        %v3619 = vld [vmem:[%s3229 + $0xc] sm:$0xf]
        %v3620 = vld [vmem:[%s3229 + $0x10] sm:$0x1]
        %v3621 = vld [vmem:[%s3229 + $0x14] sm:$0xf]
        %v3622 = vld [vmem:[%s3229 + $0x18] sm:$0xf]
        %v3623 = vld [vmem:[%s3229 + $0x1c] sm:$0xf]
        %v3624 = vld [vmem:[%s3229 + $0x20] sm:$0xf]
        %v3625 = vld [vmem:[%s3229 + $0x24] sm:$0x1]
        %v3626 = vld [vmem:[%s3229 + $0x28] sm:$0xf]
        %v3627 = vld [vmem:[%s3229 + $0x2c] sm:$0xf]
        %v3628 = vld [vmem:[%s3229 + $0x30] sm:$0xf]
        %v3629 = vld [vmem:[%s3229 + $0x34] sm:$0xf]
        %v3630 = vld [vmem:[%s3229 + $0x38] sm:$0x1]
        %v3631 = vld [vmem:[%s3229 + $0x3c] sm:$0xf]
        %v3632 = vld [vmem:[%s3229 + $0x40] sm:$0xf]
        %v3633 = vld [vmem:[%s3229 + $0x44] sm:$0xf]
        %v3634 = vld [vmem:[%s3229 + $0x48] sm:$0xf]
        %v3635 = vld [vmem:[%s3229 + $0x4c] sm:$0x1]
        %v3636 = vld [vmem:[%s3229 + $0x50] sm:$0xf]
        %v3637 = vld [vmem:[%s3229 + $0x54] sm:$0xf]
        %v3638 = vld [vmem:[%s3229 + $0x58] sm:$0xf]
        %v3639 = vld [vmem:[%s3229 + $0x5c] sm:$0xf]
        %v3640 = vld [vmem:[%s3229 + $0x60] sm:$0x1]
        %v3641 = vld [vmem:[%s3229 + $0x64] sm:$0xf]
        %v3642 = vld [vmem:[%s3229 + $0x68] sm:$0xf]
        %v3643 = vld [vmem:[%s3229 + $0x6c] sm:$0xf]
        %v3644 = vld [vmem:[%s3229 + $0x70] sm:$0xf]
        %v3645 = vld [vmem:[%s3229 + $0x74] sm:$0x1]
        %v3646 = vld [vmem:[%s3229 + $0x78] sm:$0xf]
        %v3647 = vld [vmem:[%s3229 + $0x7c] sm:$0xf]
        %v3648 = vld [vmem:[%s3229 + $0x80] sm:$0xf]
        %v3649 = vld [vmem:[%s3229 + $0x84] sm:$0xf]
        %v3650 = vld [vmem:[%s3229 + $0x88] sm:$0x1]
        %v3651 = vld [vmem:[%s3229 + $0x8c] sm:$0xf]
        %v3652 = vld [vmem:[%s3229 + $0x90] sm:$0xf]
        %v3653 = vld [vmem:[%s3229 + $0x94] sm:$0xf]
        %v3654 = vld [vmem:[%s3229 + $0x98] sm:$0xf]
        %v3655 = vld [vmem:[%s3229 + $0x9c] sm:$0x1]
        %v3657 = vshrl.u32 %v3616, 16
        %v3659 = vrot.slane %v3657, 4
        %v3660 = vshll.u32 %v3616, 16
        %v3662 = vrot.slane %v3660, 5
        %v3663 = vor.u32 %v3659, %v3662
        %v3664 = vrot.slane %v3663, 4
        %v3666 = vshll.u32 %v3617, 16
        %v3668 = vrot.slane %v3666, 5
        %v3669 = vsel %vm247, %v3664, %v3668
        %v3670 = vshrl.u32 %v3617, 16
        %v3672 = vrot.slane %v3670, 4
        %v3673 = vor.u32 %v3672, %v3668
        %v3674 = vrot.slane %v3673, 4
        %v3676 = vshll.u32 %v3618, 16
        %v3678 = vrot.slane %v3676, 5
        %v3679 = vsel %vm247, %v3674, %v3678
        %v3680 = vshrl.u32 %v3618, 16
        %v3682 = vrot.slane %v3680, 4
        %v3683 = vor.u32 %v3682, %v3678
        %v3684 = vrot.slane %v3683, 4
        %v3686 = vshll.u32 %v3619, 16
        %v3688 = vrot.slane %v3686, 5
        %v3689 = vsel %vm247, %v3684, %v3688
        %v3690 = vshrl.u32 %v3619, 16
        %v3692 = vrot.slane %v3690, 4
        %v3693 = vor.u32 %v3692, %v3688
        %v3694 = vrot.slane %v3693, 4
        %v3696 = vshll.u32 %v3620, 16
        %v3698 = vrot.slane %v3696, 5
        %v3699 = vsel %vm247, %v3694, %v3698
        %v3701 = vshrl.u32 %v3621, 16
        %v3703 = vrot.slane %v3701, 4
        %v3704 = vshll.u32 %v3621, 16
        %v3706 = vrot.slane %v3704, 5
        %v3707 = vor.u32 %v3703, %v3706
        %v3708 = vrot.slane %v3707, 4
        %v3710 = vshll.u32 %v3622, 16
        %v3712 = vrot.slane %v3710, 5
        %v3713 = vsel %vm247, %v3708, %v3712
        %v3714 = vshrl.u32 %v3622, 16
        %v3716 = vrot.slane %v3714, 4
        %v3717 = vor.u32 %v3716, %v3712
        %v3718 = vrot.slane %v3717, 4
        %v3720 = vshll.u32 %v3623, 16
        %v3722 = vrot.slane %v3720, 5
        %v3723 = vsel %vm247, %v3718, %v3722
        %v3724 = vshrl.u32 %v3623, 16
        %v3726 = vrot.slane %v3724, 4
        %v3727 = vor.u32 %v3726, %v3722
        %v3728 = vrot.slane %v3727, 4
        %v3730 = vshll.u32 %v3624, 16
        %v3732 = vrot.slane %v3730, 5
        %v3733 = vsel %vm247, %v3728, %v3732
        %v3734 = vshrl.u32 %v3624, 16
        %v3736 = vrot.slane %v3734, 4
        %v3737 = vor.u32 %v3736, %v3732
        %v3738 = vrot.slane %v3737, 4
        %v3740 = vshll.u32 %v3625, 16
        %v3742 = vrot.slane %v3740, 5
        %v3743 = vsel %vm247, %v3738, %v3742
        %v3745 = vshrl.u32 %v3626, 16
        %v3747 = vrot.slane %v3745, 4
        %v3748 = vshll.u32 %v3626, 16
        %v3750 = vrot.slane %v3748, 5
        %v3751 = vor.u32 %v3747, %v3750
        %v3752 = vrot.slane %v3751, 4
        %v3754 = vshll.u32 %v3627, 16
        %v3756 = vrot.slane %v3754, 5
        %v3757 = vsel %vm247, %v3752, %v3756
        %v3758 = vshrl.u32 %v3627, 16
        %v3760 = vrot.slane %v3758, 4
        %v3761 = vor.u32 %v3760, %v3756
        %v3762 = vrot.slane %v3761, 4
        %v3764 = vshll.u32 %v3628, 16
        %v3766 = vrot.slane %v3764, 5
        %v3767 = vsel %vm247, %v3762, %v3766
        %v3768 = vshrl.u32 %v3628, 16
        %v3770 = vrot.slane %v3768, 4
        %v3771 = vor.u32 %v3770, %v3766
        %v3772 = vrot.slane %v3771, 4
        %v3774 = vshll.u32 %v3629, 16
        %v3776 = vrot.slane %v3774, 5
        %v3777 = vsel %vm247, %v3772, %v3776
        %v3778 = vshrl.u32 %v3629, 16
        %v3780 = vrot.slane %v3778, 4
        %v3781 = vor.u32 %v3780, %v3776
        %v3782 = vrot.slane %v3781, 4
        %v3784 = vshll.u32 %v3630, 16
        %v3786 = vrot.slane %v3784, 5
        %v3787 = vsel %vm247, %v3782, %v3786
        %v3789 = vshrl.u32 %v3631, 16
        %v3791 = vrot.slane %v3789, 4
        %v3792 = vshll.u32 %v3631, 16
        %v3794 = vrot.slane %v3792, 5
        %v3795 = vor.u32 %v3791, %v3794
        %v3796 = vrot.slane %v3795, 4
        %v3798 = vshll.u32 %v3632, 16
        %v3800 = vrot.slane %v3798, 5
        %v3801 = vsel %vm247, %v3796, %v3800
        %v3802 = vshrl.u32 %v3632, 16
        %v3804 = vrot.slane %v3802, 4
        %v3805 = vor.u32 %v3804, %v3800
        %v3806 = vrot.slane %v3805, 4
        %v3808 = vshll.u32 %v3633, 16
        %v3810 = vrot.slane %v3808, 5
        %v3811 = vsel %vm247, %v3806, %v3810
        %v3812 = vshrl.u32 %v3633, 16
        %v3814 = vrot.slane %v3812, 4
        %v3815 = vor.u32 %v3814, %v3810
        %v3816 = vrot.slane %v3815, 4
        %v3818 = vshll.u32 %v3634, 16
        %v3820 = vrot.slane %v3818, 5
        %v3821 = vsel %vm247, %v3816, %v3820
        %v3822 = vshrl.u32 %v3634, 16
        %v3824 = vrot.slane %v3822, 4
        %v3825 = vor.u32 %v3824, %v3820
        %v3826 = vrot.slane %v3825, 4
        %v3828 = vshll.u32 %v3635, 16
        %v3830 = vrot.slane %v3828, 5
        %v3831 = vsel %vm247, %v3826, %v3830
        %v3833 = vshrl.u32 %v3636, 16
        %v3835 = vrot.slane %v3833, 4
        %v3836 = vshll.u32 %v3636, 16
        %v3838 = vrot.slane %v3836, 5
        %v3839 = vor.u32 %v3835, %v3838
        %v3840 = vrot.slane %v3839, 4
        %v3842 = vshll.u32 %v3637, 16
        %v3844 = vrot.slane %v3842, 5
        %v3845 = vsel %vm247, %v3840, %v3844
        %v3846 = vshrl.u32 %v3637, 16
        %v3848 = vrot.slane %v3846, 4
        %v3849 = vor.u32 %v3848, %v3844
        %v3850 = vrot.slane %v3849, 4
        %v3852 = vshll.u32 %v3638, 16
        %v3854 = vrot.slane %v3852, 5
        %v3855 = vsel %vm247, %v3850, %v3854
        %v3856 = vshrl.u32 %v3638, 16
        %v3858 = vrot.slane %v3856, 4
        %v3859 = vor.u32 %v3858, %v3854
        %v3860 = vrot.slane %v3859, 4
        %v3862 = vshll.u32 %v3639, 16
        %v3864 = vrot.slane %v3862, 5
        %v3865 = vsel %vm247, %v3860, %v3864
        %v3866 = vshrl.u32 %v3639, 16
        %v3868 = vrot.slane %v3866, 4
        %v3869 = vor.u32 %v3868, %v3864
        %v3870 = vrot.slane %v3869, 4
        %v3872 = vshll.u32 %v3640, 16
        %v3874 = vrot.slane %v3872, 5
        %v3875 = vsel %vm247, %v3870, %v3874
        %v3877 = vshrl.u32 %v3641, 16
        %v3879 = vrot.slane %v3877, 4
        %v3880 = vshll.u32 %v3641, 16
        %v3882 = vrot.slane %v3880, 5
        %v3883 = vor.u32 %v3879, %v3882
        %v3884 = vrot.slane %v3883, 4
        %v3886 = vshll.u32 %v3642, 16
        %v3888 = vrot.slane %v3886, 5
        %v3889 = vsel %vm247, %v3884, %v3888
        %v3890 = vshrl.u32 %v3642, 16
        %v3892 = vrot.slane %v3890, 4
        %v3893 = vor.u32 %v3892, %v3888
        %v3894 = vrot.slane %v3893, 4
        %v3896 = vshll.u32 %v3643, 16
        %v3898 = vrot.slane %v3896, 5
        %v3899 = vsel %vm247, %v3894, %v3898
        %v3900 = vshrl.u32 %v3643, 16
        %v3902 = vrot.slane %v3900, 4
        %v3903 = vor.u32 %v3902, %v3898
        %v3904 = vrot.slane %v3903, 4
        %v3906 = vshll.u32 %v3644, 16
        %v3908 = vrot.slane %v3906, 5
        %v3909 = vsel %vm247, %v3904, %v3908
        %v3910 = vshrl.u32 %v3644, 16
        %v3912 = vrot.slane %v3910, 4
        %v3913 = vor.u32 %v3912, %v3908
        %v3914 = vrot.slane %v3913, 4
        %v3916 = vshll.u32 %v3645, 16
        %v3918 = vrot.slane %v3916, 5
        %v3919 = vsel %vm247, %v3914, %v3918
        %v3921 = vshrl.u32 %v3646, 16
        %v3923 = vrot.slane %v3921, 4
        %v3924 = vshll.u32 %v3646, 16
        %v3926 = vrot.slane %v3924, 5
        %v3927 = vor.u32 %v3923, %v3926
        %v3928 = vrot.slane %v3927, 4
        %v3930 = vshll.u32 %v3647, 16
        %v3932 = vrot.slane %v3930, 5
        %v3933 = vsel %vm247, %v3928, %v3932
        %v3934 = vshrl.u32 %v3647, 16
        %v3936 = vrot.slane %v3934, 4
        %v3937 = vor.u32 %v3936, %v3932
        %v3938 = vrot.slane %v3937, 4
        %v3940 = vshll.u32 %v3648, 16
        %v3942 = vrot.slane %v3940, 5
        %v3943 = vsel %vm247, %v3938, %v3942
        %v3944 = vshrl.u32 %v3648, 16
        %v3946 = vrot.slane %v3944, 4
        %v3947 = vor.u32 %v3946, %v3942
        %v3948 = vrot.slane %v3947, 4
        %v3950 = vshll.u32 %v3649, 16
        %v3952 = vrot.slane %v3950, 5
        %v3953 = vsel %vm247, %v3948, %v3952
        %v3954 = vshrl.u32 %v3649, 16
        %v3956 = vrot.slane %v3954, 4
        %v3957 = vor.u32 %v3956, %v3952
        %v3958 = vrot.slane %v3957, 4
        %v3960 = vshll.u32 %v3650, 16
        %v3962 = vrot.slane %v3960, 5
        %v3963 = vsel %vm247, %v3958, %v3962
        %v3965 = vshrl.u32 %v3651, 16
        %v3967 = vrot.slane %v3965, 4
        %v3968 = vshll.u32 %v3651, 16
        %v3970 = vrot.slane %v3968, 5
        %v3971 = vor.u32 %v3967, %v3970
        %v3972 = vrot.slane %v3971, 4
        %v3974 = vshll.u32 %v3652, 16
        %v3976 = vrot.slane %v3974, 5
        %v3977 = vsel %vm247, %v3972, %v3976
        %v3978 = vshrl.u32 %v3652, 16
        %v3980 = vrot.slane %v3978, 4
        %v3981 = vor.u32 %v3980, %v3976
        %v3982 = vrot.slane %v3981, 4
        %v3984 = vshll.u32 %v3653, 16
        %v3986 = vrot.slane %v3984, 5
        %v3987 = vsel %vm247, %v3982, %v3986
        %v3988 = vshrl.u32 %v3653, 16
        %v3990 = vrot.slane %v3988, 4
        %v3991 = vor.u32 %v3990, %v3986
        %v3992 = vrot.slane %v3991, 4
        %v3994 = vshll.u32 %v3654, 16
        %v3996 = vrot.slane %v3994, 5
        %v3997 = vsel %vm247, %v3992, %v3996
        %v3998 = vshrl.u32 %v3654, 16
        %v4000 = vrot.slane %v3998, 4
        %v4001 = vor.u32 %v4000, %v3996
        %v4002 = vrot.slane %v4001, 4
        %v4004 = vshll.u32 %v3655, 16
        %v4006 = vrot.slane %v4004, 5
        %v4007 = vsel %vm247, %v4002, %v4006
        %s4008 = scalar_lea.vmem %s1, 448
        %v4009 = vld [vmem:[%s4008] sm:$0xf]
        %v4010 = vld [vmem:[%s4008 + $0x4] sm:$0xf]
        %v4011 = vld [vmem:[%s4008 + $0x8] sm:$0xf]
        %v4012 = vld [vmem:[%s4008 + $0xc] sm:$0xf]
        %v4013 = vld [vmem:[%s4008 + $0x10] sm:$0xf]
        %v4014 = vld [vmem:[%s4008 + $0x14] sm:$0xf]
        %v4015 = vld [vmem:[%s4008 + $0x18] sm:$0xf]
        %v4016 = vld [vmem:[%s4008 + $0x1c] sm:$0xf]
        %v4017 = vld [vmem:[%s4008 + $0x20] sm:$0xf]
        %v4018 = vld [vmem:[%s4008 + $0x24] sm:$0xf]
        %v4019 = vld [vmem:[%s4008 + $0x28] sm:$0xf]
        %v4020 = vld [vmem:[%s4008 + $0x2c] sm:$0xf]
        %v4021 = vld [vmem:[%s4008 + $0x30] sm:$0xf]
        %v4022 = vld [vmem:[%s4008 + $0x34] sm:$0xf]
        %v4023 = vld [vmem:[%s4008 + $0x38] sm:$0xf]
        %v4024 = vld [vmem:[%s4008 + $0x3c] sm:$0xf]
        %v4025 = vunpack.c.l.b16 %v3669
        %v4026 = vunpack.c.l.b16 %v3679
        %v4027 = vunpack.c.l.b16 %v3689
        %v4028 = vunpack.c.l.b16 %v3699
        %v4029 = vunpack.c.l.b16 %v3713
        %v4030 = vunpack.c.l.b16 %v3723
        %v4031 = vunpack.c.l.b16 %v3733
        %v4032 = vunpack.c.l.b16 %v3743
        %v4033 = vunpack.c.l.b16 %v3757
        %v4034 = vunpack.c.l.b16 %v3767
        %v4035 = vunpack.c.l.b16 %v3777
        %v4036 = vunpack.c.l.b16 %v3787
        %v4037 = vunpack.c.l.b16 %v3801
        %v4038 = vunpack.c.l.b16 %v3811
        %v4039 = vunpack.c.l.b16 %v3821
        %v4040 = vunpack.c.l.b16 %v3831
        %v4041 = vunpack.c.l.b16 %v3845
        %v4042 = vunpack.c.l.b16 %v3855
        %v4043 = vunpack.c.l.b16 %v3865
        %v4044 = vunpack.c.l.b16 %v3875
        %v4045 = vunpack.c.l.b16 %v3889
        %v4046 = vunpack.c.l.b16 %v3899
        %v4047 = vunpack.c.l.b16 %v3909
        %v4048 = vunpack.c.l.b16 %v3919
        %v4049 = vunpack.c.l.b16 %v3933
        %v4050 = vunpack.c.l.b16 %v3943
        %v4051 = vunpack.c.l.b16 %v3953
        %v4052 = vunpack.c.l.b16 %v3963
        %v4053 = vunpack.c.l.b16 %v3977
        %v4054 = vunpack.c.l.b16 %v3987
        %v4055 = vunpack.c.l.b16 %v3997
        %v4056 = vunpack.c.l.b16 %v4007
        %v4057 = vpack.c.b16 %v4026, %v4025
        %v4058 = vpack.c.b16 %v4028, %v4027
        %v4059 = vpack.c.b16 %v4030, %v4029
        %v4060 = vpack.c.b16 %v4032, %v4031
        %v4061 = vpack.c.b16 %v4034, %v4033
        %v4062 = vpack.c.b16 %v4036, %v4035
        %v4063 = vpack.c.b16 %v4038, %v4037
        %v4064 = vpack.c.b16 %v4040, %v4039
        %v4065 = vpack.c.b16 %v4042, %v4041
        %v4066 = vpack.c.b16 %v4044, %v4043
        %v4067 = vpack.c.b16 %v4046, %v4045
        %v4068 = vpack.c.b16 %v4048, %v4047
        %v4069 = vpack.c.b16 %v4050, %v4049
        %v4070 = vpack.c.b16 %v4052, %v4051
        %v4071 = vpack.c.b16 %v4054, %v4053
        %v4072 = vpack.c.b16 %v4056, %v4055
        %v4105 = vunpack.c.l.b16 %v4009
        %v4106 = vunpack.c.l.b16 %v4010
        %v4107 = vunpack.c.l.b16 %v4011
        %v4108 = vunpack.c.l.b16 %v4012
        %v4109 = vunpack.c.l.b16 %v4013
        %v4110 = vunpack.c.l.b16 %v4014
        %v4111 = vunpack.c.l.b16 %v4015
        %v4112 = vunpack.c.l.b16 %v4016
        %v4113 = vunpack.c.l.b16 %v4017
        %v4114 = vunpack.c.l.b16 %v4018
        %v4115 = vunpack.c.l.b16 %v4019
        %v4116 = vunpack.c.l.b16 %v4020
        %v4117 = vunpack.c.l.b16 %v4021
        %v4118 = vunpack.c.l.b16 %v4022
        %v4119 = vunpack.c.l.b16 %v4023
        %v4120 = vunpack.c.l.b16 %v4024
        %v4121 = vpack.c.b16 %v4106, %v4105
        %v4122 = vpack.c.b16 %v4108, %v4107
        %v4123 = vpack.c.b16 %v4110, %v4109
        %v4124 = vpack.c.b16 %v4112, %v4111
        %v4125 = vpack.c.b16 %v4114, %v4113
        %v4126 = vpack.c.b16 %v4116, %v4115
        %v4127 = vpack.c.b16 %v4118, %v4117
        %v4128 = vpack.c.b16 %v4120, %v4119
        %4137 = vmatprep.subr.bf16.mxu0 0
        %4138 = vmatpush1.bf16.msra.mxu0 %v4121
        %4139 = vmatprep.subr.bf16.mxu0 0
        %4140 = vmatpush1.bf16.msra.mxu0 %v4122
        %4141 = vmatprep.subr.bf16.mxu0 0
        %4142 = vmatpush1.bf16.msra.mxu0 %v4123
        %4143 = vmatprep.subr.bf16.mxu0 0
        %4144 = vmatpush1.bf16.msra.mxu0 %v4124
        %4145 = vmatprep.subr.bf16.mxu0 0
        %4146 = vmatpush1.bf16.msra.mxu0 %v4125
        %4147 = vmatprep.subr.bf16.mxu0 0
        %4148 = vmatpush1.bf16.msra.mxu0 %v4126
        %4149 = vmatprep.subr.bf16.mxu0 0
        %4150 = vmatpush1.bf16.msra.mxu0 %v4127
        %4151 = vmatprep.subr.bf16.mxu0 0
        %4152 = vmatpush1.bf16.msra.mxu0 %v4128
        %4153 = vmatprep.subr.bf16.mxu0 0
        %4154 = vmatpush1.bf16.msra.mxu0 0
        %4155 = vmatprep.subr.bf16.mxu0 0
        %4156 = vmatpush1.bf16.msra.mxu0 0
        %4157 = vmatprep.subr.bf16.mxu0 0
        %4158 = vmatpush1.bf16.msra.mxu0 0
        %4159 = vmatprep.subr.bf16.mxu0 0
        %4160 = vmatpush1.bf16.msra.mxu0 0
        %4161 = vmatprep.subr.bf16.mxu0 0
        %4162 = vmatpush1.bf16.msra.mxu0 0
        %4163 = vmatprep.subr.bf16.mxu0 0
        %4164 = vmatpush1.bf16.msra.mxu0 0
        %4165 = vmatprep.subr.bf16.mxu0 0
        %4166 = vmatpush1.bf16.msra.mxu0 0
        %4167 = vmatprep.subr.bf16.mxu0 0
        %4168 = vmatpush1.bf16.msra.mxu0 0
        %4169 = vmatprep.mubr.bf16.mxu0 0
        %4170 = vmatmul.mubr.bf16.gmra.mrb[0].mxu0 %v4057
        %v4171 = vpop.f32.mrb[0].mxu0
        %v4172 = vadd.f32 0.0, %v4171
        %v4173 = vpop.f32.mrb[0].mxu0
        %v4174 = vpop.f32.mrb[0].mxu0
        %v4175 = vadd.f32 0.0, %v4174
        %v4176 = vpop.f32.mrb[0].mxu0
        %4177 = vmatprep.mubr.bf16.mxu0 0
        %4178 = vmatmul.mubr.bf16.gmra.mrb[0].mxu0 %v4058
        %v4179 = vpop.f32.mrb[0].mxu0
        %v4180 = vadd.f32 0.0, %v4179
        %v4181 = vpop.f32.mrb[0].mxu0
        %v4182 = vpop.f32.mrb[0].mxu0
        %v4183 = vadd.f32 0.0, %v4182
        %v4184 = vpop.f32.mrb[0].mxu0
        %4185 = vmatprep.mubr.bf16.mxu0 0
        %4186 = vmatmul.mubr.bf16.gmra.mrb[0].mxu0 %v4059
        %v4187 = vpop.f32.mrb[0].mxu0
        %v4188 = vadd.f32 0.0, %v4187
        %v4189 = vpop.f32.mrb[0].mxu0
        %v4190 = vpop.f32.mrb[0].mxu0
        %v4191 = vadd.f32 0.0, %v4190
        %v4192 = vpop.f32.mrb[0].mxu0
        %4193 = vmatprep.mubr.bf16.mxu0 0
        %4194 = vmatmul.mubr.bf16.gmra.mrb[0].mxu0 %v4060
        %v4195 = vpop.f32.mrb[0].mxu0
        %v4196 = vadd.f32 0.0, %v4195
        %v4197 = vpop.f32.mrb[0].mxu0
        %v4198 = vpop.f32.mrb[0].mxu0
        %v4199 = vadd.f32 0.0, %v4198
        %v4200 = vpop.f32.mrb[0].mxu0
        %4201 = vmatprep.mubr.bf16.mxu0 0
        %4202 = vmatmul.mubr.bf16.gmra.mrb[0].mxu0 %v4061
        %v4203 = vpop.f32.mrb[0].mxu0
        %v4204 = vadd.f32 0.0, %v4203
        %v4205 = vpop.f32.mrb[0].mxu0
        %v4206 = vpop.f32.mrb[0].mxu0
        %v4207 = vadd.f32 0.0, %v4206
        %v4208 = vpop.f32.mrb[0].mxu0
        %4209 = vmatprep.mubr.bf16.mxu0 0
        %4210 = vmatmul.mubr.bf16.gmra.mrb[0].mxu0 %v4062
        %v4211 = vpop.f32.mrb[0].mxu0
        %v4212 = vadd.f32 0.0, %v4211
        %v4213 = vpop.f32.mrb[0].mxu0
        %v4214 = vpop.f32.mrb[0].mxu0
        %v4215 = vadd.f32 0.0, %v4214
        %v4216 = vpop.f32.mrb[0].mxu0
        %4217 = vmatprep.mubr.bf16.mxu0 0
        %4218 = vmatmul.mubr.bf16.gmra.mrb[0].mxu0 %v4063
        %v4219 = vpop.f32.mrb[0].mxu0
        %v4220 = vadd.f32 0.0, %v4219
        %v4221 = vpop.f32.mrb[0].mxu0
        %v4222 = vpop.f32.mrb[0].mxu0
        %v4223 = vadd.f32 0.0, %v4222
        %v4224 = vpop.f32.mrb[0].mxu0
        %4225 = vmatprep.mubr.bf16.mxu0 0
        %4226 = vmatmul.mubr.bf16.gmra.mrb[0].mxu0 %v4064
        %v4227 = vpop.f32.mrb[0].mxu0
        %v4228 = vadd.f32 0.0, %v4227
        %v4229 = vpop.f32.mrb[0].mxu0
        %v4230 = vpop.f32.mrb[0].mxu0
        %v4231 = vadd.f32 0.0, %v4230
        %v4232 = vpop.f32.mrb[0].mxu0
        %4233 = vmatprep.mubr.bf16.mxu0 0
        %4234 = vmatmul.mubr.bf16.gmra.mrb[0].mxu0 %v4065
        %v4235 = vpop.f32.mrb[0].mxu0
        %v4236 = vadd.f32 0.0, %v4235
        %v4237 = vpop.f32.mrb[0].mxu0
        %v4238 = vpop.f32.mrb[0].mxu0
        %v4239 = vadd.f32 0.0, %v4238
        %v4240 = vpop.f32.mrb[0].mxu0
        %4241 = vmatprep.mubr.bf16.mxu0 0
        %4242 = vmatmul.mubr.bf16.gmra.mrb[0].mxu0 %v4066
        %v4243 = vpop.f32.mrb[0].mxu0
        %v4244 = vadd.f32 0.0, %v4243
        %v4245 = vpop.f32.mrb[0].mxu0
        %v4246 = vpop.f32.mrb[0].mxu0
        %v4247 = vadd.f32 0.0, %v4246
        %v4248 = vpop.f32.mrb[0].mxu0
        %4249 = vmatprep.mubr.bf16.mxu0 0
        %4250 = vmatmul.mubr.bf16.gmra.mrb[0].mxu0 %v4067
        %v4251 = vpop.f32.mrb[0].mxu0
        %v4252 = vadd.f32 0.0, %v4251
        %v4253 = vpop.f32.mrb[0].mxu0
        %v4254 = vpop.f32.mrb[0].mxu0
        %v4255 = vadd.f32 0.0, %v4254
        %v4256 = vpop.f32.mrb[0].mxu0
        %4257 = vmatprep.mubr.bf16.mxu0 0
        %4258 = vmatmul.mubr.bf16.gmra.mrb[0].mxu0 %v4068
        %v4259 = vpop.f32.mrb[0].mxu0
        %v4260 = vadd.f32 0.0, %v4259
        %v4261 = vpop.f32.mrb[0].mxu0
        %v4262 = vpop.f32.mrb[0].mxu0
        %v4263 = vadd.f32 0.0, %v4262
        %v4264 = vpop.f32.mrb[0].mxu0
        %4265 = vmatprep.mubr.bf16.mxu0 0
        %4266 = vmatmul.mubr.bf16.gmra.mrb[0].mxu0 %v4069
        %v4267 = vpop.f32.mrb[0].mxu0
        %v4268 = vadd.f32 0.0, %v4267
        %v4269 = vpop.f32.mrb[0].mxu0
        %v4270 = vpop.f32.mrb[0].mxu0
        %v4271 = vadd.f32 0.0, %v4270
        %v4272 = vpop.f32.mrb[0].mxu0
        %4273 = vmatprep.mubr.bf16.mxu0 0
        %4274 = vmatmul.mubr.bf16.gmra.mrb[0].mxu0 %v4070
        %v4275 = vpop.f32.mrb[0].mxu0
        %v4276 = vadd.f32 0.0, %v4275
        %v4277 = vpop.f32.mrb[0].mxu0
        %v4278 = vpop.f32.mrb[0].mxu0
        %v4279 = vadd.f32 0.0, %v4278
        %v4280 = vpop.f32.mrb[0].mxu0
        %4281 = vmatprep.mubr.bf16.mxu0 0
        %4282 = vmatmul.mubr.bf16.gmra.mrb[0].mxu0 %v4071
        %v4283 = vpop.f32.mrb[0].mxu0
        %v4284 = vadd.f32 0.0, %v4283
        %v4285 = vpop.f32.mrb[0].mxu0
        %v4286 = vpop.f32.mrb[0].mxu0
        %v4287 = vadd.f32 0.0, %v4286
        %v4288 = vpop.f32.mrb[0].mxu0
        %4289 = vmatprep.mubr.bf16.mxu0 0
        %4290 = vmatmul.mubr.bf16.gmra.mrb[0].mxu0 %v4072
        %v4291 = vpop.f32.mrb[0].mxu0
        %v4292 = vadd.f32 0.0, %v4291
        %v4293 = vpop.f32.mrb[0].mxu0
        %v4294 = vpop.f32.mrb[0].mxu0
        %v4295 = vadd.f32 0.0, %v4294
        %v4296 = vpop.f32.mrb[0].mxu0
        %4297 = vdwg.mxu0
        %v4298 = vadd.f32 %v3584, %v4172
        %v4299 = vadd.f32 %v3585, %v4175
        %v4300 = vadd.f32 %v3586, %v4180
        %v4301 = vadd.f32 %v3587, %v4183
        %v4302 = vadd.f32 %v3588, %v4188
        %v4303 = vadd.f32 %v3589, %v4191
        %v4304 = vadd.f32 %v3590, %v4196
        %v4305 = vadd.f32 %v3591, %v4199
        %v4306 = vadd.f32 %v3592, %v4204
        %v4307 = vadd.f32 %v3593, %v4207
        %v4308 = vadd.f32 %v3594, %v4212
        %v4309 = vadd.f32 %v3595, %v4215
        %v4310 = vadd.f32 %v3596, %v4220
        %v4311 = vadd.f32 %v3597, %v4223
        %v4312 = vadd.f32 %v3598, %v4228
        %v4313 = vadd.f32 %v3599, %v4231
        %v4314 = vadd.f32 %v3600, %v4236
        %v4315 = vadd.f32 %v3601, %v4239
        %v4316 = vadd.f32 %v3602, %v4244
        %v4317 = vadd.f32 %v3603, %v4247
        %v4318 = vadd.f32 %v3604, %v4252
        %v4319 = vadd.f32 %v3605, %v4255
        %v4320 = vadd.f32 %v3606, %v4260
        %v4321 = vadd.f32 %v3607, %v4263
        %v4322 = vadd.f32 %v3608, %v4268
        %v4323 = vadd.f32 %v3609, %v4271
        %v4324 = vadd.f32 %v3610, %v4276
        %v4325 = vadd.f32 %v3611, %v4279
        %v4326 = vadd.f32 %v3612, %v4284
        %v4327 = vadd.f32 %v3613, %v4287
        %v4328 = vadd.f32 %v3614, %v4292
        %v4329 = vadd.f32 %v3615, %v4295
        %v4330 = vld [vmem:[%s3229] sm:$0xe]
        %v4331 = vld [vmem:[%s3229 + $0x14] sm:$0xe]
        %v4332 = vld [vmem:[%s3229 + $0x28] sm:$0xe]
        %v4333 = vld [vmem:[%s3229 + $0x3c] sm:$0xe]
        %v4334 = vld [vmem:[%s3229 + $0x50] sm:$0xe]
        %v4335 = vld [vmem:[%s3229 + $0x64] sm:$0xe]
        %v4336 = vld [vmem:[%s3229 + $0x78] sm:$0xe]
        %v4337 = vld [vmem:[%s3229 + $0x8c] sm:$0xe]
        %v4378 = vrot.slane %v4330, 5
        %v4379 = vrot.slane %v4378, 4
        %v4380 = vrot.slane %v3617, 5
        %v4381 = vsel %vm1221, %v4379, %v4380
        %v4382 = vrot.slane %v4380, 4
        %v4383 = vrot.slane %v3618, 5
        %v4384 = vsel %vm1221, %v4382, %v4383
        %v4385 = vrot.slane %v4383, 4
        %v4386 = vrot.slane %v3619, 5
        %v4387 = vsel %vm1221, %v4385, %v4386
        %v4388 = vrot.slane %v4386, 4
        %v4389 = vrot.slane %v3620, 5
        %v4390 = vsel %vm1221, %v4388, %v4389
        %v4391 = vrot.slane %v4331, 5
        %v4392 = vrot.slane %v4391, 4
        %v4393 = vrot.slane %v3622, 5
        %v4394 = vsel %vm1221, %v4392, %v4393
        %v4395 = vrot.slane %v4393, 4
        %v4396 = vrot.slane %v3623, 5
        %v4397 = vsel %vm1221, %v4395, %v4396
        %v4398 = vrot.slane %v4396, 4
        %v4399 = vrot.slane %v3624, 5
        %v4400 = vsel %vm1221, %v4398, %v4399
        %v4401 = vrot.slane %v4399, 4
        %v4402 = vrot.slane %v3625, 5
        %v4403 = vsel %vm1221, %v4401, %v4402
        %v4404 = vrot.slane %v4332, 5
        %v4405 = vrot.slane %v4404, 4
        %v4406 = vrot.slane %v3627, 5
        %v4407 = vsel %vm1221, %v4405, %v4406
        %v4408 = vrot.slane %v4406, 4
        %v4409 = vrot.slane %v3628, 5
        %v4410 = vsel %vm1221, %v4408, %v4409
        %v4411 = vrot.slane %v4409, 4
        %v4412 = vrot.slane %v3629, 5
        %v4413 = vsel %vm1221, %v4411, %v4412
        %v4414 = vrot.slane %v4412, 4
        %v4415 = vrot.slane %v3630, 5
        %v4416 = vsel %vm1221, %v4414, %v4415
        %v4417 = vrot.slane %v4333, 5
        %v4418 = vrot.slane %v4417, 4
        %v4419 = vrot.slane %v3632, 5
        %v4420 = vsel %vm1221, %v4418, %v4419
        %v4421 = vrot.slane %v4419, 4
        %v4422 = vrot.slane %v3633, 5
        %v4423 = vsel %vm1221, %v4421, %v4422
        %v4424 = vrot.slane %v4422, 4
        %v4425 = vrot.slane %v3634, 5
        %v4426 = vsel %vm1221, %v4424, %v4425
        %v4427 = vrot.slane %v4425, 4
        %v4428 = vrot.slane %v3635, 5
        %v4429 = vsel %vm1221, %v4427, %v4428
        %v4430 = vrot.slane %v4334, 5
        %v4431 = vrot.slane %v4430, 4
        %v4432 = vrot.slane %v3637, 5
        %v4433 = vsel %vm1221, %v4431, %v4432
        %v4434 = vrot.slane %v4432, 4
        %v4435 = vrot.slane %v3638, 5
        %v4436 = vsel %vm1221, %v4434, %v4435
        %v4437 = vrot.slane %v4435, 4
        %v4438 = vrot.slane %v3639, 5
        %v4439 = vsel %vm1221, %v4437, %v4438
        %v4440 = vrot.slane %v4438, 4
        %v4441 = vrot.slane %v3640, 5
        %v4442 = vsel %vm1221, %v4440, %v4441
        %v4443 = vrot.slane %v4335, 5
        %v4444 = vrot.slane %v4443, 4
        %v4445 = vrot.slane %v3642, 5
        %v4446 = vsel %vm1221, %v4444, %v4445
        %v4447 = vrot.slane %v4445, 4
        %v4448 = vrot.slane %v3643, 5
        %v4449 = vsel %vm1221, %v4447, %v4448
        %v4450 = vrot.slane %v4448, 4
        %v4451 = vrot.slane %v3644, 5
        %v4452 = vsel %vm1221, %v4450, %v4451
        %v4453 = vrot.slane %v4451, 4
        %v4454 = vrot.slane %v3645, 5
        %v4455 = vsel %vm1221, %v4453, %v4454
        %v4456 = vrot.slane %v4336, 5
        %v4457 = vrot.slane %v4456, 4
        %v4458 = vrot.slane %v3647, 5
        %v4459 = vsel %vm1221, %v4457, %v4458
        %v4460 = vrot.slane %v4458, 4
        %v4461 = vrot.slane %v3648, 5
        %v4462 = vsel %vm1221, %v4460, %v4461
        %v4463 = vrot.slane %v4461, 4
        %v4464 = vrot.slane %v3649, 5
        %v4465 = vsel %vm1221, %v4463, %v4464
        %v4466 = vrot.slane %v4464, 4
        %v4467 = vrot.slane %v3650, 5
        %v4468 = vsel %vm1221, %v4466, %v4467
        %v4469 = vrot.slane %v4337, 5
        %v4470 = vrot.slane %v4469, 4
        %v4471 = vrot.slane %v3652, 5
        %v4472 = vsel %vm1221, %v4470, %v4471
        %v4473 = vrot.slane %v4471, 4
        %v4474 = vrot.slane %v3653, 5
        %v4475 = vsel %vm1221, %v4473, %v4474
        %v4476 = vrot.slane %v4474, 4
        %v4477 = vrot.slane %v3654, 5
        %v4478 = vsel %vm1221, %v4476, %v4477
        %v4479 = vrot.slane %v4477, 4
        %v4480 = vrot.slane %v3655, 5
        %v4481 = vsel %vm1221, %v4479, %v4480
        %s4482 = scalar_lea.vmem %s1, 512
        %v4483 = vld [vmem:[%s4482] sm:$0xf]
        %v4484 = vld [vmem:[%s4482 + $0x4] sm:$0xf]
        %v4485 = vld [vmem:[%s4482 + $0x8] sm:$0xf]
        %v4486 = vld [vmem:[%s4482 + $0xc] sm:$0xf]
        %v4487 = vld [vmem:[%s4482 + $0x10] sm:$0xf]
        %v4488 = vld [vmem:[%s4482 + $0x14] sm:$0xf]
        %v4489 = vld [vmem:[%s4482 + $0x18] sm:$0xf]
        %v4490 = vld [vmem:[%s4482 + $0x1c] sm:$0xf]
        %v4491 = vld [vmem:[%s4482 + $0x20] sm:$0xf]
        %v4492 = vld [vmem:[%s4482 + $0x24] sm:$0xf]
        %v4493 = vld [vmem:[%s4482 + $0x28] sm:$0xf]
        %v4494 = vld [vmem:[%s4482 + $0x2c] sm:$0xf]
        %v4495 = vld [vmem:[%s4482 + $0x30] sm:$0xf]
        %v4496 = vld [vmem:[%s4482 + $0x34] sm:$0xf]
        %v4497 = vld [vmem:[%s4482 + $0x38] sm:$0xf]
        %v4498 = vld [vmem:[%s4482 + $0x3c] sm:$0xf]
        %v4499 = vunpack.c.l.b16 %v4381
        %v4500 = vunpack.c.l.b16 %v4384
        %v4501 = vunpack.c.l.b16 %v4387
        %v4502 = vunpack.c.l.b16 %v4390
        %v4503 = vunpack.c.l.b16 %v4394
        %v4504 = vunpack.c.l.b16 %v4397
        %v4505 = vunpack.c.l.b16 %v4400
        %v4506 = vunpack.c.l.b16 %v4403
        %v4507 = vunpack.c.l.b16 %v4407
        %v4508 = vunpack.c.l.b16 %v4410
        %v4509 = vunpack.c.l.b16 %v4413
        %v4510 = vunpack.c.l.b16 %v4416
        %v4511 = vunpack.c.l.b16 %v4420
        %v4512 = vunpack.c.l.b16 %v4423
        %v4513 = vunpack.c.l.b16 %v4426
        %v4514 = vunpack.c.l.b16 %v4429
        %v4515 = vunpack.c.l.b16 %v4433
        %v4516 = vunpack.c.l.b16 %v4436
        %v4517 = vunpack.c.l.b16 %v4439
        %v4518 = vunpack.c.l.b16 %v4442
        %v4519 = vunpack.c.l.b16 %v4446
        %v4520 = vunpack.c.l.b16 %v4449
        %v4521 = vunpack.c.l.b16 %v4452
        %v4522 = vunpack.c.l.b16 %v4455
        %v4523 = vunpack.c.l.b16 %v4459
        %v4524 = vunpack.c.l.b16 %v4462
        %v4525 = vunpack.c.l.b16 %v4465
        %v4526 = vunpack.c.l.b16 %v4468
        %v4527 = vunpack.c.l.b16 %v4472
        %v4528 = vunpack.c.l.b16 %v4475
        %v4529 = vunpack.c.l.b16 %v4478
        %v4530 = vunpack.c.l.b16 %v4481
        %v4531 = vpack.c.b16 %v4500, %v4499
        %v4532 = vpack.c.b16 %v4502, %v4501
        %v4533 = vpack.c.b16 %v4504, %v4503
        %v4534 = vpack.c.b16 %v4506, %v4505
        %v4535 = vpack.c.b16 %v4508, %v4507
        %v4536 = vpack.c.b16 %v4510, %v4509
        %v4537 = vpack.c.b16 %v4512, %v4511
        %v4538 = vpack.c.b16 %v4514, %v4513
        %v4539 = vpack.c.b16 %v4516, %v4515
        %v4540 = vpack.c.b16 %v4518, %v4517
        %v4541 = vpack.c.b16 %v4520, %v4519
        %v4542 = vpack.c.b16 %v4522, %v4521
        %v4543 = vpack.c.b16 %v4524, %v4523
        %v4544 = vpack.c.b16 %v4526, %v4525
        %v4545 = vpack.c.b16 %v4528, %v4527
        %v4546 = vpack.c.b16 %v4530, %v4529
        %v4579 = vunpack.c.l.b16 %v4483
        %v4580 = vunpack.c.l.b16 %v4484
        %v4581 = vunpack.c.l.b16 %v4485
        %v4582 = vunpack.c.l.b16 %v4486
        %v4583 = vunpack.c.l.b16 %v4487
        %v4584 = vunpack.c.l.b16 %v4488
        %v4585 = vunpack.c.l.b16 %v4489
        %v4586 = vunpack.c.l.b16 %v4490
        %v4587 = vunpack.c.l.b16 %v4491
        %v4588 = vunpack.c.l.b16 %v4492
        %v4589 = vunpack.c.l.b16 %v4493
        %v4590 = vunpack.c.l.b16 %v4494
        %v4591 = vunpack.c.l.b16 %v4495
        %v4592 = vunpack.c.l.b16 %v4496
        %v4593 = vunpack.c.l.b16 %v4497
        %v4594 = vunpack.c.l.b16 %v4498
        %v4595 = vpack.c.b16 %v4580, %v4579
        %v4596 = vpack.c.b16 %v4582, %v4581
        %v4597 = vpack.c.b16 %v4584, %v4583
        %v4598 = vpack.c.b16 %v4586, %v4585
        %v4599 = vpack.c.b16 %v4588, %v4587
        %v4600 = vpack.c.b16 %v4590, %v4589
        %v4601 = vpack.c.b16 %v4592, %v4591
        %v4602 = vpack.c.b16 %v4594, %v4593
        %4611 = vmatprep.subr.bf16.mxu0 0
        %4612 = vmatpush1.bf16.msra.mxu0 %v4595
        %4613 = vmatprep.subr.bf16.mxu0 0
        %4614 = vmatpush1.bf16.msra.mxu0 %v4596
        %4615 = vmatprep.subr.bf16.mxu0 0
        %4616 = vmatpush1.bf16.msra.mxu0 %v4597
        %4617 = vmatprep.subr.bf16.mxu0 0
        %4618 = vmatpush1.bf16.msra.mxu0 %v4598
        %4619 = vmatprep.subr.bf16.mxu0 0
        %4620 = vmatpush1.bf16.msra.mxu0 %v4599
        %4621 = vmatprep.subr.bf16.mxu0 0
        %4622 = vmatpush1.bf16.msra.mxu0 %v4600
        %4623 = vmatprep.subr.bf16.mxu0 0
        %4624 = vmatpush1.bf16.msra.mxu0 %v4601
        %4625 = vmatprep.subr.bf16.mxu0 0
        %4626 = vmatpush1.bf16.msra.mxu0 %v4602
        %4627 = vmatprep.subr.bf16.mxu0 0
        %4628 = vmatpush1.bf16.msra.mxu0 0
        %4629 = vmatprep.subr.bf16.mxu0 0
        %4630 = vmatpush1.bf16.msra.mxu0 0
        %4631 = vmatprep.subr.bf16.mxu0 0
        %4632 = vmatpush1.bf16.msra.mxu0 0
        %4633 = vmatprep.subr.bf16.mxu0 0
        %4634 = vmatpush1.bf16.msra.mxu0 0
        %4635 = vmatprep.subr.bf16.mxu0 0
        %4636 = vmatpush1.bf16.msra.mxu0 0
        %4637 = vmatprep.subr.bf16.mxu0 0
        %4638 = vmatpush1.bf16.msra.mxu0 0
        %4639 = vmatprep.subr.bf16.mxu0 0
        %4640 = vmatpush1.bf16.msra.mxu0 0
        %4641 = vmatprep.subr.bf16.mxu0 0
        %4642 = vmatpush1.bf16.msra.mxu0 0
        %4643 = vmatprep.mubr.bf16.mxu0 0
        %4644 = vmatmul.mubr.bf16.gmra.mrb[0].mxu0 %v4531
        %v4645 = vpop.f32.mrb[0].mxu0
        %v4646 = vadd.f32 0.0, %v4645
        %v4647 = vpop.f32.mrb[0].mxu0
        %v4648 = vpop.f32.mrb[0].mxu0
        %v4649 = vadd.f32 0.0, %v4648
        %v4650 = vpop.f32.mrb[0].mxu0
        %4651 = vmatprep.mubr.bf16.mxu0 0
        %4652 = vmatmul.mubr.bf16.gmra.mrb[0].mxu0 %v4532
        %v4653 = vpop.f32.mrb[0].mxu0
        %v4654 = vadd.f32 0.0, %v4653
        %v4655 = vpop.f32.mrb[0].mxu0
        %v4656 = vpop.f32.mrb[0].mxu0
        %v4657 = vadd.f32 0.0, %v4656
        %v4658 = vpop.f32.mrb[0].mxu0
        %4659 = vmatprep.mubr.bf16.mxu0 0
        %4660 = vmatmul.mubr.bf16.gmra.mrb[0].mxu0 %v4533
        %v4661 = vpop.f32.mrb[0].mxu0
        %v4662 = vadd.f32 0.0, %v4661
        %v4663 = vpop.f32.mrb[0].mxu0
        %v4664 = vpop.f32.mrb[0].mxu0
        %v4665 = vadd.f32 0.0, %v4664
        %v4666 = vpop.f32.mrb[0].mxu0
        %4667 = vmatprep.mubr.bf16.mxu0 0
        %4668 = vmatmul.mubr.bf16.gmra.mrb[0].mxu0 %v4534
        %v4669 = vpop.f32.mrb[0].mxu0
        %v4670 = vadd.f32 0.0, %v4669
        %v4671 = vpop.f32.mrb[0].mxu0
        %v4672 = vpop.f32.mrb[0].mxu0
        %v4673 = vadd.f32 0.0, %v4672
        %v4674 = vpop.f32.mrb[0].mxu0
        %4675 = vmatprep.mubr.bf16.mxu0 0
        %4676 = vmatmul.mubr.bf16.gmra.mrb[0].mxu0 %v4535
        %v4677 = vpop.f32.mrb[0].mxu0
        %v4678 = vadd.f32 0.0, %v4677
        %v4679 = vpop.f32.mrb[0].mxu0
        %v4680 = vpop.f32.mrb[0].mxu0
        %v4681 = vadd.f32 0.0, %v4680
        %v4682 = vpop.f32.mrb[0].mxu0
        %4683 = vmatprep.mubr.bf16.mxu0 0
        %4684 = vmatmul.mubr.bf16.gmra.mrb[0].mxu0 %v4536
        %v4685 = vpop.f32.mrb[0].mxu0
        %v4686 = vadd.f32 0.0, %v4685
        %v4687 = vpop.f32.mrb[0].mxu0
        %v4688 = vpop.f32.mrb[0].mxu0
        %v4689 = vadd.f32 0.0, %v4688
        %v4690 = vpop.f32.mrb[0].mxu0
        %4691 = vmatprep.mubr.bf16.mxu0 0
        %4692 = vmatmul.mubr.bf16.gmra.mrb[0].mxu0 %v4537
        %v4693 = vpop.f32.mrb[0].mxu0
        %v4694 = vadd.f32 0.0, %v4693
        %v4695 = vpop.f32.mrb[0].mxu0
        %v4696 = vpop.f32.mrb[0].mxu0
        %v4697 = vadd.f32 0.0, %v4696
        %v4698 = vpop.f32.mrb[0].mxu0
        %4699 = vmatprep.mubr.bf16.mxu0 0
        %4700 = vmatmul.mubr.bf16.gmra.mrb[0].mxu0 %v4538
        %v4701 = vpop.f32.mrb[0].mxu0
        %v4702 = vadd.f32 0.0, %v4701
        %v4703 = vpop.f32.mrb[0].mxu0
        %v4704 = vpop.f32.mrb[0].mxu0
        %v4705 = vadd.f32 0.0, %v4704
        %v4706 = vpop.f32.mrb[0].mxu0
        %4707 = vmatprep.mubr.bf16.mxu0 0
        %4708 = vmatmul.mubr.bf16.gmra.mrb[0].mxu0 %v4539
        %v4709 = vpop.f32.mrb[0].mxu0
        %v4710 = vadd.f32 0.0, %v4709
        %v4711 = vpop.f32.mrb[0].mxu0
        %v4712 = vpop.f32.mrb[0].mxu0
        %v4713 = vadd.f32 0.0, %v4712
        %v4714 = vpop.f32.mrb[0].mxu0
        %4715 = vmatprep.mubr.bf16.mxu0 0
        %4716 = vmatmul.mubr.bf16.gmra.mrb[0].mxu0 %v4540
        %v4717 = vpop.f32.mrb[0].mxu0
        %v4718 = vadd.f32 0.0, %v4717
        %v4719 = vpop.f32.mrb[0].mxu0
        %v4720 = vpop.f32.mrb[0].mxu0
        %v4721 = vadd.f32 0.0, %v4720
        %v4722 = vpop.f32.mrb[0].mxu0
        %4723 = vmatprep.mubr.bf16.mxu0 0
        %4724 = vmatmul.mubr.bf16.gmra.mrb[0].mxu0 %v4541
        %v4725 = vpop.f32.mrb[0].mxu0
        %v4726 = vadd.f32 0.0, %v4725
        %v4727 = vpop.f32.mrb[0].mxu0
        %v4728 = vpop.f32.mrb[0].mxu0
        %v4729 = vadd.f32 0.0, %v4728
        %v4730 = vpop.f32.mrb[0].mxu0
        %4731 = vmatprep.mubr.bf16.mxu0 0
        %4732 = vmatmul.mubr.bf16.gmra.mrb[0].mxu0 %v4542
        %v4733 = vpop.f32.mrb[0].mxu0
        %v4734 = vadd.f32 0.0, %v4733
        %v4735 = vpop.f32.mrb[0].mxu0
        %v4736 = vpop.f32.mrb[0].mxu0
        %v4737 = vadd.f32 0.0, %v4736
        %v4738 = vpop.f32.mrb[0].mxu0
        %4739 = vmatprep.mubr.bf16.mxu0 0
        %4740 = vmatmul.mubr.bf16.gmra.mrb[0].mxu0 %v4543
        %v4741 = vpop.f32.mrb[0].mxu0
        %v4742 = vadd.f32 0.0, %v4741
        %v4743 = vpop.f32.mrb[0].mxu0
        %v4744 = vpop.f32.mrb[0].mxu0
        %v4745 = vadd.f32 0.0, %v4744
        %v4746 = vpop.f32.mrb[0].mxu0
        %4747 = vmatprep.mubr.bf16.mxu0 0
        %4748 = vmatmul.mubr.bf16.gmra.mrb[0].mxu0 %v4544
        %v4749 = vpop.f32.mrb[0].mxu0
        %v4750 = vadd.f32 0.0, %v4749
        %v4751 = vpop.f32.mrb[0].mxu0
        %v4752 = vpop.f32.mrb[0].mxu0
        %v4753 = vadd.f32 0.0, %v4752
        %v4754 = vpop.f32.mrb[0].mxu0
        %4755 = vmatprep.mubr.bf16.mxu0 0
        %4756 = vmatmul.mubr.bf16.gmra.mrb[0].mxu0 %v4545
        %v4757 = vpop.f32.mrb[0].mxu0
        %v4758 = vadd.f32 0.0, %v4757
        %v4759 = vpop.f32.mrb[0].mxu0
        %v4760 = vpop.f32.mrb[0].mxu0
        %v4761 = vadd.f32 0.0, %v4760
        %v4762 = vpop.f32.mrb[0].mxu0
        %4763 = vmatprep.mubr.bf16.mxu0 0
        %4764 = vmatmul.mubr.bf16.gmra.mrb[0].mxu0 %v4546
        %v4765 = vpop.f32.mrb[0].mxu0
        %v4766 = vadd.f32 0.0, %v4765
        %v4767 = vpop.f32.mrb[0].mxu0
        %v4768 = vpop.f32.mrb[0].mxu0
        %v4769 = vadd.f32 0.0, %v4768
        %v4770 = vpop.f32.mrb[0].mxu0
        %4771 = vdwg.mxu0
        %v4772 = vadd.f32 %v4298, %v4646
        %v4773 = vadd.f32 %v4299, %v4649
        %v4774 = vadd.f32 %v4300, %v4654
        %v4775 = vadd.f32 %v4301, %v4657
        %v4776 = vadd.f32 %v4302, %v4662
        %v4777 = vadd.f32 %v4303, %v4665
        %v4778 = vadd.f32 %v4304, %v4670
        %v4779 = vadd.f32 %v4305, %v4673
        %v4780 = vadd.f32 %v4306, %v4678
        %v4781 = vadd.f32 %v4307, %v4681
        %v4782 = vadd.f32 %v4308, %v4686
        %v4783 = vadd.f32 %v4309, %v4689
        %v4784 = vadd.f32 %v4310, %v4694
        %v4785 = vadd.f32 %v4311, %v4697
        %v4786 = vadd.f32 %v4312, %v4702
        %v4787 = vadd.f32 %v4313, %v4705
        %v4788 = vadd.f32 %v4314, %v4710
        %v4789 = vadd.f32 %v4315, %v4713
        %v4790 = vadd.f32 %v4316, %v4718
        %v4791 = vadd.f32 %v4317, %v4721
        %v4792 = vadd.f32 %v4318, %v4726
        %v4793 = vadd.f32 %v4319, %v4729
        %v4794 = vadd.f32 %v4320, %v4734
        %v4795 = vadd.f32 %v4321, %v4737
        %v4796 = vadd.f32 %v4322, %v4742
        %v4797 = vadd.f32 %v4323, %v4745
        %v4798 = vadd.f32 %v4324, %v4750
        %v4799 = vadd.f32 %v4325, %v4753
        %v4800 = vadd.f32 %v4326, %v4758
        %v4801 = vadd.f32 %v4327, %v4761
        %v4802 = vadd.f32 %v4328, %v4766
        %v4803 = vadd.f32 %v4329, %v4769
        %v4804 = vld [vmem:[%s2] sm:$0x1]
        %v4806 = vlaneseq
        %v4807 = vshrl.u32 %v4806, 7
        %v4808 = vsub.s32 0, %v4807
        %v4809 = vrot.slane %v4804, %v4808
        %v4811 = vadd.f32 %v4772, %v4809
        %v4812 = vadd.f32 %v4773, %v4809
        %v4813 = vadd.f32 %v4774, %v4809
        %v4814 = vadd.f32 %v4775, %v4809
        %v4815 = vadd.f32 %v4776, %v4809
        %v4816 = vadd.f32 %v4777, %v4809
        %v4817 = vadd.f32 %v4778, %v4809
        %v4818 = vadd.f32 %v4779, %v4809
        %v4819 = vadd.f32 %v4780, %v4809
        %v4820 = vadd.f32 %v4781, %v4809
        %v4821 = vadd.f32 %v4782, %v4809
        %v4822 = vadd.f32 %v4783, %v4809
        %v4823 = vadd.f32 %v4784, %v4809
        %v4824 = vadd.f32 %v4785, %v4809
        %v4825 = vadd.f32 %v4786, %v4809
        %v4826 = vadd.f32 %v4787, %v4809
        %v4827 = vadd.f32 %v4788, %v4809
        %v4828 = vadd.f32 %v4789, %v4809
        %v4829 = vadd.f32 %v4790, %v4809
        %v4830 = vadd.f32 %v4791, %v4809
        %v4831 = vadd.f32 %v4792, %v4809
        %v4832 = vadd.f32 %v4793, %v4809
        %v4833 = vadd.f32 %v4794, %v4809
        %v4834 = vadd.f32 %v4795, %v4809
        %v4835 = vadd.f32 %v4796, %v4809
        %v4836 = vadd.f32 %v4797, %v4809
        %v4837 = vadd.f32 %v4798, %v4809
        %v4838 = vadd.f32 %v4799, %v4809
        %v4839 = vadd.f32 %v4800, %v4809
        %v4840 = vadd.f32 %v4801, %v4809
        %v4841 = vadd.f32 %v4802, %v4809
        %v4842 = vadd.f32 %v4803, %v4809
        %4843 = vst [vmem:[%s177] sm:$0xff] %v4811
        %4844 = vst [vmem:[%s177 + $0x8] sm:$0xff] %v4812
        %4845 = vst [vmem:[%s177 + $0x10] sm:$0xff] %v4813
        %4846 = vst [vmem:[%s177 + $0x18] sm:$0xff] %v4814
        %4847 = vst [vmem:[%s177 + $0x20] sm:$0xff] %v4815
        %4848 = vst [vmem:[%s177 + $0x28] sm:$0xff] %v4816
        %4849 = vst [vmem:[%s177 + $0x30] sm:$0xff] %v4817
        %4850 = vst [vmem:[%s177 + $0x38] sm:$0xff] %v4818
        %4851 = vst [vmem:[%s177 + $0x40] sm:$0xff] %v4819
        %4852 = vst [vmem:[%s177 + $0x48] sm:$0xff] %v4820
        %4853 = vst [vmem:[%s177 + $0x50] sm:$0xff] %v4821
        %4854 = vst [vmem:[%s177 + $0x58] sm:$0xff] %v4822
        %4855 = vst [vmem:[%s177 + $0x60] sm:$0xff] %v4823
        %4856 = vst [vmem:[%s177 + $0x68] sm:$0xff] %v4824
        %4857 = vst [vmem:[%s177 + $0x70] sm:$0xff] %v4825
        %4858 = vst [vmem:[%s177 + $0x78] sm:$0xff] %v4826
        %4859 = vst [vmem:[%s177 + $0x80] sm:$0xff] %v4827
        %4860 = vst [vmem:[%s177 + $0x88] sm:$0xff] %v4828
        %4861 = vst [vmem:[%s177 + $0x90] sm:$0xff] %v4829
        %4862 = vst [vmem:[%s177 + $0x98] sm:$0xff] %v4830
        %4863 = vst [vmem:[%s177 + $0xa0] sm:$0xff] %v4831
        %4864 = vst [vmem:[%s177 + $0xa8] sm:$0xff] %v4832
        %4865 = vst [vmem:[%s177 + $0xb0] sm:$0xff] %v4833
        %4866 = vst [vmem:[%s177 + $0xb8] sm:$0xff] %v4834
        %4867 = vst [vmem:[%s177 + $0xc0] sm:$0xff] %v4835
        %4868 = vst [vmem:[%s177 + $0xc8] sm:$0xff] %v4836
        %4869 = vst [vmem:[%s177 + $0xd0] sm:$0xff] %v4837
        %4870 = vst [vmem:[%s177 + $0xd8] sm:$0xff] %v4838
        %4871 = vst [vmem:[%s177 + $0xe0] sm:$0xff] %v4839
        %4872 = vst [vmem:[%s177 + $0xe8] sm:$0xff] %v4840
        %4873 = vst [vmem:[%s177 + $0xf0] sm:$0xff] %v4841
        %4874 = vst [vmem:[%s177 + $0xf8] sm:$0xff] %v4842
        %s4875 = sand.u32 %s107, 1
        %s4876 = scalar_lea.sflag [#allocation3], %s4875
        %s4877 = sand.u32 %s107, 1
        %s4878 = smul.addr %s4877, 256
        %s4879 = scalar_lea.vmem [#allocation2], %s4878
        // Predicated region
        $region33: #{tpu_custom_call.1} parent=31 // pred_check
          %p4880 = pneg %p117
        $region34: #{tpu_custom_call.1} parent=31 // pred_check_branch
          %4882 = sbr.rel (%p4880) target = $region36
        $region35: #{tpu_custom_call.1} parent=31 // pred_region
          %s4883 = smul.u32 8, %s22
          %s4885 = ssub.s32 4096, 4096
          %4886 = vsyncadd %s4876, %s4885
          %s4887 = smul.addr %s4883, 4
          %s4888 = smul.addr %s21, 32
          %s4889 = sadd.s32 %s4887, %s4888
          %s4890 = smul.addr %s4889, 128
          %s4891 = scalar_lea.hbm %s3, %s4890
          %s4892 = sshll.u32 %s4879, 4
          %s4893 = int_to_ptr.vmem [resolvable:$true] %s4892
          %4898 = dma.vmem_to_hbm [thread:$0]  %s4893, 4096, %s4891, %s4876, 128, 128, 8
        $region36: #{tpu_custom_call.1} parent=31 // pred_fallthru
          _
      $region32: #{tpu_custom_call.1} parent=5 // pred_fallthru
        _
      %p4899 = scmp.le.s32.totalorder 2, %s12
      // Predicated region
      $region37: #{tpu_custom_call.1} parent=5 // pred_check
        %p4900 = pneg %p4899
      $region38: #{tpu_custom_call.1} parent=5 // pred_check_branch
        %4902 = sbr.rel (%p4900) target = $region40
      $region39: #{tpu_custom_call.1} parent=5 // pred_region
        %s4903 = ssub.s32 %s12, 2
        // Predicated region
        $region41: #{tpu_custom_call.1} parent=39 // pred_check
          %p4904 = pneg %p123
        $region42: #{tpu_custom_call.1} parent=39 // pred_check_branch
          %4906 = sbr.rel (%p4904) target = $region44
        $region43: #{tpu_custom_call.1} parent=39 // pred_region
          %s4907 = sand.u32 %s108, 1
          %s4908 = scalar_lea.sflag [#allocation3], %s4907
          %s4909 = sand.u32 %s108, 1
          %s4910 = smul.addr %s4909, 256
          %s4911 = scalar_lea.vmem [#allocation2], %s4910
          %4912 = dma.done %s4908, 4096
        $region44: #{tpu_custom_call.1} parent=39 // pred_fallthru
          _
      $region40: #{tpu_custom_call.1} parent=5 // pred_fallthru
        _
    $region6: #{tpu_custom_call.1} parent=1 // loop_footer
      %s16 = sadd.s32 1, %s12
    $region7: #{tpu_custom_call.1} parent=1 // loop_footer_branch
      %11 = sbr.rel target = $region3
    $region8: #{tpu_custom_call.1} parent=1 // loop_exit
      _
    %4913 = vsyncpa [#allocation3], 1
    %s4914 = scalar_lea.sflag [#allocation3], 1
    %4915 = vsyncpa %s4914, 1

</llo_original>
